<compile_context>
chip_gen: v7x
topology: tpu7x:2x2x1
jax: 0.10.0
libtpu: 0.0.40
codegen_flags: <defaults>
</compile_context>

<pallas_src>
import functools

import jax
import jax.numpy as jnp
from jax import lax
from jax.experimental import pallas as pl
from jax.experimental.pallas import tpu as pltpu

EPS = 1e-5
# Safe on all generations (v7x physical VMEM is 64 MiB); on v5e/v6e this could
# be raised to ~100 MiB to allow even larger tiles.
VMEM_LIMIT = 64 * 1024 * 1024


def _round_up(x, m):
    return (x + m - 1) // m * m


def _pick_tile(dim, candidates):
    for c in candidates:
        if dim % c == 0:
            return c
    return dim  # full dimension (always a legal block size)


# ----------------------------------------------------------------------------
# Kernel 1: fused conv1(1x1)+bn1+relu1 + conv2(3x3,pad=1)+bn2+relu2
#           [+ AvgPool2d(stride)] per image.  BN scale pre-folded into weights.
# ----------------------------------------------------------------------------
def _conv12_kernel(x_ref, w1_ref, b1_ref, w2_ref, b2_ref, o_ref, *scratch,
                   H, W, stride):
    HW = H * W
    R = HW + 2 * W                       # rows of the zero-padded conv1 output
    P = w1_ref.shape[1]

    # conv1 (1x1) + bn1 + relu1
    x = x_ref[0]                                              # (HW, Cin) bf16
    z = jnp.dot(x, w1_ref[...], preferred_element_type=jnp.float32)
    z = jnp.maximum(z + b1_ref[...], 0.0).astype(jnp.bfloat16)  # (HW, P)

    # Zero-pad one pixel row above/below; build the dx = -1/+1 shifted copies
    # ONCE with the left/right image-border masks folded in, concatenated on
    # lanes so conv2 becomes three deep-K matmuls.
    zpad = jnp.zeros((W, P), jnp.bfloat16)
    zc = jnp.concatenate([zpad, z, zpad], axis=0)             # (R, P)
    row1 = jnp.zeros((1, P), jnp.bfloat16)
    zl = jnp.concatenate([row1, zc[:R - 1]], axis=0)          # pixel to the left
    zr = jnp.concatenate([zc[1:], row1], axis=0)              # pixel to the right
    col = lax.broadcasted_iota(jnp.int32, (R, 1), 0) % W
    zl = jnp.where(col > 0, zl, jnp.zeros_like(zl))
    zr = jnp.where(col < W - 1, zr, jnp.zeros_like(zr))
    zcat = jnp.concatenate([zl, zc, zr], axis=-1)             # (R, 3P)

    # conv2 (3x3, pad=1) + bn2: 3 matmuls with K = 3P over sublane-aligned
    # slices (row offsets 0, W, 2W are multiples of W).
    acc = jnp.dot(zcat[0:HW, :], w2_ref[0:3 * P, :],
                  preferred_element_type=jnp.float32)
    acc = acc + jnp.dot(zcat[W:W + HW, :], w2_ref[3 * P:6 * P, :],
                        preferred_element_type=jnp.float32)
    acc = acc + jnp.dot(zcat[2 * W:2 * W + HW, :], w2_ref[6 * P:9 * P, :],
                        preferred_element_type=jnp.float32)
    out = jnp.maximum(acc + b2_ref[...], 0.0)                 # relu2, (HW, P) f32

    if stride == 1:
        # TODO(synk): for planes=64 layers the (HW, 64) bf16 store uses masked
        # partial stores (last dim < 128 lanes); accepted for simplicity.
        o_ref[0] = out.astype(o_ref.dtype)
        return

    # Fused AvgPool2d(stride), computed in f32 while still in VMEM:
    #   x-pool: strided ref loads (rows b, b+s, ...) summed over b
    #   y-pool: shift-add by Wo, then take every s-th chunk of Wo rows
    s = stride
    Ho, Wo = H // s, W // s
    pool_ref = scratch[0]
    pool_ref[...] = out
    xp = pool_ref[pl.ds(0, H * Wo, stride=s), :]
    for b in range(1, s):
        xp = xp + pool_ref[pl.ds(b, H * Wo, stride=s), :]     # (H*Wo, P)
    v = xp[0:(H - s + 1) * Wo, :]
    for a in range(1, s):
        v = v + xp[a * Wo:(a + H - s + 1) * Wo, :]
    pooled = jnp.concatenate(
        [v[ho * s * Wo:ho * s * Wo + Wo, :] for ho in range(Ho)], axis=0)
    o_ref[0] = (pooled * (1.0 / (s * s))).astype(o_ref.dtype)


def conv12_fused(x2d, w1, b1, w2, b2, H, W, stride):
    """avgpool(relu(bn2(conv2(relu(bn1(conv1(x))))))) in one kernel per image.

    x2d: (N, H*W, Cin) bf16 pixel-rows; w1: (Cin,P) bf16 scale-folded;
    w2: (9P,P) bf16 scale-folded (rows ordered ky-major, kx, in-channel);
    b1/b2: (1,P) f32.  Returns (N, Ho*Wo, P) bf16.
    """
    N, HW, Cin = x2d.shape
    P = w1.shape[1]
    Ho, Wo = H // stride, W // stride
    scratch = [pltpu.VMEM((HW, P), jnp.float32)] if stride > 1 else []

    return pl.pallas_call(
        functools.partial(_conv12_kernel, H=H, W=W, stride=stride),
        out_shape=jax.ShapeDtypeStruct((N, Ho * Wo, P), jnp.bfloat16),
        grid=(N,),
        in_specs=[
            pl.BlockSpec((1, HW, Cin), lambda n: (n, 0, 0)),
            pl.BlockSpec((Cin, P), lambda n: (0, 0)),
            pl.BlockSpec((1, P), lambda n: (0, 0)),
            pl.BlockSpec((9 * P, P), lambda n: (0, 0)),
            pl.BlockSpec((1, P), lambda n: (0, 0)),
        ],
        out_specs=pl.BlockSpec((1, Ho * Wo, P), lambda n: (n, 0, 0)),
        scratch_shapes=scratch,
        compiler_params=pltpu.CompilerParams(
            dimension_semantics=("parallel",),
            vmem_limit_bytes=VMEM_LIMIT),
    )(x2d, w1, b1, w2, b2)


# ----------------------------------------------------------------------------
# Kernel 2: 1x1 conv + bias [+ residual] [+ relu]   (conv3 / downsample).
# Fast path: weight resident in VMEM, no accumulator, single K step.
# ----------------------------------------------------------------------------
def _mm_fast_kernel(x_ref, w_ref, b_ref, o_ref, *, relu):
    out = jnp.dot(x_ref[...], w_ref[...],
                  preferred_element_type=jnp.float32) + b_ref[...]
    if relu:
        out = jnp.maximum(out, 0.0)
    o_ref[...] = out.astype(o_ref.dtype)


def _mm_fast_res_kernel(x_ref, w_ref, b_ref, res_ref, o_ref, *, relu):
    out = (jnp.dot(x_ref[...], w_ref[...], preferred_element_type=jnp.float32)
           + b_ref[...] + res_ref[...].astype(jnp.float32))
    if relu:
        out = jnp.maximum(out, 0.0)
    o_ref[...] = out.astype(o_ref.dtype)


# Fallback (huge weights only): K/N-tiled with f32 VMEM accumulator.
def _mm_bn_kernel(x_ref, w_ref, b_ref, o_ref, acc_ref, *, relu):
    @pl.when(pl.program_id(2) == 0)
    def _init():
        acc_ref[...] = jnp.zeros_like(acc_ref)

    acc_ref[...] += jnp.dot(x_ref[...], w_ref[...],
                            preferred_element_type=jnp.float32)

    @pl.when(pl.program_id(2) == pl.num_programs(2) - 1)
    def _fin():
        out = acc_ref[...] + b_ref[...]
        if relu:
            out = jnp.maximum(out, 0.0)
        o_ref[...] = out.astype(o_ref.dtype)


def _mm_bn_res_kernel(x_ref, w_ref, b_ref, res_ref, o_ref, acc_ref, *, relu):
    @pl.when(pl.program_id(2) == 0)
    def _init():
        acc_ref[...] = jnp.zeros_like(acc_ref)

    acc_ref[...] += jnp.dot(x_ref[...], w_ref[...],
                            preferred_element_type=jnp.float32)

    @pl.when(pl.program_id(2) == pl.num_programs(2) - 1)
    def _fin():
        out = acc_ref[...] + b_ref[...] + res_ref[...].astype(jnp.float32)
        if relu:
            out = jnp.maximum(out, 0.0)
        o_ref[...] = out.astype(o_ref.dtype)


def matmul_bn(x2d, w, bias, res=None, relu=True, out_dtype=jnp.float32):
    """out = relu?( x2d @ w + bias [+ res] ).  `w` already has BN scale folded."""
    M, K = x2d.shape
    Cout = w.shape[1]
    x2d = x2d.astype(jnp.bfloat16)
    w = w.astype(jnp.bfloat16)

    if M >= 1024:
        tm = 1024
    elif M >= 512:
        tm = 512
    else:
        tm = _round_up(M, 8)
    Mp = _round_up(M, tm)
    if Mp != M:
        x2d = jnp.pad(x2d, ((0, Mp - M), (0, 0)))
        if res is not None:
            res = jnp.pad(res, ((0, Mp - M), (0, 0)))

    if K * Cout * 2 <= 8 * 1024 * 1024:
        # Fast path (covers all CLIP Bottleneck shapes): weight block is
        # resident (constant block index); x / res / out stream exactly once.
        in_specs = [pl.BlockSpec((tm, K), lambda i: (i, 0)),
                    pl.BlockSpec((K, Cout), lambda i: (0, 0)),
                    pl.BlockSpec((1, Cout), lambda i: (0, 0))]
        args = [x2d, w, bias]
        if res is not None:
            in_specs.append(pl.BlockSpec((tm, Cout), lambda i: (i, 0)))
            args.append(res)
            kernel = functools.partial(_mm_fast_res_kernel, relu=relu)
        else:
            kernel = functools.partial(_mm_fast_kernel, relu=relu)
        out = pl.pallas_call(
            kernel,
            out_shape=jax.ShapeDtypeStruct((Mp, Cout), out_dtype),
            grid=(Mp // tm,),
            in_specs=in_specs,
            out_specs=pl.BlockSpec((tm, Cout), lambda i: (i, 0)),
            compiler_params=pltpu.CompilerParams(
                dimension_semantics=("parallel",),
                vmem_limit_bytes=VMEM_LIMIT),
        )(*args)
    else:
        tn = _pick_tile(Cout, (256, 128))
        tk = _pick_tile(K, (512, 256, 128))
        grid = (Mp // tm, Cout // tn, K // tk)
        in_specs = [pl.BlockSpec((tm, tk), lambda i, j, k: (i, k)),
                    pl.BlockSpec((tk, tn), lambda i, j, k: (k, j)),
                    pl.BlockSpec((1, tn), lambda i, j, k: (0, j))]
        args = [x2d, w, bias]
        if res is not None:
            in_specs.append(pl.BlockSpec((tm, tn), lambda i, j, k: (i, j)))
            args.append(res)
            kernel = functools.partial(_mm_bn_res_kernel, relu=relu)
        else:
            kernel = functools.partial(_mm_bn_kernel, relu=relu)
        out = pl.pallas_call(
            kernel,
            out_shape=jax.ShapeDtypeStruct((Mp, Cout), out_dtype),
            grid=grid,
            in_specs=in_specs,
            out_specs=pl.BlockSpec((tm, tn), lambda i, j, k: (i, j)),
            scratch_shapes=[pltpu.VMEM((tm, tn), jnp.float32)],
            compiler_params=pltpu.CompilerParams(
                dimension_semantics=("parallel", "parallel", "arbitrary"),
                vmem_limit_bytes=VMEM_LIMIT),
        )(*args)
    return out[:M] if Mp != M else out


# ----------------------------------------------------------------------------
# Bottleneck forward (Pallas)
# ----------------------------------------------------------------------------
def bottleneck_forward(x_nchw, p, stride):
    x = jnp.transpose(x_nchw, (0, 2, 3, 1))          # NCHW -> NHWC (f32)
    N, H, W, Cin = x.shape
    P = p["w1"].shape[1]
    Ho, Wo = H // stride, W // stride
    Mo = N * Ho * Wo

    # bf16 cast fuses with the transpose; reshape to (pixels, channels) is free.
    x_bf = x.astype(jnp.bfloat16).reshape(N, H * W, Cin)

    # conv1+bn1+relu1 + conv2+bn2+relu2 + avgpool fused (conv1/conv2 outputs
    # never hit HBM un-pooled).
    z = conv12_fused(x_bf, p["w1"], p["b1"], p["w2"], p["b2"], H, W, stride)
    z2d = z.reshape(Mo, P)                                     # bf16

    # identity / downsample branch
    if "wd" in p:
        idn = x
        if stride > 1:
            # TODO(synk): this AvgPool of the raw input stays a plain-JAX op
            # (single fused XLA reshape+reduce); could be folded into the
            # downsample matmul kernel's prologue.
            idn = x.reshape(N, Ho, stride, Wo, stride, Cin).mean(axis=(2, 4))
        idn2d = matmul_bn(idn.reshape(Mo, Cin), p["wd"], p["bd"],
                          relu=False, out_dtype=jnp.bfloat16)
    else:
        idn2d = x.reshape(Mo, Cin)        # keep identity residual in f32

    # conv3 (1x1) + bn3 + residual add + relu3, fused; bf16 output halves the
    # tail HBM traffic, the transpose + f32 cast below is one fused XLA op.
    out = matmul_bn(z2d, p["w3"], p["b3"], res=idn2d, relu=True,
                    out_dtype=jnp.bfloat16)
    out = out.reshape(N, Ho, Wo, 4 * P)
    return jnp.transpose(out, (0, 3, 1, 2)).astype(jnp.float32)  # -> NCHW f32


# ----------------------------------------------------------------------------
# Pure-JAX reference (for validation)
# ----------------------------------------------------------------------------
def ref_forward(x, raw, stride):
    def conv(x, w, pad):
        return lax.conv_general_dilated(
            x, w, window_strides=(1, 1), padding=pad,
            dimension_numbers=("NCHW", "OIHW", "NCHW"))

    def bn(x, pars):
        g, b, m, v = pars
        inv = g / jnp.sqrt(v + EPS)
        return x * inv[None, :, None, None] + (b - m * inv)[None, :, None, None]

    def pool(x, s):
        N, C, H, W = x.shape
        return x.reshape(N, C, H // s, s, W // s, s).mean(axis=(3, 5))

    out = jax.nn.relu(bn(conv(x, raw["w1"], "VALID"), raw["bn1"]))
    out = jax.nn.relu(bn(conv(out, raw["w2"], ((1, 1), (1, 1))), raw["bn2"]))
    if stride > 1:
        out = pool(out, stride)
    out = bn(conv(out, raw["w3"], "VALID"), raw["bn3"])
    if "wd" in raw:
        idn = pool(x, stride) if stride > 1 else x
        idn = bn(conv(idn, raw["wd"], "VALID"), raw["bnd"])
    else:
        idn = x
    return jax.nn.relu(out + idn)


# ----------------------------------------------------------------------------
# Deterministic parameter construction (BN scale folded into bf16 weights)
# ----------------------------------------------------------------------------
def make_params(key, inplanes, planes, stride):
    exp = 4
    ks = iter(jax.random.split(key, 32))

    def conv_w(shape):
        return (0.1 * jax.random.normal(next(ks), shape)).astype(jnp.float32)

    def bn_params(c):
        g = (1.0 + 0.1 * jax.random.normal(next(ks), (c,))).astype(jnp.float32)
        b = (0.1 * jax.random.normal(next(ks), (c,))).astype(jnp.float32)
        m = (0.05 * jax.random.normal(next(ks), (c,))).astype(jnp.float32)
        v = (1.0 + 0.1 * jnp.abs(jax.random.normal(next(ks), (c,)))).astype(jnp.float32)
        return (g, b, m, v)

    raw = {
        "w1": conv_w((planes, inplanes, 1, 1)), "bn1": bn_params(planes),
        "w2": conv_w((planes, planes, 3, 3)), "bn2": bn_params(planes),
        "w3": conv_w((planes * exp, planes, 1, 1)), "bn3": bn_params(planes * exp),
    }
    if stride > 1 or inplanes != planes * exp:
        raw["wd"] = conv_w((planes * exp, inplanes, 1, 1))
        raw["bnd"] = bn_params(planes * exp)

    def fold(bn):
        g, b, m, v = bn
        scale = g / jnp.sqrt(v + EPS)
        return scale[None, :], (b - m * scale)[None, :]

    p = {}
    s1, p["b1"] = fold(raw["bn1"])
    p["w1"] = (raw["w1"].reshape(planes, inplanes).T * s1).astype(jnp.bfloat16)
    s2, p["b2"] = fold(raw["bn2"])
    # (9P, P): rows ordered (ky, kx, in-channel), matching the kernel's
    # [left | center | right] lane concat per ky block.
    p["w2"] = (raw["w2"].transpose(2, 3, 1, 0).reshape(9 * planes, planes)
               * s2).astype(jnp.bfloat16)
    s3, p["b3"] = fold(raw["bn3"])
    p["w3"] = (raw["w3"].reshape(planes * exp, planes).T * s3).astype(jnp.bfloat16)
    if "wd" in raw:
        sd, p["bd"] = fold(raw["bnd"])
        p["wd"] = (raw["wd"].reshape(planes * exp, inplanes).T * sd).astype(jnp.bfloat16)
    return raw, p


# ----------------------------------------------------------------------------
if __name__ == "__main__":
    configs = [
        # (N, inplanes, planes, stride, H) : downsample + fused-avgpool path
        (2, 16, 8, 2, 16),
        # identity path (inplanes == planes*4, stride=1), tests stride=1 kernel
        (2, 32, 8, 1, 16),
    ]
    key = jax.random.PRNGKey(0)
    for idx, (N, inplanes, planes, stride, H) in enumerate(configs):
        W = H
        key, kx, kp = jax.random.split(key, 3)
        x = jax.random.normal(kx, (N, inplanes, H, W), dtype=jnp.float32)  # NCHW
        raw, p = make_params(kp, inplanes, planes, stride)

        fwd = jax.jit(functools.partial(bottleneck_forward, stride=stride))
        out = jax.block_until_ready(fwd(x, p))

        ref = jax.block_until_ready(ref_forward(x, raw, stride))
        assert out.shape == (N, planes * 4, H // stride, W // stride), out.shape
        max_err = float(jnp.max(jnp.abs(out - ref)))
        assert jnp.allclose(out, ref, atol=3e-2, rtol=3e-2), (idx, max_err)

    print("KERNEL_OK")
</pallas_src>

<mosaic_0001>
module attributes {stable_mosaic.version = 11 : i64} {
  func.func @_mm_fast_kernel(%arg0: i32, %arg1: memref<128x16xbf16, #tpu.memory_space<vmem>>, %arg2: memref<16x32xbf16, #tpu.memory_space<vmem>>, %arg3: memref<1x32xf32, #tpu.memory_space<vmem>>, %arg4: memref<128x32xbf16, #tpu.memory_space<vmem>>) attributes {dimension_semantics = [#tpu.dimension_semantics<parallel>], iteration_bounds = array<i64: 1>, scalar_prefetch = 0 : i64, scratch_operands = 0 : i64, tpu.core_type = #tpu.core_type<tc>, window_params = [{transform_indices = @transform_0, window_bounds = array<i64: 128, 16>}, {pipeline_mode = #tpu.pipeline_mode<synchronous>, transform_indices = @transform_1, window_bounds = array<i64: 16, 32>}, {pipeline_mode = #tpu.pipeline_mode<synchronous>, transform_indices = @transform_2, window_bounds = array<i64: 1, 32>}, {transform_indices = @transform_3, window_bounds = array<i64: 128, 32>}]} {
    %c0 = arith.constant 0 : index
    %c0_0 = arith.constant 0 : index
    %0 = vector.load %arg1[%c0, %c0_0] : memref<128x16xbf16, #tpu.memory_space<vmem>>, vector<128x16xbf16>
    %c0_1 = arith.constant 0 : index
    %c0_2 = arith.constant 0 : index
    %1 = vector.load %arg2[%c0_1, %c0_2] : memref<16x32xbf16, #tpu.memory_space<vmem>>, vector<16x32xbf16>
    %cst = arith.constant dense<0.000000e+00> : vector<128x32xf32>
    %2 = tpu.matmul %0, %1, %cst {dimension_numbers = #tpu.dot_dimension_numbers<[1], [0], [0], [1], [0, 0, 1, 1], [], []>} : vector<128x16xbf16>, vector<16x32xbf16>, vector<128x32xf32> -> vector<128x32xf32>
    %c0_3 = arith.constant 0 : index
    %c0_4 = arith.constant 0 : index
    %3 = vector.load %arg3[%c0_3, %c0_4] : memref<1x32xf32, #tpu.memory_space<vmem>>, vector<1x32xf32>
    %4 = vector.broadcast %3 : vector<1x32xf32> to vector<128x32xf32>
    %5 = arith.addf %2, %4 : vector<128x32xf32>
    %6 = arith.truncf %5 : vector<128x32xf32> to vector<128x32xbf16>
    %c0_5 = arith.constant 0 : index
    %c0_6 = arith.constant 0 : index
    %7 = vector.load %arg4[%c0_5, %c0_6] : memref<128x32xbf16, #tpu.memory_space<vmem>>, vector<128x32xbf16>
    tpu.vector_store %arg4[%c0_5, %c0_6], %6 {strides = array<i32>} : memref<128x32xbf16, #tpu.memory_space<vmem>>, vector<128x32xbf16>,
    return
  }
  func.func @transform_0(%arg0: i32) -> (i32, i32) {
    %c0_i32 = arith.constant 0 : i32
    %c0_i32_0 = arith.constant 0 : i32
    return %arg0, %c0_i32 : i32, i32
  }
  func.func @transform_1(%arg0: i32) -> (i32, i32) {
    %c0_i32 = arith.constant 0 : i32
    %c0_i32_0 = arith.constant 0 : i32
    %c0_i32_1 = arith.constant 0 : i32
    return %c0_i32, %c0_i32_0 : i32, i32
  }
  func.func @transform_2(%arg0: i32) -> (i32, i32) {
    %c0_i32 = arith.constant 0 : i32
    %c0_i32_0 = arith.constant 0 : i32
    %c0_i32_1 = arith.constant 0 : i32
    return %c0_i32, %c0_i32_0 : i32, i32
  }
  func.func @transform_3(%arg0: i32) -> (i32, i32) {
    %c0_i32 = arith.constant 0 : i32
    %c0_i32_0 = arith.constant 0 : i32
    return %arg0, %c0_i32 : i32, i32
  }
}

module attributes {stable_mosaic.version = 11 : i64} {
  func.func @_conv12_kernel(%arg0: i32, %arg1: memref<1x256x16xbf16, #tpu.memory_space<vmem>>, %arg2: memref<16x8xbf16, #tpu.memory_space<vmem>>, %arg3: memref<1x8xf32, #tpu.memory_space<vmem>>, %arg4: memref<72x8xbf16, #tpu.memory_space<vmem>>, %arg5: memref<1x8xf32, #tpu.memory_space<vmem>>, %arg6: memref<1x64x8xbf16, #tpu.memory_space<vmem>>, %arg7: memref<256x8xf32, #tpu.memory_space<vmem>>) attributes {dimension_semantics = [#tpu.dimension_semantics<parallel>], iteration_bounds = array<i64: 2>, scalar_prefetch = 0 : i64, scratch_operands = 1 : i64, tpu.core_type = #tpu.core_type<tc>, window_params = [{transform_indices = @transform_0, window_bounds = array<i64: 1, 256, 16>}, {pipeline_mode = #tpu.pipeline_mode<synchronous>, transform_indices = @transform_1, window_bounds = array<i64: 16, 8>}, {pipeline_mode = #tpu.pipeline_mode<synchronous>, transform_indices = @transform_2, window_bounds = array<i64: 1, 8>}, {pipeline_mode = #tpu.pipeline_mode<synchronous>, transform_indices = @transform_3, window_bounds = array<i64: 72, 8>}, {pipeline_mode = #tpu.pipeline_mode<synchronous>, transform_indices = @transform_4, window_bounds = array<i64: 1, 8>}, {transform_indices = @transform_5, window_bounds = array<i64: 1, 64, 8>}]} {
    %c0 = arith.constant 0 : index
    %c0_0 = arith.constant 0 : index
    %c0_1 = arith.constant 0 : index
    %0 = vector.load %arg1[%c0, %c0_0, %c0_1] : memref<1x256x16xbf16, #tpu.memory_space<vmem>>, vector<1x256x16xbf16>
    %1 = vector.shape_cast %0 : vector<1x256x16xbf16> to vector<256x16xbf16>
    %c0_2 = arith.constant 0 : index
    %c0_3 = arith.constant 0 : index
    %2 = vector.load %arg2[%c0_2, %c0_3] : memref<16x8xbf16, #tpu.memory_space<vmem>>, vector<16x8xbf16>
    %cst = arith.constant dense<0.000000e+00> : vector<256x8xf32>
    %3 = tpu.matmul %1, %2, %cst {dimension_numbers = #tpu.dot_dimension_numbers<[1], [0], [0], [1], [0, 0, 1, 1], [], []>} : vector<256x16xbf16>, vector<16x8xbf16>, vector<256x8xf32> -> vector<256x8xf32>
    %c0_4 = arith.constant 0 : index
    %c0_5 = arith.constant 0 : index
    %4 = vector.load %arg3[%c0_4, %c0_5] : memref<1x8xf32, #tpu.memory_space<vmem>>, vector<1x8xf32>
    %5 = vector.broadcast %4 : vector<1x8xf32> to vector<256x8xf32>
    %6 = arith.addf %3, %5 : vector<256x8xf32>
    %cst_6 = arith.constant 0.000000e+00 : f32
    %7 = vector.broadcast %cst_6 : f32 to vector<256x8xf32>
    %8 = arith.maximumf %6, %7 : vector<256x8xf32>
    %9 = arith.truncf %8 : vector<256x8xf32> to vector<256x8xbf16>
    %cst_7 = arith.constant 0.000000e+00 : bf16
    %10 = vector.broadcast %cst_7 : bf16 to vector<16x8xbf16>
    %11 = tpu.concatenate %10, %9, %10 in 0 : vector<16x8xbf16>, vector<256x8xbf16>, vector<16x8xbf16> -> vector<288x8xbf16>
    %cst_8 = arith.constant 0.000000e+00 : bf16
    %12 = vector.broadcast %cst_8 : bf16 to vector<1x8xbf16>
    %13 = vector.extract_strided_slice %11 {offsets = [0, 0], sizes = [287, 8], strides = [1, 1]} : vector<288x8xbf16> to vector<287x8xbf16>
    %14 = tpu.concatenate %12, %13 in 0 : vector<1x8xbf16>, vector<287x8xbf16> -> vector<288x8xbf16>
    %15 = vector.extract_strided_slice %11 {offsets = [1, 0], sizes = [287, 8], strides = [1, 1]} : vector<288x8xbf16> to vector<287x8xbf16>
    %16 = tpu.concatenate %15, %12 in 0 : vector<287x8xbf16>, vector<1x8xbf16> -> vector<288x8xbf16>
    %17 = tpu.iota {dimensions = array<i32: 0>} : vector<288x1xi32>
    %c16_i32 = arith.constant 16 : i32
    %c0_i32 = arith.constant 0 : i32
    %18 = arith.cmpi eq, %c16_i32, %c0_i32 : i32
    %c1_i32 = arith.constant 1 : i32
    %19 = arith.select %18, %c1_i32, %c16_i32 : i32
    %20 = vector.broadcast %19 : i32 to vector<288x1xi32>
    %21 = arith.remsi %17, %20 : vector<288x1xi32>
    %c0_i32_9 = arith.constant 0 : i32
    %22 = vector.broadcast %c0_i32_9 : i32 to vector<288x1xi32>
    %23 = arith.cmpi ne, %21, %22 : vector<288x1xi32>
    %c0_i32_10 = arith.constant 0 : i32
    %24 = vector.broadcast %c0_i32_10 : i32 to vector<288x1xi32>
    %25 = arith.cmpi slt, %21, %24 : vector<288x1xi32>
    %c0_i32_11 = arith.constant 0 : i32
    %26 = arith.cmpi slt, %19, %c0_i32_11 : i32
    %27 = vector.broadcast %26 : i1 to vector<288x1xi1>
    %28 = vector.broadcast %27 : vector<288x1xi1> to vector<288x1xi1>
    %29 = arith.xori %25, %28 : vector<288x1xi1>
    %30 = arith.andi %29, %23 : vector<288x1xi1>
    %31 = vector.broadcast %19 : i32 to vector<288x1xi32>
    %32 = arith.addi %21, %31 : vector<288x1xi32>
    %33 = arith.select %30, %32, %21 : vector<288x1xi1>, vector<288x1xi32>
    %c0_i32_12 = arith.constant 0 : i32
    %34 = vector.broadcast %c0_i32_12 : i32 to vector<288x1xi32>
    %35 = arith.cmpi sgt, %33, %34 : vector<288x1xi32>
    %cst_13 = arith.constant 0.000000e+00 : bf16
    %36 = vector.broadcast %cst_13 : bf16 to vector<288x8xbf16>
    %37 = vector.shape_cast %35 : vector<288x1xi1> to vector<288x1xi1>
    %38 = vector.broadcast %37 : vector<288x1xi1> to vector<288x8xi1>
    %39 = arith.select %38, %14, %36 : vector<288x8xi1>, vector<288x8xbf16>
    %c15_i32 = arith.constant 15 : i32
    %40 = vector.broadcast %c15_i32 : i32 to vector<288x1xi32>
    %41 = arith.cmpi slt, %33, %40 : vector<288x1xi32>
    %cst_14 = arith.constant 0.000000e+00 : bf16
    %42 = vector.broadcast %cst_14 : bf16 to vector<288x8xbf16>
    %43 = vector.shape_cast %41 : vector<288x1xi1> to vector<288x1xi1>
    %44 = vector.broadcast %43 : vector<288x1xi1> to vector<288x8xi1>
    %45 = arith.select %44, %16, %42 : vector<288x8xi1>, vector<288x8xbf16>
    %46 = tpu.concatenate %39, %11, %45 in 1 : vector<288x8xbf16>, vector<288x8xbf16>, vector<288x8xbf16> -> vector<288x24xbf16>
    %47 = vector.extract_strided_slice %46 {offsets = [0, 0], sizes = [256, 24], strides = [1, 1]} : vector<288x24xbf16> to vector<256x24xbf16>
    %c0_15 = arith.constant 0 : index
    %c0_16 = arith.constant 0 : index
    %48 = vector.load %arg4[%c0_15, %c0_16] : memref<72x8xbf16, #tpu.memory_space<vmem>>, vector<24x8xbf16>
    %cst_17 = arith.constant dense<0.000000e+00> : vector<256x8xf32>
    %49 = tpu.matmul %47, %48, %cst_17 {dimension_numbers = #tpu.dot_dimension_numbers<[1], [0], [0], [1], [0, 0, 1, 1], [], []>} : vector<256x24xbf16>, vector<24x8xbf16>, vector<256x8xf32> -> vector<256x8xf32>
    %50 = vector.extract_strided_slice %46 {offsets = [16, 0], sizes = [256, 24], strides = [1, 1]} : vector<288x24xbf16> to vector<256x24xbf16>
    %c24 = arith.constant 24 : index
    %c0_18 = arith.constant 0 : index
    %51 = vector.load %arg4[%c24, %c0_18] : memref<72x8xbf16, #tpu.memory_space<vmem>>, vector<24x8xbf16>
    %cst_19 = arith.constant dense<0.000000e+00> : vector<256x8xf32>
    %52 = tpu.matmul %50, %51, %cst_19 {dimension_numbers = #tpu.dot_dimension_numbers<[1], [0], [0], [1], [0, 0, 1, 1], [], []>} : vector<256x24xbf16>, vector<24x8xbf16>, vector<256x8xf32> -> vector<256x8xf32>
    %53 = arith.addf %49, %52 : vector<256x8xf32>
    %54 = vector.extract_strided_slice %46 {offsets = [32, 0], sizes = [256, 24], strides = [1, 1]} : vector<288x24xbf16> to vector<256x24xbf16>
    %c48 = arith.constant 48 : index
    %c0_20 = arith.constant 0 : index
    %55 = vector.load %arg4[%c48, %c0_20] : memref<72x8xbf16, #tpu.memory_space<vmem>>, vector<24x8xbf16>
    %cst_21 = arith.constant dense<0.000000e+00> : vector<256x8xf32>
    %56 = tpu.matmul %54, %55, %cst_21 {dimension_numbers = #tpu.dot_dimension_numbers<[1], [0], [0], [1], [0, 0, 1, 1], [], []>} : vector<256x24xbf16>, vector<24x8xbf16>, vector<256x8xf32> -> vector<256x8xf32>
    %57 = arith.addf %53, %56 : vector<256x8xf32>
    %c0_22 = arith.constant 0 : index
    %c0_23 = arith.constant 0 : index
    %58 = vector.load %arg5[%c0_22, %c0_23] : memref<1x8xf32, #tpu.memory_space<vmem>>, vector<1x8xf32>
    %59 = vector.broadcast %58 : vector<1x8xf32> to vector<256x8xf32>
    %60 = arith.addf %57, %59 : vector<256x8xf32>
    %cst_24 = arith.constant 0.000000e+00 : f32
    %61 = vector.broadcast %cst_24 : f32 to vector<256x8xf32>
    %62 = arith.maximumf %60, %61 : vector<256x8xf32>
    %c0_25 = arith.constant 0 : index
    %c0_26 = arith.constant 0 : index
    %63 = vector.load %arg7[%c0_25, %c0_26] : memref<256x8xf32, #tpu.memory_space<vmem>>, vector<256x8xf32>
    tpu.vector_store %arg7[%c0_25, %c0_26], %62 {strides = array<i32>} : memref<256x8xf32, #tpu.memory_space<vmem>>, vector<256x8xf32>,
    %c0_27 = arith.constant 0 : index
    %c0_28 = arith.constant 0 : index
    %64 = tpu.strided_load %arg7[%c0_27, %c0_28] {strides = array<i32: 2, 1>} : memref<256x8xf32, #tpu.memory_space<vmem>>, vector<128x8xf32>
    %c1 = arith.constant 1 : index
    %c0_29 = arith.constant 0 : index
    %65 = tpu.strided_load %arg7[%c1, %c0_29] {strides = array<i32: 2, 1>} : memref<256x8xf32, #tpu.memory_space<vmem>>, vector<128x8xf32>
    %66 = arith.addf %64, %65 : vector<128x8xf32>
    %67 = vector.extract_strided_slice %66 {offsets = [0, 0], sizes = [120, 8], strides = [1, 1]} : vector<128x8xf32> to vector<120x8xf32>
    %68 = vector.extract_strided_slice %66 {offsets = [8, 0], sizes = [120, 8], strides = [1, 1]} : vector<128x8xf32> to vector<120x8xf32>
    %69 = arith.addf %67, %68 : vector<120x8xf32>
    %70 = vector.extract_strided_slice %69 {offsets = [0, 0], sizes = [8, 8], strides = [1, 1]} : vector<120x8xf32> to vector<8x8xf32>
    %71 = vector.extract_strided_slice %69 {offsets = [16, 0], sizes = [8, 8], strides = [1, 1]} : vector<120x8xf32> to vector<8x8xf32>
    %72 = vector.extract_strided_slice %69 {offsets = [32, 0], sizes = [8, 8], strides = [1, 1]} : vector<120x8xf32> to vector<8x8xf32>
    %73 = vector.extract_strided_slice %69 {offsets = [48, 0], sizes = [8, 8], strides = [1, 1]} : vector<120x8xf32> to vector<8x8xf32>
    %74 = vector.extract_strided_slice %69 {offsets = [64, 0], sizes = [8, 8], strides = [1, 1]} : vector<120x8xf32> to vector<8x8xf32>
    %75 = vector.extract_strided_slice %69 {offsets = [80, 0], sizes = [8, 8], strides = [1, 1]} : vector<120x8xf32> to vector<8x8xf32>
    %76 = vector.extract_strided_slice %69 {offsets = [96, 0], sizes = [8, 8], strides = [1, 1]} : vector<120x8xf32> to vector<8x8xf32>
    %77 = vector.extract_strided_slice %69 {offsets = [112, 0], sizes = [8, 8], strides = [1, 1]} : vector<120x8xf32> to vector<8x8xf32>
    %78 = tpu.concatenate %70, %71, %72, %73, %74, %75, %76, %77 in 0 : vector<8x8xf32>, vector<8x8xf32>, vector<8x8xf32>, vector<8x8xf32>, vector<8x8xf32>, vector<8x8xf32>, vector<8x8xf32>, vector<8x8xf32> -> vector<64x8xf32>
    %cst_30 = arith.constant 2.500000e-01 : f32
    %79 = vector.broadcast %cst_30 : f32 to vector<64x8xf32>
    %80 = arith.mulf %78, %79 : vector<64x8xf32>
    %81 = arith.truncf %80 : vector<64x8xf32> to vector<64x8xbf16>
    %c0_31 = arith.constant 0 : index
    %c0_32 = arith.constant 0 : index
    %c0_33 = arith.constant 0 : index
    %82 = vector.load %arg6[%c0_31, %c0_32, %c0_33] : memref<1x64x8xbf16, #tpu.memory_space<vmem>>, vector<1x64x8xbf16>
    %83 = vector.shape_cast %82 : vector<1x64x8xbf16> to vector<64x8xbf16>
    %84 = vector.shape_cast %81 : vector<64x8xbf16> to vector<1x64x8xbf16>
    tpu.vector_store %arg6[%c0_31, %c0_32, %c0_33], %84 {strides = array<i32>} : memref<1x64x8xbf16, #tpu.memory_space<vmem>>, vector<1x64x8xbf16>,
    return
  }
  func.func @transform_0(%arg0: i32) -> (i32, i32, i32) {
    %c0_i32 = arith.constant 0 : i32
    %c0_i32_0 = arith.constant 0 : i32
    %c0_i32_1 = arith.constant 0 : i32
    return %arg0, %c0_i32, %c0_i32_0 : i32, i32, i32
  }
  func.func @transform_1(%arg0: i32) -> (i32, i32) {
    %c0_i32 = arith.constant 0 : i32
    %c0_i32_0 = arith.constant 0 : i32
    %c0_i32_1 = arith.constant 0 : i32
    return %c0_i32, %c0_i32_0 : i32, i32
  }
  func.func @transform_2(%arg0: i32) -> (i32, i32) {
    %c0_i32 = arith.constant 0 : i32
    %c0_i32_0 = arith.constant 0 : i32
    %c0_i32_1 = arith.constant 0 : i32
    return %c0_i32, %c0_i32_0 : i32, i32
  }
  func.func @transform_3(%arg0: i32) -> (i32, i32) {
    %c0_i32 = arith.constant 0 : i32
    %c0_i32_0 = arith.constant 0 : i32
    %c0_i32_1 = arith.constant 0 : i32
    return %c0_i32, %c0_i32_0 : i32, i32
  }
  func.func @transform_4(%arg0: i32) -> (i32, i32) {
    %c0_i32 = arith.constant 0 : i32
    %c0_i32_0 = arith.constant 0 : i32
    %c0_i32_1 = arith.constant 0 : i32
    return %c0_i32, %c0_i32_0 : i32, i32
  }
  func.func @transform_5(%arg0: i32) -> (i32, i32, i32) {
    %c0_i32 = arith.constant 0 : i32
    %c0_i32_0 = arith.constant 0 : i32
    %c0_i32_1 = arith.constant 0 : i32
    return %arg0, %c0_i32, %c0_i32_0 : i32, i32, i32
  }
}

module attributes {stable_mosaic.version = 11 : i64} {
  func.func @_mm_fast_res_kernel(%arg0: i32, %arg1: memref<128x8xbf16, #tpu.memory_space<vmem>>, %arg2: memref<8x32xbf16, #tpu.memory_space<vmem>>, %arg3: memref<1x32xf32, #tpu.memory_space<vmem>>, %arg4: memref<128x32xbf16, #tpu.memory_space<vmem>>, %arg5: memref<128x32xbf16, #tpu.memory_space<vmem>>) attributes {dimension_semantics = [#tpu.dimension_semantics<parallel>], iteration_bounds = array<i64: 1>, scalar_prefetch = 0 : i64, scratch_operands = 0 : i64, tpu.core_type = #tpu.core_type<tc>, window_params = [{transform_indices = @transform_0, window_bounds = array<i64: 128, 8>}, {pipeline_mode = #tpu.pipeline_mode<synchronous>, transform_indices = @transform_1, window_bounds = array<i64: 8, 32>}, {pipeline_mode = #tpu.pipeline_mode<synchronous>, transform_indices = @transform_2, window_bounds = array<i64: 1, 32>}, {transform_indices = @transform_3, window_bounds = array<i64: 128, 32>}, {transform_indices = @transform_4, window_bounds = array<i64: 128, 32>}]} {
    %c0 = arith.constant 0 : index
    %c0_0 = arith.constant 0 : index
    %0 = vector.load %arg1[%c0, %c0_0] : memref<128x8xbf16, #tpu.memory_space<vmem>>, vector<128x8xbf16>
    %c0_1 = arith.constant 0 : index
    %c0_2 = arith.constant 0 : index
    %1 = vector.load %arg2[%c0_1, %c0_2] : memref<8x32xbf16, #tpu.memory_space<vmem>>, vector<8x32xbf16>
    %cst = arith.constant dense<0.000000e+00> : vector<128x32xf32>
    %2 = tpu.matmul %0, %1, %cst {dimension_numbers = #tpu.dot_dimension_numbers<[1], [0], [0], [1], [0, 0, 1, 1], [], []>} : vector<128x8xbf16>, vector<8x32xbf16>, vector<128x32xf32> -> vector<128x32xf32>
    %c0_3 = arith.constant 0 : index
    %c0_4 = arith.constant 0 : index
    %3 = vector.load %arg3[%c0_3, %c0_4] : memref<1x32xf32, #tpu.memory_space<vmem>>, vector<1x32xf32>
    %4 = vector.broadcast %3 : vector<1x32xf32> to vector<128x32xf32>
    %5 = arith.addf %2, %4 : vector<128x32xf32>
    %c0_5 = arith.constant 0 : index
    %c0_6 = arith.constant 0 : index
    %6 = vector.load %arg4[%c0_5, %c0_6] : memref<128x32xbf16, #tpu.memory_space<vmem>>, vector<128x32xbf16>
    %7 = arith.extf %6 : vector<128x32xbf16> to vector<128x32xf32>
    %8 = arith.addf %5, %7 : vector<128x32xf32>
    %cst_7 = arith.constant 0.000000e+00 : f32
    %9 = vector.broadcast %cst_7 : f32 to vector<128x32xf32>
    %10 = arith.maximumf %8, %9 : vector<128x32xf32>
    %11 = arith.truncf %10 : vector<128x32xf32> to vector<128x32xbf16>
    %c0_8 = arith.constant 0 : index
    %c0_9 = arith.constant 0 : index
    %12 = vector.load %arg5[%c0_8, %c0_9] : memref<128x32xbf16, #tpu.memory_space<vmem>>, vector<128x32xbf16>
    tpu.vector_store %arg5[%c0_8, %c0_9], %11 {strides = array<i32>} : memref<128x32xbf16, #tpu.memory_space<vmem>>, vector<128x32xbf16>,
    return
  }
  func.func @transform_0(%arg0: i32) -> (i32, i32) {
    %c0_i32 = arith.constant 0 : i32
    %c0_i32_0 = arith.constant 0 : i32
    return %arg0, %c0_i32 : i32, i32
  }
  func.func @transform_1(%arg0: i32) -> (i32, i32) {
    %c0_i32 = arith.constant 0 : i32
    %c0_i32_0 = arith.constant 0 : i32
    %c0_i32_1 = arith.constant 0 : i32
    return %c0_i32, %c0_i32_0 : i32, i32
  }
  func.func @transform_2(%arg0: i32) -> (i32, i32) {
    %c0_i32 = arith.constant 0 : i32
    %c0_i32_0 = arith.constant 0 : i32
    %c0_i32_1 = arith.constant 0 : i32
    return %c0_i32, %c0_i32_0 : i32, i32
  }
  func.func @transform_3(%arg0: i32) -> (i32, i32) {
    %c0_i32 = arith.constant 0 : i32
    %c0_i32_0 = arith.constant 0 : i32
    return %arg0, %c0_i32 : i32, i32
  }
  func.func @transform_4(%arg0: i32) -> (i32, i32) {
    %c0_i32 = arith.constant 0 : i32
    %c0_i32_0 = arith.constant 0 : i32
    return %arg0, %c0_i32 : i32, i32
  }
}

</mosaic_0001>

<llo_original>
// kernel: bottleneck_forward.4
$region0: #{bottleneck_forward.4}
  #allocation0 [shape = 'u32[]', space=smem, size = 0x4, offset = 0x4, fixed_abs, tag = 'smem constant byte address 0x4 - core index']
  #allocation1 [shape = 'u32[144,128]{1,0:T(1,128)}', space=vmem, size = 0x12000, scoped, tag = 'internal scratch']
  %s0 = inlined_call_operand.hbm [shape: bf16[128,16], index: 0, kind: input, shape index: {}]
  %s1 = inlined_call_operand.hbm [shape: bf16[16,32], index: 1, kind: input, shape index: {}]
  %s2 = inlined_call_operand.hbm [shape: f32[1,32], index: 2, kind: input, shape index: {}]
  %s3 = inlined_call_operand.hbm [shape: bf16[128,32], index: 3, kind: output, shape index: {}]
  %s4 = sld [smem:[#allocation0]]
  $region34: #{bottleneck_forward.4} parent=0
    _
  %s6 = ssub.s32 1, %s4
  %s7 = scalar_select 0, %s6, %s4
  $region1: #{bottleneck_forward.4} parent=0
    #allocation2 [shape = 'u8[32768]{0}', space=vmem, size = 0x8000, scoped, tag = 'input window, operand 0, single buffered']
    #allocation3 [shape = 's32[1]{0}', space=sflag, size = 0x4, scoped, tag = 'scoped memory for bottleneck_forward.4']
    #allocation4 [shape = 's32[1]{0}', space=sflag, size = 0x4, scoped, tag = 'scoped memory for bottleneck_forward.4']
    #allocation5 [shape = 'u8[4096]{0}', space=vmem, size = 0x1000, scoped, tag = 'input window, operand 1, single buffered']
    #allocation6 [shape = 's32[1]{0}', space=sflag, size = 0x4, scoped, tag = 'scoped memory for bottleneck_forward.4']
    #allocation7 [shape = 'u8[512]{0}', space=vmem, size = 0x400, scoped, tag = 'input window, operand 2, single buffered']
    #allocation8 [shape = 'u8[32768]{0}', space=vmem, size = 0x8000, scoped, tag = 'output window, operand 0, single buffered']
    %8 = vsyncpa [#allocation3], 0
    %9 = vsyncpa [#allocation6], 0
    %10 = vsyncpa [#allocation4], 0
    // Predicated region
    $region2: #{bottleneck_forward.4} parent=1 // pred_check
      _
    $region3: #{bottleneck_forward.4} parent=1 // pred_check_branch
      %12 = sbr.rel (0) target = $region5
    $region4: #{bottleneck_forward.4} parent=1 // pred_region
      %s14 = ssub.s32 1024, 1024
      %15 = vsyncadd [#allocation3], %s14
      %s16 = sshll.u32 [#allocation2], 4
      %s17 = int_to_ptr.vmem [resolvable:$true] %s16
      %22 = dma.hbm_to_vmem [thread:$0]  %s0, 1024, %s17, [#allocation3], 64, 64, 4
    $region5: #{bottleneck_forward.4} parent=1 // pred_fallthru
      _
    // Predicated region
    $region6: #{bottleneck_forward.4} parent=1 // pred_check
      _
    $region7: #{bottleneck_forward.4} parent=1 // pred_check_branch
      %24 = sbr.rel (0) target = $region9
    $region8: #{bottleneck_forward.4} parent=1 // pred_region
      %s26 = ssub.s32 128, 128
      %27 = vsyncadd [#allocation6], %s26
      %s28 = sshll.u32 [#allocation5], 4
      %s29 = int_to_ptr.vmem [resolvable:$true] %s28
      %34 = dma.hbm_to_vmem [thread:$0]  %s1, 128, %s29, [#allocation6], 64, 64, 4
    $region9: #{bottleneck_forward.4} parent=1 // pred_fallthru
      _
    // Predicated region
    $region10: #{bottleneck_forward.4} parent=1 // pred_check
      _
    $region11: #{bottleneck_forward.4} parent=1 // pred_check_branch
      %36 = sbr.rel (0) target = $region13
    $region12: #{bottleneck_forward.4} parent=1 // pred_region
      %s38 = ssub.s32 16, 16
      %39 = vsyncadd [#allocation6], %s38
      %s41 = sshll.u32 [#allocation7], 4
      %s42 = int_to_ptr.vmem [resolvable:$true] %s41
      %44 = dma.hbm_to_vmem [thread:$0]  %s2, 16, %s42, [#allocation6]
    $region13: #{bottleneck_forward.4} parent=1 // pred_fallthru
      _
    // Predicated region
    $region14: #{bottleneck_forward.4} parent=1 // pred_check
      _
    $region15: #{bottleneck_forward.4} parent=1 // pred_check_branch
      %46 = sbr.rel (0) target = $region17
    $region16: #{bottleneck_forward.4} parent=1 // pred_region
      %47 = dma.done [#allocation3], 1024
    $region17: #{bottleneck_forward.4} parent=1 // pred_fallthru
      _
    // Predicated region
    $region18: #{bottleneck_forward.4} parent=1 // pred_check
      _
    $region19: #{bottleneck_forward.4} parent=1 // pred_check_branch
      %49 = sbr.rel (0) target = $region21
    $region20: #{bottleneck_forward.4} parent=1 // pred_region
      %50 = dma.done [#allocation6], 128
    $region21: #{bottleneck_forward.4} parent=1 // pred_fallthru
      _
    // Predicated region
    $region22: #{bottleneck_forward.4} parent=1 // pred_check
      _
    $region23: #{bottleneck_forward.4} parent=1 // pred_check_branch
      %52 = sbr.rel (0) target = $region25
    $region24: #{bottleneck_forward.4} parent=1 // pred_region
      %53 = dma.done [#allocation6], 16
    $region25: #{bottleneck_forward.4} parent=1 // pred_fallthru
      _
    %v55 = vld [vmem:[#allocation2] sm:$0xf]
    %v56 = vld [vmem:[#allocation2 + $0x4] sm:$0xf]
    %v57 = vld [vmem:[#allocation2 + $0x8] sm:$0xf]
    %v58 = vld [vmem:[#allocation2 + $0xc] sm:$0xf]
    %v59 = vld [vmem:[#allocation2 + $0x10] sm:$0xf]
    %v60 = vld [vmem:[#allocation2 + $0x14] sm:$0xf]
    %v61 = vld [vmem:[#allocation2 + $0x18] sm:$0xf]
    %v62 = vld [vmem:[#allocation2 + $0x1c] sm:$0xf]
    %v63 = vld [vmem:[#allocation2 + $0x20] sm:$0xf]
    %v64 = vld [vmem:[#allocation2 + $0x24] sm:$0xf]
    %v65 = vld [vmem:[#allocation2 + $0x28] sm:$0xf]
    %v66 = vld [vmem:[#allocation2 + $0x2c] sm:$0xf]
    %v67 = vld [vmem:[#allocation2 + $0x30] sm:$0xf]
    %v68 = vld [vmem:[#allocation2 + $0x34] sm:$0xf]
    %v69 = vld [vmem:[#allocation2 + $0x38] sm:$0xf]
    %v70 = vld [vmem:[#allocation2 + $0x3c] sm:$0xf]
    %v71 = vld [vmem:[#allocation5] sm:$0xf]
    %v72 = vld [vmem:[#allocation5 + $0x4] sm:$0xf]
    %v73 = vld [vmem:[#allocation7] sm:$0x1]
    %v75 = vlaneseq
    %v76 = vshrl.u32 %v75, 7
    %v77 = vsub.s32 0, %v76
    %v78 = vrot.slane %v73, %v77
    %v96 = vunpack.c.l.b16 %v55
    %v97 = vunpack.c.l.b16 %v56
    %v98 = vunpack.c.l.b16 %v57
    %v99 = vunpack.c.l.b16 %v58
    %v100 = vunpack.c.l.b16 %v59
    %v101 = vunpack.c.l.b16 %v60
    %v102 = vunpack.c.l.b16 %v61
    %v103 = vunpack.c.l.b16 %v62
    %v104 = vunpack.c.l.b16 %v63
    %v105 = vunpack.c.l.b16 %v64
    %v106 = vunpack.c.l.b16 %v65
    %v107 = vunpack.c.l.b16 %v66
    %v108 = vunpack.c.l.b16 %v67
    %v109 = vunpack.c.l.b16 %v68
    %v110 = vunpack.c.l.b16 %v69
    %v111 = vunpack.c.l.b16 %v70
    %v112 = vpack.c.b16 %v97, %v96
    %v113 = vpack.c.b16 %v99, %v98
    %v114 = vpack.c.b16 %v101, %v100
    %v115 = vpack.c.b16 %v103, %v102
    %v116 = vpack.c.b16 %v105, %v104
    %v117 = vpack.c.b16 %v107, %v106
    %v118 = vpack.c.b16 %v109, %v108
    %v119 = vpack.c.b16 %v111, %v110
    %v122 = vunpack.c.l.b16 %v71
    %v123 = vunpack.c.l.b16 %v72
    %v124 = vpack.c.b16 %v123, %v122
    %vm126 = vcmask 130048
    %v128 = vsel %vm126, %v112, 0
    %v131 = vsel %vm126, %v113, 0
    %v134 = vsel %vm126, %v114, 0
    %v137 = vsel %vm126, %v115, 0
    %v140 = vsel %vm126, %v116, 0
    %v143 = vsel %vm126, %v117, 0
    %v146 = vsel %vm126, %v118, 0
    %v149 = vsel %vm126, %v119, 0
    %151 = vmatprep.subr.bf16.mxu0 0
    %152 = vmatpush1.bf16.msra.mxu0 %v124
    %153 = vmatprep.subr.bf16.mxu0 0
    %154 = vmatpush1.bf16.msra.mxu0 0
    %155 = vmatprep.subr.bf16.mxu0 0
    %156 = vmatpush1.bf16.msra.mxu0 0
    %157 = vmatprep.subr.bf16.mxu0 0
    %158 = vmatpush1.bf16.msra.mxu0 0
    %159 = vmatprep.subr.bf16.mxu0 0
    %160 = vmatpush1.bf16.msra.mxu0 0
    %161 = vmatprep.subr.bf16.mxu0 0
    %162 = vmatpush1.bf16.msra.mxu0 0
    %163 = vmatprep.subr.bf16.mxu0 0
    %164 = vmatpush1.bf16.msra.mxu0 0
    %165 = vmatprep.subr.bf16.mxu0 0
    %166 = vmatpush1.bf16.msra.mxu0 0
    %167 = vmatprep.subr.bf16.mxu0 0
    %168 = vmatpush1.bf16.msra.mxu0 0
    %169 = vmatprep.subr.bf16.mxu0 0
    %170 = vmatpush1.bf16.msra.mxu0 0
    %171 = vmatprep.subr.bf16.mxu0 0
    %172 = vmatpush1.bf16.msra.mxu0 0
    %173 = vmatprep.subr.bf16.mxu0 0
    %174 = vmatpush1.bf16.msra.mxu0 0
    %175 = vmatprep.subr.bf16.mxu0 0
    %176 = vmatpush1.bf16.msra.mxu0 0
    %177 = vmatprep.subr.bf16.mxu0 0
    %178 = vmatpush1.bf16.msra.mxu0 0
    %179 = vmatprep.subr.bf16.mxu0 0
    %180 = vmatpush1.bf16.msra.mxu0 0
    %181 = vmatprep.subr.bf16.mxu0 0
    %182 = vmatpush1.bf16.msra.mxu0 0
    %183 = vmatprep.mubr.bf16.mxu0 0
    %184 = vmatmul.mubr.bf16.gmra.mrb[0].mxu0 %v128
    %v185 = vpop.f32.mrb[0].mxu0
    %v186 = vadd.f32 %v78, %v185
    %v187 = vpop.f32.mrb[0].mxu0
    %v188 = vpop.f32.mrb[0].mxu0
    %v189 = vadd.f32 %v78, %v188
    %v190 = vpop.f32.mrb[0].mxu0
    %191 = vmatprep.mubr.bf16.mxu0 0
    %192 = vmatmul.mubr.bf16.gmra.mrb[0].mxu0 %v131
    %v193 = vpop.f32.mrb[0].mxu0
    %v194 = vadd.f32 %v78, %v193
    %v195 = vpop.f32.mrb[0].mxu0
    %v196 = vpop.f32.mrb[0].mxu0
    %v197 = vadd.f32 %v78, %v196
    %v198 = vpop.f32.mrb[0].mxu0
    %199 = vmatprep.mubr.bf16.mxu0 0
    %200 = vmatmul.mubr.bf16.gmra.mrb[0].mxu0 %v134
    %v201 = vpop.f32.mrb[0].mxu0
    %v202 = vadd.f32 %v78, %v201
    %v203 = vpop.f32.mrb[0].mxu0
    %v204 = vpop.f32.mrb[0].mxu0
    %v205 = vadd.f32 %v78, %v204
    %v206 = vpop.f32.mrb[0].mxu0
    %207 = vmatprep.mubr.bf16.mxu0 0
    %208 = vmatmul.mubr.bf16.gmra.mrb[0].mxu0 %v137
    %v209 = vpop.f32.mrb[0].mxu0
    %v210 = vadd.f32 %v78, %v209
    %v211 = vpop.f32.mrb[0].mxu0
    %v212 = vpop.f32.mrb[0].mxu0
    %v213 = vadd.f32 %v78, %v212
    %v214 = vpop.f32.mrb[0].mxu0
    %215 = vmatprep.mubr.bf16.mxu0 0
    %216 = vmatmul.mubr.bf16.gmra.mrb[0].mxu0 %v140
    %v217 = vpop.f32.mrb[0].mxu0
    %v218 = vadd.f32 %v78, %v217
    %v219 = vpop.f32.mrb[0].mxu0
    %v220 = vpop.f32.mrb[0].mxu0
    %v221 = vadd.f32 %v78, %v220
    %v222 = vpop.f32.mrb[0].mxu0
    %223 = vmatprep.mubr.bf16.mxu0 0
    %224 = vmatmul.mubr.bf16.gmra.mrb[0].mxu0 %v143
    %v225 = vpop.f32.mrb[0].mxu0
    %v226 = vadd.f32 %v78, %v225
    %v227 = vpop.f32.mrb[0].mxu0
    %v228 = vpop.f32.mrb[0].mxu0
    %v229 = vadd.f32 %v78, %v228
    %v230 = vpop.f32.mrb[0].mxu0
    %231 = vmatprep.mubr.bf16.mxu0 0
    %232 = vmatmul.mubr.bf16.gmra.mrb[0].mxu0 %v146
    %v233 = vpop.f32.mrb[0].mxu0
    %v234 = vadd.f32 %v78, %v233
    %v235 = vpop.f32.mrb[0].mxu0
    %v236 = vpop.f32.mrb[0].mxu0
    %v237 = vadd.f32 %v78, %v236
    %v238 = vpop.f32.mrb[0].mxu0
    %239 = vmatprep.mubr.bf16.mxu0 0
    %240 = vmatmul.mubr.bf16.gmra.mrb[0].mxu0 %v149
    %v241 = vpop.f32.mrb[0].mxu0
    %v242 = vadd.f32 %v78, %v241
    %v243 = vpop.f32.mrb[0].mxu0
    %v244 = vpop.f32.mrb[0].mxu0
    %v245 = vadd.f32 %v78, %v244
    %v246 = vpop.f32.mrb[0].mxu0
    %247 = vdwg.mxu0
    %v248 = vpack.c.bf16 %v189, %v186
    %v249 = vpack.c.bf16 %v197, %v194
    %v250 = vpack.c.bf16 %v205, %v202
    %v251 = vpack.c.bf16 %v213, %v210
    %v252 = vpack.c.bf16 %v221, %v218
    %v253 = vpack.c.bf16 %v229, %v226
    %v254 = vpack.c.bf16 %v237, %v234
    %v255 = vpack.c.bf16 %v245, %v242
    %v264 = vunpack.c.l.b16 %v248
    %v265 = vunpack.c.h.b16 %v248
    %v266 = vunpack.c.l.b16 %v249
    %v267 = vunpack.c.h.b16 %v249
    %v268 = vunpack.c.l.b16 %v250
    %v269 = vunpack.c.h.b16 %v250
    %v270 = vunpack.c.l.b16 %v251
    %v271 = vunpack.c.h.b16 %v251
    %v272 = vunpack.c.l.b16 %v252
    %v273 = vunpack.c.h.b16 %v252
    %v274 = vunpack.c.l.b16 %v253
    %v275 = vunpack.c.h.b16 %v253
    %v276 = vunpack.c.l.b16 %v254
    %v277 = vunpack.c.h.b16 %v254
    %v278 = vunpack.c.l.b16 %v255
    %v279 = vunpack.c.h.b16 %v255
    %v280 = vpack.c.b16 %v264, %v264
    %v281 = vpack.c.b16 %v265, %v265
    %v282 = vpack.c.b16 %v266, %v266
    %v283 = vpack.c.b16 %v267, %v267
    %v284 = vpack.c.b16 %v268, %v268
    %v285 = vpack.c.b16 %v269, %v269
    %v286 = vpack.c.b16 %v270, %v270
    %v287 = vpack.c.b16 %v271, %v271
    %v288 = vpack.c.b16 %v272, %v272
    %v289 = vpack.c.b16 %v273, %v273
    %v290 = vpack.c.b16 %v274, %v274
    %v291 = vpack.c.b16 %v275, %v275
    %v292 = vpack.c.b16 %v276, %v276
    %v293 = vpack.c.b16 %v277, %v277
    %v294 = vpack.c.b16 %v278, %v278
    %v295 = vpack.c.b16 %v279, %v279
    %vm312 = vcmask 257024
    %313 = vst.msk [vmem:[#allocation8] sm:$0xf] %vm312, %v280
    %314 = vst.msk [vmem:[#allocation8 + $0x4] sm:$0xf] %vm312, %v281
    %315 = vst.msk [vmem:[#allocation8 + $0x8] sm:$0xf] %vm312, %v282
    %316 = vst.msk [vmem:[#allocation8 + $0xc] sm:$0xf] %vm312, %v283
    %317 = vst.msk [vmem:[#allocation8 + $0x10] sm:$0xf] %vm312, %v284
    %318 = vst.msk [vmem:[#allocation8 + $0x14] sm:$0xf] %vm312, %v285
    %319 = vst.msk [vmem:[#allocation8 + $0x18] sm:$0xf] %vm312, %v286
    %320 = vst.msk [vmem:[#allocation8 + $0x1c] sm:$0xf] %vm312, %v287
    %321 = vst.msk [vmem:[#allocation8 + $0x20] sm:$0xf] %vm312, %v288
    %322 = vst.msk [vmem:[#allocation8 + $0x24] sm:$0xf] %vm312, %v289
    %323 = vst.msk [vmem:[#allocation8 + $0x28] sm:$0xf] %vm312, %v290
    %324 = vst.msk [vmem:[#allocation8 + $0x2c] sm:$0xf] %vm312, %v291
    %325 = vst.msk [vmem:[#allocation8 + $0x30] sm:$0xf] %vm312, %v292
    %326 = vst.msk [vmem:[#allocation8 + $0x34] sm:$0xf] %vm312, %v293
    %327 = vst.msk [vmem:[#allocation8 + $0x38] sm:$0xf] %vm312, %v294
    %328 = vst.msk [vmem:[#allocation8 + $0x3c] sm:$0xf] %vm312, %v295
    // Predicated region
    $region26: #{bottleneck_forward.4} parent=1 // pred_check
      _
    $region27: #{bottleneck_forward.4} parent=1 // pred_check_branch
      %330 = sbr.rel (0) target = $region29
    $region28: #{bottleneck_forward.4} parent=1 // pred_region
      %s332 = ssub.s32 1024, 1024
      %333 = vsyncadd [#allocation4], %s332
      %s334 = sshll.u32 [#allocation8], 4
      %s335 = int_to_ptr.vmem [resolvable:$true] %s334
      %340 = dma.vmem_to_hbm [thread:$0]  %s335, 1024, %s3, [#allocation4], 64, 64, 4
    $region29: #{bottleneck_forward.4} parent=1 // pred_fallthru
      _
    // Predicated region
    $region30: #{bottleneck_forward.4} parent=1 // pred_check
      _
    $region31: #{bottleneck_forward.4} parent=1 // pred_check_branch
      %342 = sbr.rel (0) target = $region33
    $region32: #{bottleneck_forward.4} parent=1 // pred_region
      %343 = dma.done [#allocation4], 1024
    $region33: #{bottleneck_forward.4} parent=1 // pred_fallthru
      _
    %344 = vsyncpa [#allocation3], 1
    %345 = vsyncpa [#allocation6], 1
    %346 = vsyncpa [#allocation4], 1

// kernel: bottleneck_forward.5
$region0: #{bottleneck_forward.5}
  #allocation0 [shape = 'u32[]', space=smem, size = 0x4, offset = 0x4, fixed_abs, tag = 'smem constant byte address 0x4 - core index']
  #allocation1 [shape = 'u32[144,128]{1,0:T(1,128)}', space=vmem, size = 0x12000, scoped, tag = 'internal scratch']
  %s0 = inlined_call_operand.hbm [shape: bf16[128,8], index: 0, kind: input, shape index: {}]
  %s1 = inlined_call_operand.hbm [shape: bf16[8,32], index: 1, kind: input, shape index: {}]
  %s2 = inlined_call_operand.hbm [shape: f32[1,32], index: 2, kind: input, shape index: {}]
  %s3 = inlined_call_operand.hbm [shape: bf16[128,32], index: 3, kind: input, shape index: {}]
  %s4 = inlined_call_operand.hbm [shape: bf16[128,32], index: 4, kind: output, shape index: {}]
  %s5 = sld [smem:[#allocation0]]
  $region42: #{bottleneck_forward.5} parent=0
    _
  %s7 = ssub.s32 1, %s5
  %s8 = scalar_select 0, %s7, %s5
  $region1: #{bottleneck_forward.5} parent=0
    #allocation2 [shape = 'u8[32768]{0}', space=vmem, size = 0x8000, scoped, tag = 'input window, operand 0, single buffered']
    #allocation3 [shape = 's32[1]{0}', space=sflag, size = 0x4, scoped, tag = 'scoped memory for bottleneck_forward.5']
    #allocation4 [shape = 's32[1]{0}', space=sflag, size = 0x4, scoped, tag = 'scoped memory for bottleneck_forward.5']
    #allocation5 [shape = 'u8[2048]{0}', space=vmem, size = 0x800, scoped, tag = 'input window, operand 1, single buffered']
    #allocation6 [shape = 's32[1]{0}', space=sflag, size = 0x4, scoped, tag = 'scoped memory for bottleneck_forward.5']
    #allocation7 [shape = 'u8[512]{0}', space=vmem, size = 0x400, scoped, tag = 'input window, operand 2, single buffered']
    #allocation8 [shape = 'u8[32768]{0}', space=vmem, size = 0x8000, scoped, tag = 'input window, operand 3, single buffered']
    #allocation9 [shape = 's32[1]{0}', space=sflag, size = 0x4, scoped, tag = 'scoped memory for bottleneck_forward.5']
    #allocation10 [shape = 'u8[32768]{0}', space=vmem, size = 0x8000, scoped, tag = 'output window, operand 0, single buffered']
    %9 = vsyncpa [#allocation3], 0
    %10 = vsyncpa [#allocation6], 0
    %11 = vsyncpa [#allocation9], 0
    %12 = vsyncpa [#allocation4], 0
    // Predicated region
    $region2: #{bottleneck_forward.5} parent=1 // pred_check
      _
    $region3: #{bottleneck_forward.5} parent=1 // pred_check_branch
      %14 = sbr.rel (0) target = $region5
    $region4: #{bottleneck_forward.5} parent=1 // pred_region
      %s16 = ssub.s32 1024, 1024
      %17 = vsyncadd [#allocation3], %s16
      %s18 = sshll.u32 [#allocation2], 4
      %s19 = int_to_ptr.vmem [resolvable:$true] %s18
      %24 = dma.hbm_to_vmem [thread:$0]  %s0, 1024, %s19, [#allocation3], 64, 64, 4
    $region5: #{bottleneck_forward.5} parent=1 // pred_fallthru
      _
    // Predicated region
    $region6: #{bottleneck_forward.5} parent=1 // pred_check
      _
    $region7: #{bottleneck_forward.5} parent=1 // pred_check_branch
      %26 = sbr.rel (0) target = $region9
    $region8: #{bottleneck_forward.5} parent=1 // pred_region
      %s28 = ssub.s32 64, 64
      %29 = vsyncadd [#allocation6], %s28
      %s31 = sshll.u32 [#allocation5], 4
      %s32 = int_to_ptr.vmem [resolvable:$true] %s31
      %34 = dma.hbm_to_vmem [thread:$0]  %s1, 64, %s32, [#allocation6]
    $region9: #{bottleneck_forward.5} parent=1 // pred_fallthru
      _
    // Predicated region
    $region10: #{bottleneck_forward.5} parent=1 // pred_check
      _
    $region11: #{bottleneck_forward.5} parent=1 // pred_check_branch
      %36 = sbr.rel (0) target = $region13
    $region12: #{bottleneck_forward.5} parent=1 // pred_region
      %s38 = ssub.s32 16, 16
      %39 = vsyncadd [#allocation6], %s38
      %s41 = sshll.u32 [#allocation7], 4
      %s42 = int_to_ptr.vmem [resolvable:$true] %s41
      %44 = dma.hbm_to_vmem [thread:$0]  %s2, 16, %s42, [#allocation6]
    $region13: #{bottleneck_forward.5} parent=1 // pred_fallthru
      _
    // Predicated region
    $region14: #{bottleneck_forward.5} parent=1 // pred_check
      _
    $region15: #{bottleneck_forward.5} parent=1 // pred_check_branch
      %46 = sbr.rel (0) target = $region17
    $region16: #{bottleneck_forward.5} parent=1 // pred_region
      %s48 = ssub.s32 1024, 1024
      %49 = vsyncadd [#allocation9], %s48
      %s50 = sshll.u32 [#allocation8], 4
      %s51 = int_to_ptr.vmem [resolvable:$true] %s50
      %56 = dma.hbm_to_vmem [thread:$0]  %s3, 1024, %s51, [#allocation9], 64, 64, 4
    $region17: #{bottleneck_forward.5} parent=1 // pred_fallthru
      _
    // Predicated region
    $region18: #{bottleneck_forward.5} parent=1 // pred_check
      _
    $region19: #{bottleneck_forward.5} parent=1 // pred_check_branch
      %58 = sbr.rel (0) target = $region21
    $region20: #{bottleneck_forward.5} parent=1 // pred_region
      %59 = dma.done [#allocation3], 1024
    $region21: #{bottleneck_forward.5} parent=1 // pred_fallthru
      _
    // Predicated region
    $region22: #{bottleneck_forward.5} parent=1 // pred_check
      _
    $region23: #{bottleneck_forward.5} parent=1 // pred_check_branch
      %61 = sbr.rel (0) target = $region25
    $region24: #{bottleneck_forward.5} parent=1 // pred_region
      %62 = dma.done [#allocation6], 64
    $region25: #{bottleneck_forward.5} parent=1 // pred_fallthru
      _
    // Predicated region
    $region26: #{bottleneck_forward.5} parent=1 // pred_check
      _
    $region27: #{bottleneck_forward.5} parent=1 // pred_check_branch
      %64 = sbr.rel (0) target = $region29
    $region28: #{bottleneck_forward.5} parent=1 // pred_region
      %65 = dma.done [#allocation6], 16
    $region29: #{bottleneck_forward.5} parent=1 // pred_fallthru
      _
    // Predicated region
    $region30: #{bottleneck_forward.5} parent=1 // pred_check
      _
    $region31: #{bottleneck_forward.5} parent=1 // pred_check_branch
      %67 = sbr.rel (0) target = $region33
    $region32: #{bottleneck_forward.5} parent=1 // pred_region
      %68 = dma.done [#allocation9], 1024
    $region33: #{bottleneck_forward.5} parent=1 // pred_fallthru
      _
    %v70 = vld [vmem:[#allocation2] sm:$0xf]
    %v71 = vld [vmem:[#allocation2 + $0x4] sm:$0xf]
    %v72 = vld [vmem:[#allocation2 + $0x8] sm:$0xf]
    %v73 = vld [vmem:[#allocation2 + $0xc] sm:$0xf]
    %v74 = vld [vmem:[#allocation2 + $0x10] sm:$0xf]
    %v75 = vld [vmem:[#allocation2 + $0x14] sm:$0xf]
    %v76 = vld [vmem:[#allocation2 + $0x18] sm:$0xf]
    %v77 = vld [vmem:[#allocation2 + $0x1c] sm:$0xf]
    %v78 = vld [vmem:[#allocation2 + $0x20] sm:$0xf]
    %v79 = vld [vmem:[#allocation2 + $0x24] sm:$0xf]
    %v80 = vld [vmem:[#allocation2 + $0x28] sm:$0xf]
    %v81 = vld [vmem:[#allocation2 + $0x2c] sm:$0xf]
    %v82 = vld [vmem:[#allocation2 + $0x30] sm:$0xf]
    %v83 = vld [vmem:[#allocation2 + $0x34] sm:$0xf]
    %v84 = vld [vmem:[#allocation2 + $0x38] sm:$0xf]
    %v85 = vld [vmem:[#allocation2 + $0x3c] sm:$0xf]
    %v86 = vld [vmem:[#allocation5] sm:$0xf]
    %v87 = vld [vmem:[#allocation7] sm:$0x1]
    %v89 = vlaneseq
    %v90 = vshrl.u32 %v89, 7
    %v91 = vsub.s32 0, %v90
    %v92 = vrot.slane %v87, %v91
    %v110 = vunpack.c.l.b16 %v70
    %v111 = vunpack.c.l.b16 %v71
    %v112 = vunpack.c.l.b16 %v72
    %v113 = vunpack.c.l.b16 %v73
    %v114 = vunpack.c.l.b16 %v74
    %v115 = vunpack.c.l.b16 %v75
    %v116 = vunpack.c.l.b16 %v76
    %v117 = vunpack.c.l.b16 %v77
    %v118 = vunpack.c.l.b16 %v78
    %v119 = vunpack.c.l.b16 %v79
    %v120 = vunpack.c.l.b16 %v80
    %v121 = vunpack.c.l.b16 %v81
    %v122 = vunpack.c.l.b16 %v82
    %v123 = vunpack.c.l.b16 %v83
    %v124 = vunpack.c.l.b16 %v84
    %v125 = vunpack.c.l.b16 %v85
    %v126 = vpack.c.b16 %v111, %v110
    %v127 = vpack.c.b16 %v113, %v112
    %v128 = vpack.c.b16 %v115, %v114
    %v129 = vpack.c.b16 %v117, %v116
    %v130 = vpack.c.b16 %v119, %v118
    %v131 = vpack.c.b16 %v121, %v120
    %v132 = vpack.c.b16 %v123, %v122
    %v133 = vpack.c.b16 %v125, %v124
    %vm134 = vcmask 64512
    %v136 = vsel %vm134, %v126, 0
    %v139 = vsel %vm134, %v127, 0
    %v142 = vsel %vm134, %v128, 0
    %v145 = vsel %vm134, %v129, 0
    %v148 = vsel %vm134, %v130, 0
    %v151 = vsel %vm134, %v131, 0
    %v154 = vsel %vm134, %v132, 0
    %v157 = vsel %vm134, %v133, 0
    %vm159 = vcmask 1043456
    %v161 = vsel %vm159, %v86, 0
    %163 = vmatprep.subr.bf16.mxu0 0
    %164 = vmatpush1.bf16.msra.mxu0 %v161
    %165 = vmatprep.subr.bf16.mxu0 0
    %166 = vmatpush1.bf16.msra.mxu0 0
    %167 = vmatprep.subr.bf16.mxu0 0
    %168 = vmatpush1.bf16.msra.mxu0 0
    %169 = vmatprep.subr.bf16.mxu0 0
    %170 = vmatpush1.bf16.msra.mxu0 0
    %171 = vmatprep.subr.bf16.mxu0 0
    %172 = vmatpush1.bf16.msra.mxu0 0
    %173 = vmatprep.subr.bf16.mxu0 0
    %174 = vmatpush1.bf16.msra.mxu0 0
    %175 = vmatprep.subr.bf16.mxu0 0
    %176 = vmatpush1.bf16.msra.mxu0 0
    %177 = vmatprep.subr.bf16.mxu0 0
    %178 = vmatpush1.bf16.msra.mxu0 0
    %179 = vmatprep.subr.bf16.mxu0 0
    %180 = vmatpush1.bf16.msra.mxu0 0
    %181 = vmatprep.subr.bf16.mxu0 0
    %182 = vmatpush1.bf16.msra.mxu0 0
    %183 = vmatprep.subr.bf16.mxu0 0
    %184 = vmatpush1.bf16.msra.mxu0 0
    %185 = vmatprep.subr.bf16.mxu0 0
    %186 = vmatpush1.bf16.msra.mxu0 0
    %187 = vmatprep.subr.bf16.mxu0 0
    %188 = vmatpush1.bf16.msra.mxu0 0
    %189 = vmatprep.subr.bf16.mxu0 0
    %190 = vmatpush1.bf16.msra.mxu0 0
    %191 = vmatprep.subr.bf16.mxu0 0
    %192 = vmatpush1.bf16.msra.mxu0 0
    %193 = vmatprep.subr.bf16.mxu0 0
    %194 = vmatpush1.bf16.msra.mxu0 0
    %195 = vmatprep.mubr.bf16.mxu0 0
    %196 = vmatmul.mubr.bf16.gmra.mrb[0].mxu0 %v136
    %v197 = vpop.f32.mrb[0].mxu0
    %v198 = vadd.f32 %v92, %v197
    %v199 = vpop.f32.mrb[0].mxu0
    %v200 = vpop.f32.mrb[0].mxu0
    %v201 = vadd.f32 %v92, %v200
    %v202 = vpop.f32.mrb[0].mxu0
    %203 = vmatprep.mubr.bf16.mxu0 0
    %204 = vmatmul.mubr.bf16.gmra.mrb[0].mxu0 %v139
    %v205 = vpop.f32.mrb[0].mxu0
    %v206 = vadd.f32 %v92, %v205
    %v207 = vpop.f32.mrb[0].mxu0
    %v208 = vpop.f32.mrb[0].mxu0
    %v209 = vadd.f32 %v92, %v208
    %v210 = vpop.f32.mrb[0].mxu0
    %211 = vmatprep.mubr.bf16.mxu0 0
    %212 = vmatmul.mubr.bf16.gmra.mrb[0].mxu0 %v142
    %v213 = vpop.f32.mrb[0].mxu0
    %v214 = vadd.f32 %v92, %v213
    %v215 = vpop.f32.mrb[0].mxu0
    %v216 = vpop.f32.mrb[0].mxu0
    %v217 = vadd.f32 %v92, %v216
    %v218 = vpop.f32.mrb[0].mxu0
    %219 = vmatprep.mubr.bf16.mxu0 0
    %220 = vmatmul.mubr.bf16.gmra.mrb[0].mxu0 %v145
    %v221 = vpop.f32.mrb[0].mxu0
    %v222 = vadd.f32 %v92, %v221
    %v223 = vpop.f32.mrb[0].mxu0
    %v224 = vpop.f32.mrb[0].mxu0
    %v225 = vadd.f32 %v92, %v224
    %v226 = vpop.f32.mrb[0].mxu0
    %227 = vmatprep.mubr.bf16.mxu0 0
    %228 = vmatmul.mubr.bf16.gmra.mrb[0].mxu0 %v148
    %v229 = vpop.f32.mrb[0].mxu0
    %v230 = vadd.f32 %v92, %v229
    %v231 = vpop.f32.mrb[0].mxu0
    %v232 = vpop.f32.mrb[0].mxu0
    %v233 = vadd.f32 %v92, %v232
    %v234 = vpop.f32.mrb[0].mxu0
    %235 = vmatprep.mubr.bf16.mxu0 0
    %236 = vmatmul.mubr.bf16.gmra.mrb[0].mxu0 %v151
    %v237 = vpop.f32.mrb[0].mxu0
    %v238 = vadd.f32 %v92, %v237
    %v239 = vpop.f32.mrb[0].mxu0
    %v240 = vpop.f32.mrb[0].mxu0
    %v241 = vadd.f32 %v92, %v240
    %v242 = vpop.f32.mrb[0].mxu0
    %243 = vmatprep.mubr.bf16.mxu0 0
    %244 = vmatmul.mubr.bf16.gmra.mrb[0].mxu0 %v154
    %v245 = vpop.f32.mrb[0].mxu0
    %v246 = vadd.f32 %v92, %v245
    %v247 = vpop.f32.mrb[0].mxu0
    %v248 = vpop.f32.mrb[0].mxu0
    %v249 = vadd.f32 %v92, %v248
    %v250 = vpop.f32.mrb[0].mxu0
    %251 = vmatprep.mubr.bf16.mxu0 0
    %252 = vmatmul.mubr.bf16.gmra.mrb[0].mxu0 %v157
    %v253 = vpop.f32.mrb[0].mxu0
    %v254 = vadd.f32 %v92, %v253
    %v255 = vpop.f32.mrb[0].mxu0
    %v256 = vpop.f32.mrb[0].mxu0
    %v257 = vadd.f32 %v92, %v256
    %v258 = vpop.f32.mrb[0].mxu0
    %259 = vdwg.mxu0
    %v260 = vld [vmem:[#allocation8] sm:$0xf]
    %v261 = vld [vmem:[#allocation8 + $0x4] sm:$0xf]
    %v262 = vld [vmem:[#allocation8 + $0x8] sm:$0xf]
    %v263 = vld [vmem:[#allocation8 + $0xc] sm:$0xf]
    %v264 = vld [vmem:[#allocation8 + $0x10] sm:$0xf]
    %v265 = vld [vmem:[#allocation8 + $0x14] sm:$0xf]
    %v266 = vld [vmem:[#allocation8 + $0x18] sm:$0xf]
    %v267 = vld [vmem:[#allocation8 + $0x1c] sm:$0xf]
    %v268 = vld [vmem:[#allocation8 + $0x20] sm:$0xf]
    %v269 = vld [vmem:[#allocation8 + $0x24] sm:$0xf]
    %v270 = vld [vmem:[#allocation8 + $0x28] sm:$0xf]
    %v271 = vld [vmem:[#allocation8 + $0x2c] sm:$0xf]
    %v272 = vld [vmem:[#allocation8 + $0x30] sm:$0xf]
    %v273 = vld [vmem:[#allocation8 + $0x34] sm:$0xf]
    %v274 = vld [vmem:[#allocation8 + $0x38] sm:$0xf]
    %v275 = vld [vmem:[#allocation8 + $0x3c] sm:$0xf]
    %v276 = vunpack.c.l.bf16 %v260
    %v277 = vunpack.c.l.bf16 %v261
    %v278 = vunpack.c.l.bf16 %v262
    %v279 = vunpack.c.l.bf16 %v263
    %v280 = vunpack.c.l.bf16 %v264
    %v281 = vunpack.c.l.bf16 %v265
    %v282 = vunpack.c.l.bf16 %v266
    %v283 = vunpack.c.l.bf16 %v267
    %v284 = vunpack.c.l.bf16 %v268
    %v285 = vunpack.c.l.bf16 %v269
    %v286 = vunpack.c.l.bf16 %v270
    %v287 = vunpack.c.l.bf16 %v271
    %v288 = vunpack.c.l.bf16 %v272
    %v289 = vunpack.c.l.bf16 %v273
    %v290 = vunpack.c.l.bf16 %v274
    %v291 = vunpack.c.l.bf16 %v275
    %v292 = vadd.f32 %v198, %v276
    %v293 = vadd.f32 %v201, %v277
    %v294 = vadd.f32 %v206, %v278
    %v295 = vadd.f32 %v209, %v279
    %v296 = vadd.f32 %v214, %v280
    %v297 = vadd.f32 %v217, %v281
    %v298 = vadd.f32 %v222, %v282
    %v299 = vadd.f32 %v225, %v283
    %v300 = vadd.f32 %v230, %v284
    %v301 = vadd.f32 %v233, %v285
    %v302 = vadd.f32 %v238, %v286
    %v303 = vadd.f32 %v241, %v287
    %v304 = vadd.f32 %v246, %v288
    %v305 = vadd.f32 %v249, %v289
    %v306 = vadd.f32 %v254, %v290
    %v307 = vadd.f32 %v257, %v291
    %v308 = vmax.f32 %v292, 0.0
    %v309 = vmax.f32 %v293, 0.0
    %v310 = vmax.f32 %v294, 0.0
    %v311 = vmax.f32 %v295, 0.0
    %v312 = vmax.f32 %v296, 0.0
    %v313 = vmax.f32 %v297, 0.0
    %v314 = vmax.f32 %v298, 0.0
    %v315 = vmax.f32 %v299, 0.0
    %v316 = vmax.f32 %v300, 0.0
    %v317 = vmax.f32 %v301, 0.0
    %v318 = vmax.f32 %v302, 0.0
    %v319 = vmax.f32 %v303, 0.0
    %v320 = vmax.f32 %v304, 0.0
    %v321 = vmax.f32 %v305, 0.0
    %v322 = vmax.f32 %v306, 0.0
    %v323 = vmax.f32 %v307, 0.0
    %v324 = vpack.c.bf16 %v309, %v308
    %v325 = vpack.c.bf16 %v311, %v310
    %v326 = vpack.c.bf16 %v313, %v312
    %v327 = vpack.c.bf16 %v315, %v314
    %v328 = vpack.c.bf16 %v317, %v316
    %v329 = vpack.c.bf16 %v319, %v318
    %v330 = vpack.c.bf16 %v321, %v320
    %v331 = vpack.c.bf16 %v323, %v322
    %v340 = vunpack.c.l.b16 %v324
    %v341 = vunpack.c.h.b16 %v324
    %v342 = vunpack.c.l.b16 %v325
    %v343 = vunpack.c.h.b16 %v325
    %v344 = vunpack.c.l.b16 %v326
    %v345 = vunpack.c.h.b16 %v326
    %v346 = vunpack.c.l.b16 %v327
    %v347 = vunpack.c.h.b16 %v327
    %v348 = vunpack.c.l.b16 %v328
    %v349 = vunpack.c.h.b16 %v328
    %v350 = vunpack.c.l.b16 %v329
    %v351 = vunpack.c.h.b16 %v329
    %v352 = vunpack.c.l.b16 %v330
    %v353 = vunpack.c.h.b16 %v330
    %v354 = vunpack.c.l.b16 %v331
    %v355 = vunpack.c.h.b16 %v331
    %v356 = vpack.c.b16 %v340, %v340
    %v357 = vpack.c.b16 %v341, %v341
    %v358 = vpack.c.b16 %v342, %v342
    %v359 = vpack.c.b16 %v343, %v343
    %v360 = vpack.c.b16 %v344, %v344
    %v361 = vpack.c.b16 %v345, %v345
    %v362 = vpack.c.b16 %v346, %v346
    %v363 = vpack.c.b16 %v347, %v347
    %v364 = vpack.c.b16 %v348, %v348
    %v365 = vpack.c.b16 %v349, %v349
    %v366 = vpack.c.b16 %v350, %v350
    %v367 = vpack.c.b16 %v351, %v351
    %v368 = vpack.c.b16 %v352, %v352
    %v369 = vpack.c.b16 %v353, %v353
    %v370 = vpack.c.b16 %v354, %v354
    %v371 = vpack.c.b16 %v355, %v355
    %vm388 = vcmask 257024
    %389 = vst.msk [vmem:[#allocation10] sm:$0xf] %vm388, %v356
    %390 = vst.msk [vmem:[#allocation10 + $0x4] sm:$0xf] %vm388, %v357
    %391 = vst.msk [vmem:[#allocation10 + $0x8] sm:$0xf] %vm388, %v358
    %392 = vst.msk [vmem:[#allocation10 + $0xc] sm:$0xf] %vm388, %v359
    %393 = vst.msk [vmem:[#allocation10 + $0x10] sm:$0xf] %vm388, %v360
    %394 = vst.msk [vmem:[#allocation10 + $0x14] sm:$0xf] %vm388, %v361
    %395 = vst.msk [vmem:[#allocation10 + $0x18] sm:$0xf] %vm388, %v362
    %396 = vst.msk [vmem:[#allocation10 + $0x1c] sm:$0xf] %vm388, %v363
    %397 = vst.msk [vmem:[#allocation10 + $0x20] sm:$0xf] %vm388, %v364
    %398 = vst.msk [vmem:[#allocation10 + $0x24] sm:$0xf] %vm388, %v365
    %399 = vst.msk [vmem:[#allocation10 + $0x28] sm:$0xf] %vm388, %v366
    %400 = vst.msk [vmem:[#allocation10 + $0x2c] sm:$0xf] %vm388, %v367
    %401 = vst.msk [vmem:[#allocation10 + $0x30] sm:$0xf] %vm388, %v368
    %402 = vst.msk [vmem:[#allocation10 + $0x34] sm:$0xf] %vm388, %v369
    %403 = vst.msk [vmem:[#allocation10 + $0x38] sm:$0xf] %vm388, %v370
    %404 = vst.msk [vmem:[#allocation10 + $0x3c] sm:$0xf] %vm388, %v371
    // Predicated region
    $region34: #{bottleneck_forward.5} parent=1 // pred_check
      _
    $region35: #{bottleneck_forward.5} parent=1 // pred_check_branch
      %406 = sbr.rel (0) target = $region37
    $region36: #{bottleneck_forward.5} parent=1 // pred_region
      %s408 = ssub.s32 1024, 1024
      %409 = vsyncadd [#allocation4], %s408
      %s410 = sshll.u32 [#allocation10], 4
      %s411 = int_to_ptr.vmem [resolvable:$true] %s410
      %416 = dma.vmem_to_hbm [thread:$0]  %s411, 1024, %s4, [#allocation4], 64, 64, 4
    $region37: #{bottleneck_forward.5} parent=1 // pred_fallthru
      _
    // Predicated region
    $region38: #{bottleneck_forward.5} parent=1 // pred_check
      _
    $region39: #{bottleneck_forward.5} parent=1 // pred_check_branch
      %418 = sbr.rel (0) target = $region41
    $region40: #{bottleneck_forward.5} parent=1 // pred_region
      %419 = dma.done [#allocation4], 1024
    $region41: #{bottleneck_forward.5} parent=1 // pred_fallthru
      _
    %420 = vsyncpa [#allocation3], 1
    %421 = vsyncpa [#allocation6], 1
    %422 = vsyncpa [#allocation9], 1
    %423 = vsyncpa [#allocation4], 1

// kernel: bottleneck_forward.3
$region0: #{bottleneck_forward.3}
  #allocation0 [shape = 'u32[]', space=smem, size = 0x4, offset = 0x4, fixed_abs, tag = 'smem constant byte address 0x4 - core index']
  #allocation1 [shape = 'u32[144,128]{1,0:T(1,128)}', space=vmem, size = 0x12000, scoped, tag = 'internal scratch']
  #allocation2 [shape = 'f32[256,8]{1,0:T(8,128)}', space=vmem, size = 0x20000, scoped, tag = 'scratch operand']
  %s0 = inlined_call_operand.hbm [shape: bf16[2,256,16], index: 0, kind: input, shape index: {}]
  %s1 = inlined_call_operand.hbm [shape: bf16[16,8], index: 1, kind: input, shape index: {}]
  %s2 = inlined_call_operand.hbm [shape: f32[1,8], index: 2, kind: input, shape index: {}]
  %s3 = inlined_call_operand.hbm [shape: bf16[72,8], index: 3, kind: input, shape index: {}]
  %s4 = inlined_call_operand.hbm [shape: f32[1,8], index: 4, kind: input, shape index: {}]
  %s5 = inlined_call_operand.hbm [shape: bf16[2,64,8], index: 5, kind: output, shape index: {}]
  %s6 = sld [smem:[#allocation0]]
  $region73: #{bottleneck_forward.3} parent=0
    _
  %s8 = ssub.s32 1, %s6
  %s9 = scalar_select 0, %s8, %s6
  $region1: #{bottleneck_forward.3} parent=0
    #allocation3 [shape = 'u8[131072]{0}', space=vmem, size = 0x20000, scoped, tag = 'input window, operand 0']
    #allocation4 [shape = 's32[2]{0}', space=sflag, size = 0x8, scoped, tag = 'scoped memory for bottleneck_forward.3']
    #allocation5 [shape = 's32[2]{0}', space=sflag, size = 0x8, scoped, tag = 'scoped memory for bottleneck_forward.3']
    #allocation6 [shape = 'u8[4096]{0}', space=vmem, size = 0x1000, scoped, tag = 'input window, operand 1, single buffered']
    #allocation7 [shape = 's32[1]{0}', space=sflag, size = 0x4, scoped, tag = 'scoped memory for bottleneck_forward.3']
    #allocation8 [shape = 'u8[512]{0}', space=vmem, size = 0x400, scoped, tag = 'input window, operand 2, single buffered']
    #allocation9 [shape = 'u8[18432]{0}', space=vmem, size = 0x4800, scoped, tag = 'input window, operand 3, single buffered']
    #allocation10 [shape = 's32[1]{0}', space=sflag, size = 0x4, scoped, tag = 'scoped memory for bottleneck_forward.3']
    #allocation11 [shape = 'u8[512]{0}', space=vmem, size = 0x400, scoped, tag = 'input window, operand 4, single buffered']
    #allocation12 [shape = 'u8[32768]{0}', space=vmem, size = 0x8000, scoped, tag = 'output window, operand 0']
    %10 = vsyncpa [#allocation4], 0
    %s11 = scalar_lea.sflag [#allocation4], 1
    %12 = vsyncpa %s11, 0
    %13 = vsyncpa [#allocation7], 0
    %14 = vsyncpa [#allocation10], 0
    %15 = vsyncpa [#allocation5], 0
    %s16 = scalar_lea.sflag [#allocation5], 1
    %17 = vsyncpa %s16, 0
    loop: start=0, step=1, limit=4
    $region2: #{bottleneck_forward.3} parent=1 // loop_pre_header
      _
    $region3: #{bottleneck_forward.3} parent=1 // loop_header
      %s19 = sphi 0, %s23
      %p20 = scmp.ge.s32.totalorder %s19, 4
      %s29 = sphi 0, %s31
      %s32 = sphi 0, %s29
      %s33 = sphi 0, %s32
      %s49 = sphi 0, %s33
      %s53 = sphi 0, %s53
      %s55 = sphi 0, %s53
      %s56 = sphi 0, %s55
      %s70 = sphi 0, %s56
      %s74 = sphi 0, %s74
      %s76 = sphi 0, %s74
      %s77 = sphi 0, %s76
      %s91 = sphi 0, %s77
      %s95 = sphi 0, %s95
      %s97 = sphi 0, %s95
      %s98 = sphi 0, %s97
      %s112 = sphi 0, %s98
      %s116 = sphi 0, %s116
      %s118 = sphi 0, %s116
      %s119 = sphi 0, %s118
      %s133 = sphi 0, %s119
      %s139 = sphi 0, %s141
      %s142 = sphi 0, %s139
      %s143 = sphi 0, %s142
      %s159 = sphi 0, %s143
    $region4: #{bottleneck_forward.3} parent=1 // loop_header_branch
      %22 = sbr.rel (%p20) target = $region8
    $region5: #{bottleneck_forward.3} parent=1 // loop_body
      %s24 = ssub.s32 %s19, 1
      %s25 = ssub.s32 %s19, 2
      %s26 = sadd.s32 %s19, 1
      %s27 = ssub.s32 %s19, %s26
      %p28 = scmp.eq.s32.totalorder %s27, 0
      %s30 = sadd.s32 %s29, 1
      %s31 = scalar_select %p28, %s29, %s30
      %p34 = pneg %p28
      %p35 = scmp.eq.s32.totalorder %s19, 1
      %p36 = por %p34, %p35
      %p37 = scmp.ne.s32.totalorder %s29, %s32
      %p38 = scmp.eq.s32.totalorder %s19, 0
      %p39 = por %p37, %p38
      %p40 = scmp.ne.s32.totalorder %s29, %s32
      %p41 = scmp.eq.s32.totalorder %s24, 1
      %p42 = por %p40, %p41
      %p43 = scmp.ne.s32.totalorder %s32, %s33
      %p44 = scmp.eq.s32.totalorder %s24, 0
      %p45 = por %p43, %p44
      %p46 = scmp.ne.s32.totalorder %s32, %s33
      %p47 = scmp.eq.s32.totalorder %s25, 1
      %p48 = por %p46, %p47
      %p50 = scmp.ne.s32.totalorder %s33, %s49
      %p51 = scmp.eq.s32.totalorder %s25, 0
      %p52 = por %p50, %p51
      %s54 = sadd.s32 %s53, 1
      %p57 = scmp.eq.s32.totalorder %s19, 1
      %p58 = scmp.ne.s32.totalorder %s53, %s55
      %p59 = scmp.eq.s32.totalorder %s19, 0
      %p60 = por %p58, %p59
      %p61 = scmp.ne.s32.totalorder %s53, %s55
      %p62 = scmp.eq.s32.totalorder %s24, 1
      %p63 = por %p61, %p62
      %p64 = scmp.ne.s32.totalorder %s55, %s56
      %p65 = scmp.eq.s32.totalorder %s24, 0
      %p66 = por %p64, %p65
      %p67 = scmp.ne.s32.totalorder %s55, %s56
      %p68 = scmp.eq.s32.totalorder %s25, 1
      %p69 = por %p67, %p68
      %p71 = scmp.ne.s32.totalorder %s56, %s70
      %p72 = scmp.eq.s32.totalorder %s25, 0
      %p73 = por %p71, %p72
      %s75 = sadd.s32 %s74, 1
      %p78 = scmp.eq.s32.totalorder %s19, 1
      %p79 = scmp.ne.s32.totalorder %s74, %s76
      %p80 = scmp.eq.s32.totalorder %s19, 0
      %p81 = por %p79, %p80
      %p82 = scmp.ne.s32.totalorder %s74, %s76
      %p83 = scmp.eq.s32.totalorder %s24, 1
      %p84 = por %p82, %p83
      %p85 = scmp.ne.s32.totalorder %s76, %s77
      %p86 = scmp.eq.s32.totalorder %s24, 0
      %p87 = por %p85, %p86
      %p88 = scmp.ne.s32.totalorder %s76, %s77
      %p89 = scmp.eq.s32.totalorder %s25, 1
      %p90 = por %p88, %p89
      %p92 = scmp.ne.s32.totalorder %s77, %s91
      %p93 = scmp.eq.s32.totalorder %s25, 0
      %p94 = por %p92, %p93
      %s96 = sadd.s32 %s95, 1
      %p99 = scmp.eq.s32.totalorder %s19, 1
      %p100 = scmp.ne.s32.totalorder %s95, %s97
      %p101 = scmp.eq.s32.totalorder %s19, 0
      %p102 = por %p100, %p101
      %p103 = scmp.ne.s32.totalorder %s95, %s97
      %p104 = scmp.eq.s32.totalorder %s24, 1
      %p105 = por %p103, %p104
      %p106 = scmp.ne.s32.totalorder %s97, %s98
      %p107 = scmp.eq.s32.totalorder %s24, 0
      %p108 = por %p106, %p107
      %p109 = scmp.ne.s32.totalorder %s97, %s98
      %p110 = scmp.eq.s32.totalorder %s25, 1
      %p111 = por %p109, %p110
      %p113 = scmp.ne.s32.totalorder %s98, %s112
      %p114 = scmp.eq.s32.totalorder %s25, 0
      %p115 = por %p113, %p114
      %s117 = sadd.s32 %s116, 1
      %p120 = scmp.eq.s32.totalorder %s19, 1
      %p121 = scmp.ne.s32.totalorder %s116, %s118
      %p122 = scmp.eq.s32.totalorder %s19, 0
      %p123 = por %p121, %p122
      %p124 = scmp.ne.s32.totalorder %s116, %s118
      %p125 = scmp.eq.s32.totalorder %s24, 1
      %p126 = por %p124, %p125
      %p127 = scmp.ne.s32.totalorder %s118, %s119
      %p128 = scmp.eq.s32.totalorder %s24, 0
      %p129 = por %p127, %p128
      %p130 = scmp.ne.s32.totalorder %s118, %s119
      %p131 = scmp.eq.s32.totalorder %s25, 1
      %p132 = por %p130, %p131
      %p134 = scmp.ne.s32.totalorder %s119, %s133
      %p135 = scmp.eq.s32.totalorder %s25, 0
      %p136 = por %p134, %p135
      %s137 = ssub.s32 %s19, %s26
      %p138 = scmp.eq.s32.totalorder %s137, 0
      %s140 = sadd.s32 %s139, 1
      %s141 = scalar_select %p138, %s139, %s140
      %p144 = pneg %p138
      %p145 = scmp.eq.s32.totalorder %s19, 1
      %p146 = por %p144, %p145
      %p147 = scmp.ne.s32.totalorder %s139, %s142
      %p148 = scmp.eq.s32.totalorder %s19, 0
      %p149 = por %p147, %p148
      %p150 = scmp.ne.s32.totalorder %s139, %s142
      %p151 = scmp.eq.s32.totalorder %s24, 1
      %p152 = por %p150, %p151
      %p153 = scmp.ne.s32.totalorder %s142, %s143
      %p154 = scmp.eq.s32.totalorder %s24, 0
      %p155 = por %p153, %p154
      %p156 = scmp.ne.s32.totalorder %s142, %s143
      %p157 = scmp.eq.s32.totalorder %s25, 1
      %p158 = por %p156, %p157
      %p160 = scmp.ne.s32.totalorder %s143, %s159
      %p161 = scmp.eq.s32.totalorder %s25, 0
      %p162 = por %p160, %p161
      %p163 = scmp.le.s32.totalorder 1, %s19
      %p164 = scmp.lt.s32.totalorder %s19, 3
      %p165 = pnand %p163, %p164
      %p166 = pneg %p165
      // Predicated region
      $region9: #{bottleneck_forward.3} parent=5 // pred_check
        _
      $region10: #{bottleneck_forward.3} parent=5 // pred_check_branch
        %168 = sbr.rel (%p165) target = $region12
      $region11: #{bottleneck_forward.3} parent=5 // pred_region
        %s169 = ssub.s32 %s19, 1
        // Predicated region
        $region13: #{bottleneck_forward.3} parent=11 // pred_check
          %p170 = pneg %p66
        $region14: #{bottleneck_forward.3} parent=11 // pred_check_branch
          %172 = sbr.rel (%p170) target = $region16
        $region15: #{bottleneck_forward.3} parent=11 // pred_region
          %s174 = ssub.s32 128, 128
          %175 = vsyncadd [#allocation7], %s174
          %s176 = sshll.u32 [#allocation6], 4
          %s177 = int_to_ptr.vmem [resolvable:$true] %s176
          %182 = dma.hbm_to_vmem [thread:$0]  %s1, 128, %s177, [#allocation7], 64, 64, 4
        $region16: #{bottleneck_forward.3} parent=11 // pred_fallthru
          _
        // Predicated region
        $region17: #{bottleneck_forward.3} parent=11 // pred_check
          %p183 = pneg %p87
        $region18: #{bottleneck_forward.3} parent=11 // pred_check_branch
          %185 = sbr.rel (%p183) target = $region20
        $region19: #{bottleneck_forward.3} parent=11 // pred_region
          %s187 = ssub.s32 16, 16
          %188 = vsyncadd [#allocation7], %s187
          %s190 = sshll.u32 [#allocation8], 4
          %s191 = int_to_ptr.vmem [resolvable:$true] %s190
          %193 = dma.hbm_to_vmem [thread:$0]  %s2, 16, %s191, [#allocation7]
        $region20: #{bottleneck_forward.3} parent=11 // pred_fallthru
          _
        // Predicated region
        $region21: #{bottleneck_forward.3} parent=11 // pred_check
          %p194 = pneg %p108
        $region22: #{bottleneck_forward.3} parent=11 // pred_check_branch
          %196 = sbr.rel (%p194) target = $region24
        $region23: #{bottleneck_forward.3} parent=11 // pred_region
          %s198 = ssub.s32 576, 576
          %199 = vsyncadd [#allocation10], %s198
          %s200 = sshll.u32 [#allocation9], 4
          %s201 = int_to_ptr.vmem [resolvable:$true] %s200
          %206 = dma.hbm_to_vmem [thread:$0]  %s3, 576, %s201, [#allocation10], 64, 64, 4
        $region24: #{bottleneck_forward.3} parent=11 // pred_fallthru
          _
        // Predicated region
        $region25: #{bottleneck_forward.3} parent=11 // pred_check
          %p207 = pneg %p129
        $region26: #{bottleneck_forward.3} parent=11 // pred_check_branch
          %209 = sbr.rel (%p207) target = $region28
        $region27: #{bottleneck_forward.3} parent=11 // pred_region
          %s211 = ssub.s32 16, 16
          %212 = vsyncadd [#allocation10], %s211
          %s214 = sshll.u32 [#allocation11], 4
          %s215 = int_to_ptr.vmem [resolvable:$true] %s214
          %217 = dma.hbm_to_vmem [thread:$0]  %s4, 16, %s215, [#allocation10]
        $region28: #{bottleneck_forward.3} parent=11 // pred_fallthru
          _
      $region12: #{bottleneck_forward.3} parent=5 // pred_fallthru
        _
      %p218 = scmp.lt.s32.totalorder %s19, 2
      // Predicated region
      $region29: #{bottleneck_forward.3} parent=5 // pred_check
        %p219 = pneg %p218
      $region30: #{bottleneck_forward.3} parent=5 // pred_check_branch
        %221 = sbr.rel (%p219) target = $region32
      $region31: #{bottleneck_forward.3} parent=5 // pred_region
        // Predicated region
        $region33: #{bottleneck_forward.3} parent=31 // pred_check
          %p222 = pneg %p39
        $region34: #{bottleneck_forward.3} parent=31 // pred_check_branch
          %224 = sbr.rel (%p222) target = $region36
        $region35: #{bottleneck_forward.3} parent=31 // pred_region
          %s225 = sand.u32 %s29, 1
          %s226 = scalar_lea.sflag [#allocation4], %s225
          %s227 = sand.u32 %s29, 1
          %s228 = smul.addr %s227, 128
          %s229 = scalar_lea.vmem [#allocation3], %s228
          %s231 = ssub.s32 2048, 2048
          %232 = vsyncadd %s226, %s231
          %s233 = smul.addr %s19, 32
          %s234 = smul.addr %s233, 64
          %s235 = scalar_lea.hbm %s0, %s234
          %s236 = sshll.u32 %s229, 4
          %s237 = int_to_ptr.vmem [resolvable:$true] %s236
          %242 = dma.hbm_to_vmem [thread:$0]  %s235, 2048, %s237, %s226, 64, 64, 4
        $region36: #{bottleneck_forward.3} parent=31 // pred_fallthru
          _
      $region32: #{bottleneck_forward.3} parent=5 // pred_fallthru
        _
      %p243 = scmp.le.s32.totalorder 1, %s19
      %p244 = scmp.lt.s32.totalorder %s19, 3
      %p245 = pnand %p243, %p244
      %p246 = pneg %p245
      // Predicated region
      $region37: #{bottleneck_forward.3} parent=5 // pred_check
        _
      $region38: #{bottleneck_forward.3} parent=5 // pred_check_branch
        %248 = sbr.rel (%p245) target = $region40
      $region39: #{bottleneck_forward.3} parent=5 // pred_region
        %s249 = ssub.s32 %s19, 1
        %s250 = sand.u32 %s32, 1
        %s251 = scalar_lea.sflag [#allocation4], %s250
        %s252 = sand.u32 %s32, 1
        %s253 = smul.addr %s252, 128
        %s254 = scalar_lea.vmem [#allocation3], %s253
        // Predicated region
        $region41: #{bottleneck_forward.3} parent=39 // pred_check
          %p255 = pneg %p45
        $region42: #{bottleneck_forward.3} parent=39 // pred_check_branch
          %257 = sbr.rel (%p255) target = $region44
        $region43: #{bottleneck_forward.3} parent=39 // pred_region
          %258 = dma.done %s251, 2048
        $region44: #{bottleneck_forward.3} parent=39 // pred_fallthru
          _
        // Predicated region
        $region45: #{bottleneck_forward.3} parent=39 // pred_check
          %p259 = pneg %p66
        $region46: #{bottleneck_forward.3} parent=39 // pred_check_branch
          %261 = sbr.rel (%p259) target = $region48
        $region47: #{bottleneck_forward.3} parent=39 // pred_region
          %262 = dma.done [#allocation7], 128
        $region48: #{bottleneck_forward.3} parent=39 // pred_fallthru
          _
        // Predicated region
        $region49: #{bottleneck_forward.3} parent=39 // pred_check
          %p263 = pneg %p87
        $region50: #{bottleneck_forward.3} parent=39 // pred_check_branch
          %265 = sbr.rel (%p263) target = $region52
        $region51: #{bottleneck_forward.3} parent=39 // pred_region
          %266 = dma.done [#allocation7], 16
        $region52: #{bottleneck_forward.3} parent=39 // pred_fallthru
          _
        // Predicated region
        $region53: #{bottleneck_forward.3} parent=39 // pred_check
          %p267 = pneg %p108
        $region54: #{bottleneck_forward.3} parent=39 // pred_check_branch
          %269 = sbr.rel (%p267) target = $region56
        $region55: #{bottleneck_forward.3} parent=39 // pred_region
          %270 = dma.done [#allocation10], 576
        $region56: #{bottleneck_forward.3} parent=39 // pred_fallthru
          _
        // Predicated region
        $region57: #{bottleneck_forward.3} parent=39 // pred_check
          %p271 = pneg %p129
        $region58: #{bottleneck_forward.3} parent=39 // pred_check_branch
          %273 = sbr.rel (%p271) target = $region60
        $region59: #{bottleneck_forward.3} parent=39 // pred_region
          %274 = dma.done [#allocation10], 16
        $region60: #{bottleneck_forward.3} parent=39 // pred_fallthru
          _
        %s275 = sand.u32 %s32, 1
        %s276 = scalar_lea.sflag [#allocation4], %s275
        %s277 = sand.u32 %s32, 1
        %s278 = smul.addr %s277, 128
        %s279 = scalar_lea.vmem [#allocation3], %s278
        %p280 = pneg %p45
        %p281 = pneg %p42
        %p282 = pneg %p66
        %p283 = pneg %p63
        %p284 = pneg %p87
        %p285 = pneg %p84
        %p286 = pneg %p108
        %p287 = pneg %p105
        %p288 = pneg %p129
        %p289 = pneg %p126
        %p290 = pneg %p155
        %p291 = pneg %p152
        %s292 = sand.u32 %s142, 1
        %s293 = scalar_lea.sflag [#allocation5], %s292
        %s294 = sand.u32 %s142, 1
        %s295 = smul.addr %s294, 32
        %s296 = scalar_lea.vmem [#allocation12], %s295
        %v300 = vld [vmem:[%s254] sm:$0xf]
        %v301 = vld [vmem:[%s254 + $0x4] sm:$0xf]
        %v302 = vld [vmem:[%s254 + $0x8] sm:$0xf]
        %v303 = vld [vmem:[%s254 + $0xc] sm:$0xf]
        %v304 = vld [vmem:[%s254 + $0x10] sm:$0xf]
        %v305 = vld [vmem:[%s254 + $0x14] sm:$0xf]
        %v306 = vld [vmem:[%s254 + $0x18] sm:$0xf]
        %v307 = vld [vmem:[%s254 + $0x1c] sm:$0xf]
        %v308 = vld [vmem:[%s254 + $0x20] sm:$0xf]
        %v309 = vld [vmem:[%s254 + $0x24] sm:$0xf]
        %v310 = vld [vmem:[%s254 + $0x28] sm:$0xf]
        %v311 = vld [vmem:[%s254 + $0x2c] sm:$0xf]
        %v312 = vld [vmem:[%s254 + $0x30] sm:$0xf]
        %v313 = vld [vmem:[%s254 + $0x34] sm:$0xf]
        %v314 = vld [vmem:[%s254 + $0x38] sm:$0xf]
        %v315 = vld [vmem:[%s254 + $0x3c] sm:$0xf]
        %v316 = vld [vmem:[%s254 + $0x40] sm:$0xf]
        %v317 = vld [vmem:[%s254 + $0x44] sm:$0xf]
        %v318 = vld [vmem:[%s254 + $0x48] sm:$0xf]
        %v319 = vld [vmem:[%s254 + $0x4c] sm:$0xf]
        %v320 = vld [vmem:[%s254 + $0x50] sm:$0xf]
        %v321 = vld [vmem:[%s254 + $0x54] sm:$0xf]
        %v322 = vld [vmem:[%s254 + $0x58] sm:$0xf]
        %v323 = vld [vmem:[%s254 + $0x5c] sm:$0xf]
        %v324 = vld [vmem:[%s254 + $0x60] sm:$0xf]
        %v325 = vld [vmem:[%s254 + $0x64] sm:$0xf]
        %v326 = vld [vmem:[%s254 + $0x68] sm:$0xf]
        %v327 = vld [vmem:[%s254 + $0x6c] sm:$0xf]
        %v328 = vld [vmem:[%s254 + $0x70] sm:$0xf]
        %v329 = vld [vmem:[%s254 + $0x74] sm:$0xf]
        %v330 = vld [vmem:[%s254 + $0x78] sm:$0xf]
        %v331 = vld [vmem:[%s254 + $0x7c] sm:$0xf]
        %v332 = vld [vmem:[#allocation6] sm:$0xf]
        %v333 = vld [vmem:[#allocation6 + $0x4] sm:$0xf]
        %v334 = vld [vmem:[#allocation8] sm:$0x1]
        %v336 = vlaneseq
        %v337 = vshrl.u32 %v336, 7
        %v338 = vsub.s32 0, %v337
        %v339 = vrot.slane %v334, %v338
        %v373 = vunpack.c.l.b16 %v300
        %v374 = vunpack.c.l.b16 %v301
        %v375 = vunpack.c.l.b16 %v302
        %v376 = vunpack.c.l.b16 %v303
        %v377 = vunpack.c.l.b16 %v304
        %v378 = vunpack.c.l.b16 %v305
        %v379 = vunpack.c.l.b16 %v306
        %v380 = vunpack.c.l.b16 %v307
        %v381 = vunpack.c.l.b16 %v308
        %v382 = vunpack.c.l.b16 %v309
        %v383 = vunpack.c.l.b16 %v310
        %v384 = vunpack.c.l.b16 %v311
        %v385 = vunpack.c.l.b16 %v312
        %v386 = vunpack.c.l.b16 %v313
        %v387 = vunpack.c.l.b16 %v314
        %v388 = vunpack.c.l.b16 %v315
        %v389 = vunpack.c.l.b16 %v316
        %v390 = vunpack.c.l.b16 %v317
        %v391 = vunpack.c.l.b16 %v318
        %v392 = vunpack.c.l.b16 %v319
        %v393 = vunpack.c.l.b16 %v320
        %v394 = vunpack.c.l.b16 %v321
        %v395 = vunpack.c.l.b16 %v322
        %v396 = vunpack.c.l.b16 %v323
        %v397 = vunpack.c.l.b16 %v324
        %v398 = vunpack.c.l.b16 %v325
        %v399 = vunpack.c.l.b16 %v326
        %v400 = vunpack.c.l.b16 %v327
        %v401 = vunpack.c.l.b16 %v328
        %v402 = vunpack.c.l.b16 %v329
        %v403 = vunpack.c.l.b16 %v330
        %v404 = vunpack.c.l.b16 %v331
        %v405 = vpack.c.b16 %v374, %v373
        %v406 = vpack.c.b16 %v376, %v375
        %v407 = vpack.c.b16 %v378, %v377
        %v408 = vpack.c.b16 %v380, %v379
        %v409 = vpack.c.b16 %v382, %v381
        %v410 = vpack.c.b16 %v384, %v383
        %v411 = vpack.c.b16 %v386, %v385
        %v412 = vpack.c.b16 %v388, %v387
        %v413 = vpack.c.b16 %v390, %v389
        %v414 = vpack.c.b16 %v392, %v391
        %v415 = vpack.c.b16 %v394, %v393
        %v416 = vpack.c.b16 %v396, %v395
        %v417 = vpack.c.b16 %v398, %v397
        %v418 = vpack.c.b16 %v400, %v399
        %v419 = vpack.c.b16 %v402, %v401
        %v420 = vpack.c.b16 %v404, %v403
        %v423 = vunpack.c.l.b16 %v332
        %v424 = vunpack.c.l.b16 %v333
        %v425 = vpack.c.b16 %v424, %v423
        %vm427 = vcmask 130048
        %v429 = vsel %vm427, %v405, 0
        %v432 = vsel %vm427, %v406, 0
        %v435 = vsel %vm427, %v407, 0
        %v438 = vsel %vm427, %v408, 0
        %v441 = vsel %vm427, %v409, 0
        %v444 = vsel %vm427, %v410, 0
        %v447 = vsel %vm427, %v411, 0
        %v450 = vsel %vm427, %v412, 0
        %v453 = vsel %vm427, %v413, 0
        %v456 = vsel %vm427, %v414, 0
        %v459 = vsel %vm427, %v415, 0
        %v462 = vsel %vm427, %v416, 0
        %v465 = vsel %vm427, %v417, 0
        %v468 = vsel %vm427, %v418, 0
        %v471 = vsel %vm427, %v419, 0
        %v474 = vsel %vm427, %v420, 0
        %476 = vmatprep.subr.bf16.mxu0 0
        %477 = vmatpush1.bf16.msra.mxu0 %v425
        %478 = vmatprep.subr.bf16.mxu0 0
        %479 = vmatpush1.bf16.msra.mxu0 0
        %480 = vmatprep.subr.bf16.mxu0 0
        %481 = vmatpush1.bf16.msra.mxu0 0
        %482 = vmatprep.subr.bf16.mxu0 0
        %483 = vmatpush1.bf16.msra.mxu0 0
        %484 = vmatprep.subr.bf16.mxu0 0
        %485 = vmatpush1.bf16.msra.mxu0 0
        %486 = vmatprep.subr.bf16.mxu0 0
        %487 = vmatpush1.bf16.msra.mxu0 0
        %488 = vmatprep.subr.bf16.mxu0 0
        %489 = vmatpush1.bf16.msra.mxu0 0
        %490 = vmatprep.subr.bf16.mxu0 0
        %491 = vmatpush1.bf16.msra.mxu0 0
        %492 = vmatprep.subr.bf16.mxu0 0
        %493 = vmatpush1.bf16.msra.mxu0 0
        %494 = vmatprep.subr.bf16.mxu0 0
        %495 = vmatpush1.bf16.msra.mxu0 0
        %496 = vmatprep.subr.bf16.mxu0 0
        %497 = vmatpush1.bf16.msra.mxu0 0
        %498 = vmatprep.subr.bf16.mxu0 0
        %499 = vmatpush1.bf16.msra.mxu0 0
        %500 = vmatprep.subr.bf16.mxu0 0
        %501 = vmatpush1.bf16.msra.mxu0 0
        %502 = vmatprep.subr.bf16.mxu0 0
        %503 = vmatpush1.bf16.msra.mxu0 0
        %504 = vmatprep.subr.bf16.mxu0 0
        %505 = vmatpush1.bf16.msra.mxu0 0
        %506 = vmatprep.subr.bf16.mxu0 0
        %507 = vmatpush1.bf16.msra.mxu0 0
        %508 = vmatprep.mubr.bf16.mxu0 0
        %509 = vmatmul.mubr.bf16.gmra.mrb[0].mxu0 %v429
        %v510 = vpop.f32.mrb[0].mxu0
        %v511 = vadd.f32 %v339, %v510
        %v512 = vpop.f32.mrb[0].mxu0
        %v513 = vpop.f32.mrb[0].mxu0
        %v514 = vadd.f32 %v339, %v513
        %v515 = vpop.f32.mrb[0].mxu0
        %516 = vmatprep.mubr.bf16.mxu0 0
        %517 = vmatmul.mubr.bf16.gmra.mrb[0].mxu0 %v432
        %v518 = vpop.f32.mrb[0].mxu0
        %v519 = vadd.f32 %v339, %v518
        %v520 = vpop.f32.mrb[0].mxu0
        %v521 = vpop.f32.mrb[0].mxu0
        %v522 = vadd.f32 %v339, %v521
        %v523 = vpop.f32.mrb[0].mxu0
        %524 = vmatprep.mubr.bf16.mxu0 0
        %525 = vmatmul.mubr.bf16.gmra.mrb[0].mxu0 %v435
        %v526 = vpop.f32.mrb[0].mxu0
        %v527 = vadd.f32 %v339, %v526
        %v528 = vpop.f32.mrb[0].mxu0
        %v529 = vpop.f32.mrb[0].mxu0
        %v530 = vadd.f32 %v339, %v529
        %v531 = vpop.f32.mrb[0].mxu0
        %532 = vmatprep.mubr.bf16.mxu0 0
        %533 = vmatmul.mubr.bf16.gmra.mrb[0].mxu0 %v438
        %v534 = vpop.f32.mrb[0].mxu0
        %v535 = vadd.f32 %v339, %v534
        %v536 = vpop.f32.mrb[0].mxu0
        %v537 = vpop.f32.mrb[0].mxu0
        %v538 = vadd.f32 %v339, %v537
        %v539 = vpop.f32.mrb[0].mxu0
        %540 = vmatprep.mubr.bf16.mxu0 0
        %541 = vmatmul.mubr.bf16.gmra.mrb[0].mxu0 %v441
        %v542 = vpop.f32.mrb[0].mxu0
        %v543 = vadd.f32 %v339, %v542
        %v544 = vpop.f32.mrb[0].mxu0
        %v545 = vpop.f32.mrb[0].mxu0
        %v546 = vadd.f32 %v339, %v545
        %v547 = vpop.f32.mrb[0].mxu0
        %548 = vmatprep.mubr.bf16.mxu0 0
        %549 = vmatmul.mubr.bf16.gmra.mrb[0].mxu0 %v444
        %v550 = vpop.f32.mrb[0].mxu0
        %v551 = vadd.f32 %v339, %v550
        %v552 = vpop.f32.mrb[0].mxu0
        %v553 = vpop.f32.mrb[0].mxu0
        %v554 = vadd.f32 %v339, %v553
        %v555 = vpop.f32.mrb[0].mxu0
        %556 = vmatprep.mubr.bf16.mxu0 0
        %557 = vmatmul.mubr.bf16.gmra.mrb[0].mxu0 %v447
        %v558 = vpop.f32.mrb[0].mxu0
        %v559 = vadd.f32 %v339, %v558
        %v560 = vpop.f32.mrb[0].mxu0
        %v561 = vpop.f32.mrb[0].mxu0
        %v562 = vadd.f32 %v339, %v561
        %v563 = vpop.f32.mrb[0].mxu0
        %564 = vmatprep.mubr.bf16.mxu0 0
        %565 = vmatmul.mubr.bf16.gmra.mrb[0].mxu0 %v450
        %v566 = vpop.f32.mrb[0].mxu0
        %v567 = vadd.f32 %v339, %v566
        %v568 = vpop.f32.mrb[0].mxu0
        %v569 = vpop.f32.mrb[0].mxu0
        %v570 = vadd.f32 %v339, %v569
        %v571 = vpop.f32.mrb[0].mxu0
        %572 = vmatprep.mubr.bf16.mxu0 0
        %573 = vmatmul.mubr.bf16.gmra.mrb[0].mxu0 %v453
        %v574 = vpop.f32.mrb[0].mxu0
        %v575 = vadd.f32 %v339, %v574
        %v576 = vpop.f32.mrb[0].mxu0
        %v577 = vpop.f32.mrb[0].mxu0
        %v578 = vadd.f32 %v339, %v577
        %v579 = vpop.f32.mrb[0].mxu0
        %580 = vmatprep.mubr.bf16.mxu0 0
        %581 = vmatmul.mubr.bf16.gmra.mrb[0].mxu0 %v456
        %v582 = vpop.f32.mrb[0].mxu0
        %v583 = vadd.f32 %v339, %v582
        %v584 = vpop.f32.mrb[0].mxu0
        %v585 = vpop.f32.mrb[0].mxu0
        %v586 = vadd.f32 %v339, %v585
        %v587 = vpop.f32.mrb[0].mxu0
        %588 = vmatprep.mubr.bf16.mxu0 0
        %589 = vmatmul.mubr.bf16.gmra.mrb[0].mxu0 %v459
        %v590 = vpop.f32.mrb[0].mxu0
        %v591 = vadd.f32 %v339, %v590
        %v592 = vpop.f32.mrb[0].mxu0
        %v593 = vpop.f32.mrb[0].mxu0
        %v594 = vadd.f32 %v339, %v593
        %v595 = vpop.f32.mrb[0].mxu0
        %596 = vmatprep.mubr.bf16.mxu0 0
        %597 = vmatmul.mubr.bf16.gmra.mrb[0].mxu0 %v462
        %v598 = vpop.f32.mrb[0].mxu0
        %v599 = vadd.f32 %v339, %v598
        %v600 = vpop.f32.mrb[0].mxu0
        %v601 = vpop.f32.mrb[0].mxu0
        %v602 = vadd.f32 %v339, %v601
        %v603 = vpop.f32.mrb[0].mxu0
        %604 = vmatprep.mubr.bf16.mxu0 0
        %605 = vmatmul.mubr.bf16.gmra.mrb[0].mxu0 %v465
        %v606 = vpop.f32.mrb[0].mxu0
        %v607 = vadd.f32 %v339, %v606
        %v608 = vpop.f32.mrb[0].mxu0
        %v609 = vpop.f32.mrb[0].mxu0
        %v610 = vadd.f32 %v339, %v609
        %v611 = vpop.f32.mrb[0].mxu0
        %612 = vmatprep.mubr.bf16.mxu0 0
        %613 = vmatmul.mubr.bf16.gmra.mrb[0].mxu0 %v468
        %v614 = vpop.f32.mrb[0].mxu0
        %v615 = vadd.f32 %v339, %v614
        %v616 = vpop.f32.mrb[0].mxu0
        %v617 = vpop.f32.mrb[0].mxu0
        %v618 = vadd.f32 %v339, %v617
        %v619 = vpop.f32.mrb[0].mxu0
        %620 = vmatprep.mubr.bf16.mxu0 0
        %621 = vmatmul.mubr.bf16.gmra.mrb[0].mxu0 %v471
        %v622 = vpop.f32.mrb[0].mxu0
        %v623 = vadd.f32 %v339, %v622
        %v624 = vpop.f32.mrb[0].mxu0
        %v625 = vpop.f32.mrb[0].mxu0
        %v626 = vadd.f32 %v339, %v625
        %v627 = vpop.f32.mrb[0].mxu0
        %628 = vmatprep.mubr.bf16.mxu0 0
        %629 = vmatmul.mubr.bf16.gmra.mrb[0].mxu0 %v474
        %v630 = vpop.f32.mrb[0].mxu0
        %v631 = vadd.f32 %v339, %v630
        %v632 = vpop.f32.mrb[0].mxu0
        %v633 = vpop.f32.mrb[0].mxu0
        %v634 = vadd.f32 %v339, %v633
        %v635 = vpop.f32.mrb[0].mxu0
        %636 = vdwg.mxu0
        %v637 = vmax.f32 %v511, 0.0
        %v638 = vmax.f32 %v514, 0.0
        %v639 = vmax.f32 %v519, 0.0
        %v640 = vmax.f32 %v522, 0.0
        %v641 = vmax.f32 %v527, 0.0
        %v642 = vmax.f32 %v530, 0.0
        %v643 = vmax.f32 %v535, 0.0
        %v644 = vmax.f32 %v538, 0.0
        %v645 = vmax.f32 %v543, 0.0
        %v646 = vmax.f32 %v546, 0.0
        %v647 = vmax.f32 %v551, 0.0
        %v648 = vmax.f32 %v554, 0.0
        %v649 = vmax.f32 %v559, 0.0
        %v650 = vmax.f32 %v562, 0.0
        %v651 = vmax.f32 %v567, 0.0
        %v652 = vmax.f32 %v570, 0.0
        %v653 = vmax.f32 %v575, 0.0
        %v654 = vmax.f32 %v578, 0.0
        %v655 = vmax.f32 %v583, 0.0
        %v656 = vmax.f32 %v586, 0.0
        %v657 = vmax.f32 %v591, 0.0
        %v658 = vmax.f32 %v594, 0.0
        %v659 = vmax.f32 %v599, 0.0
        %v660 = vmax.f32 %v602, 0.0
        %v661 = vmax.f32 %v607, 0.0
        %v662 = vmax.f32 %v610, 0.0
        %v663 = vmax.f32 %v615, 0.0
        %v664 = vmax.f32 %v618, 0.0
        %v665 = vmax.f32 %v623, 0.0
        %v666 = vmax.f32 %v626, 0.0
        %v667 = vmax.f32 %v631, 0.0
        %v668 = vmax.f32 %v634, 0.0
        %v669 = vpack.c.bf16 %v638, %v637
        %v670 = vpack.c.bf16 %v640, %v639
        %v671 = vpack.c.bf16 %v642, %v641
        %v672 = vpack.c.bf16 %v644, %v643
        %v673 = vpack.c.bf16 %v646, %v645
        %v674 = vpack.c.bf16 %v648, %v647
        %v675 = vpack.c.bf16 %v650, %v649
        %v676 = vpack.c.bf16 %v652, %v651
        %v677 = vpack.c.bf16 %v654, %v653
        %v678 = vpack.c.bf16 %v656, %v655
        %v679 = vpack.c.bf16 %v658, %v657
        %v680 = vpack.c.bf16 %v660, %v659
        %v681 = vpack.c.bf16 %v662, %v661
        %v682 = vpack.c.bf16 %v664, %v663
        %v683 = vpack.c.bf16 %v666, %v665
        %v684 = vpack.c.bf16 %v668, %v667
        %vm685 = vsmask.f32 256
        %v687 = vshrl.u32 0, 16
        %v689 = vrot.slane %v687, 7
        %v690 = vshll.u32 0, 16
        %v692 = vor.u32 %v689, %v690
        %v694 = vshrl.u32 %v669, 16
        %v696 = vrot.slane %v694, 7
        %v697 = vshll.u32 %v669, 16
        %v699 = vor.u32 %v696, %v697
        %v700 = vsel %vm685, %v689, %v699
        %v702 = vshrl.u32 %v670, 16
        %v704 = vrot.slane %v702, 7
        %v705 = vshll.u32 %v670, 16
        %v707 = vor.u32 %v704, %v705
        %v708 = vsel %vm685, %v696, %v707
        %v710 = vshrl.u32 %v671, 16
        %v712 = vrot.slane %v710, 7
        %v713 = vshll.u32 %v671, 16
        %v715 = vor.u32 %v712, %v713
        %v716 = vsel %vm685, %v704, %v715
        %v718 = vshrl.u32 %v672, 16
        %v720 = vrot.slane %v718, 7
        %v721 = vshll.u32 %v672, 16
        %v723 = vor.u32 %v720, %v721
        %v724 = vsel %vm685, %v712, %v723
        %v726 = vshrl.u32 %v673, 16
        %v728 = vrot.slane %v726, 7
        %v729 = vshll.u32 %v673, 16
        %v731 = vor.u32 %v728, %v729
        %v732 = vsel %vm685, %v720, %v731
        %v734 = vshrl.u32 %v674, 16
        %v736 = vrot.slane %v734, 7
        %v737 = vshll.u32 %v674, 16
        %v739 = vor.u32 %v736, %v737
        %v740 = vsel %vm685, %v728, %v739
        %v742 = vshrl.u32 %v675, 16
        %v744 = vrot.slane %v742, 7
        %v745 = vshll.u32 %v675, 16
        %v747 = vor.u32 %v744, %v745
        %v748 = vsel %vm685, %v736, %v747
        %v750 = vshrl.u32 %v676, 16
        %v752 = vrot.slane %v750, 7
        %v753 = vshll.u32 %v676, 16
        %v755 = vor.u32 %v752, %v753
        %v756 = vsel %vm685, %v744, %v755
        %v758 = vshrl.u32 %v677, 16
        %v760 = vrot.slane %v758, 7
        %v761 = vshll.u32 %v677, 16
        %v763 = vor.u32 %v760, %v761
        %v764 = vsel %vm685, %v752, %v763
        %v766 = vshrl.u32 %v678, 16
        %v768 = vrot.slane %v766, 7
        %v769 = vshll.u32 %v678, 16
        %v771 = vor.u32 %v768, %v769
        %v772 = vsel %vm685, %v760, %v771
        %v774 = vshrl.u32 %v679, 16
        %v776 = vrot.slane %v774, 7
        %v777 = vshll.u32 %v679, 16
        %v779 = vor.u32 %v776, %v777
        %v780 = vsel %vm685, %v768, %v779
        %v782 = vshrl.u32 %v680, 16
        %v784 = vrot.slane %v782, 7
        %v785 = vshll.u32 %v680, 16
        %v787 = vor.u32 %v784, %v785
        %v788 = vsel %vm685, %v776, %v787
        %v790 = vshrl.u32 %v681, 16
        %v792 = vrot.slane %v790, 7
        %v793 = vshll.u32 %v681, 16
        %v795 = vor.u32 %v792, %v793
        %v796 = vsel %vm685, %v784, %v795
        %v798 = vshrl.u32 %v682, 16
        %v800 = vrot.slane %v798, 7
        %v801 = vshll.u32 %v682, 16
        %v803 = vor.u32 %v800, %v801
        %v804 = vsel %vm685, %v792, %v803
        %v806 = vshrl.u32 %v683, 16
        %v808 = vrot.slane %v806, 7
        %v809 = vshll.u32 %v683, 16
        %v811 = vor.u32 %v808, %v809
        %v812 = vsel %vm685, %v800, %v811
        %v814 = vshrl.u32 %v684, 16
        %v816 = vrot.slane %v814, 7
        %v817 = vshll.u32 %v684, 16
        %v819 = vor.u32 %v816, %v817
        %v820 = vsel %vm685, %v808, %v819
        %v821 = vsel %vm685, %v816, %v692
        %vm840 = vcmask 1040384
        %vm841 = vmand %vm840, %vm685
        %v842 = vsel %vm841, 0, %v692
        %vm843 = vsmask.f32 7424
        %v844 = vrot.slane %v690, 1
        %v845 = vor.u32 %v687, %v844
        %v846 = vrot.slane %v697, 1
        %v847 = vsel %vm843, %v845, %v846
        %v848 = vor.u32 %v694, %v846
        %v849 = vrot.slane %v705, 1
        %v850 = vsel %vm843, %v848, %v849
        %v851 = vor.u32 %v702, %v849
        %v852 = vrot.slane %v713, 1
        %v853 = vsel %vm843, %v851, %v852
        %v854 = vor.u32 %v710, %v852
        %v855 = vrot.slane %v721, 1
        %v856 = vsel %vm843, %v854, %v855
        %v857 = vor.u32 %v718, %v855
        %v858 = vrot.slane %v729, 1
        %v859 = vsel %vm843, %v857, %v858
        %v860 = vor.u32 %v726, %v858
        %v861 = vrot.slane %v737, 1
        %v862 = vsel %vm843, %v860, %v861
        %v863 = vor.u32 %v734, %v861
        %v864 = vrot.slane %v745, 1
        %v865 = vsel %vm843, %v863, %v864
        %v866 = vor.u32 %v742, %v864
        %v867 = vrot.slane %v753, 1
        %v868 = vsel %vm843, %v866, %v867
        %v869 = vor.u32 %v750, %v867
        %v870 = vrot.slane %v761, 1
        %v871 = vsel %vm843, %v869, %v870
        %v872 = vor.u32 %v758, %v870
        %v873 = vrot.slane %v769, 1
        %v874 = vsel %vm843, %v872, %v873
        %v875 = vor.u32 %v766, %v873
        %v876 = vrot.slane %v777, 1
        %v877 = vsel %vm843, %v875, %v876
        %v878 = vor.u32 %v774, %v876
        %v879 = vrot.slane %v785, 1
        %v880 = vsel %vm843, %v878, %v879
        %v881 = vor.u32 %v782, %v879
        %v882 = vrot.slane %v793, 1
        %v883 = vsel %vm843, %v881, %v882
        %v884 = vor.u32 %v790, %v882
        %v885 = vrot.slane %v801, 1
        %v886 = vsel %vm843, %v884, %v885
        %v887 = vor.u32 %v798, %v885
        %v888 = vrot.slane %v809, 1
        %v889 = vsel %vm843, %v887, %v888
        %v890 = vor.u32 %v806, %v888
        %v891 = vrot.slane %v817, 1
        %v892 = vsel %vm843, %v890, %v891
        %v893 = vor.u32 %v814, %v891
        %v894 = vsel %vm843, %v893, %v844
        %vm913 = vcmask 1047552
        %vm914 = vmand %vm913, %vm843
        %v915 = vsel %vm914, %v845, 0
        %v916 = vlaneseq
        %v917 = vshrl.u32 %v916, 7
        %v918 = vadd.s32 %v917, 8
        %v919 = vadd.s32 %v917, 16
        %v920 = vadd.s32 %v917, 24
        %v921 = vadd.s32 %v917, 32
        %v922 = vadd.s32 %v917, 40
        %v923 = vadd.s32 %v917, 48
        %v924 = vadd.s32 %v917, 56
        %v925 = vadd.s32 %v917, 64
        %v926 = vadd.s32 %v917, 72
        %v927 = vadd.s32 %v917, 80
        %v928 = vadd.s32 %v917, 88
        %v929 = vadd.s32 %v917, 96
        %v930 = vadd.s32 %v917, 104
        %v931 = vadd.s32 %v917, 112
        %v932 = vadd.s32 %v917, 120
        %v933 = vadd.s32 %v917, 128
        %v934 = vadd.s32 %v917, 136
        %v935 = vadd.s32 %v917, 144
        %v936 = vadd.s32 %v917, 152
        %v937 = vadd.s32 %v917, 160
        %v938 = vadd.s32 %v917, 168
        %v939 = vadd.s32 %v917, 176
        %v940 = vadd.s32 %v917, 184
        %v941 = vadd.s32 %v917, 192
        %v942 = vadd.s32 %v917, 200
        %v943 = vadd.s32 %v917, 208
        %v944 = vadd.s32 %v917, 216
        %v945 = vadd.s32 %v917, 224
        %v946 = vadd.s32 %v917, 232
        %v947 = vadd.s32 %v917, 240
        %v948 = vadd.s32 %v917, 248
        %v949 = vadd.s32 %v917, 256
        %v950 = vadd.s32 %v917, 264
        %v951 = vadd.s32 %v917, 272
        %v952 = vadd.s32 %v917, 280
        %vm953 = vcmp.lt.s32.totalorder %v917, 0
        %v954 = vsub.s32 0, %v917
        %v955 = vsel %vm953, %v954, %v917
        %v956 = vshrl.u32 %v955, 4
        %v957 = vand.u32 %v955, 15
        %v958 = vsub.s32 0, %v957
        %v959 = vsel %vm953, %v958, %v957
        %vm960 = vcmp.lt.s32.totalorder %v918, 0
        %v961 = vsub.s32 0, %v918
        %v962 = vsel %vm960, %v961, %v918
        %v963 = vshrl.u32 %v962, 4
        %v964 = vand.u32 %v962, 15
        %v965 = vsub.s32 0, %v964
        %v966 = vsel %vm960, %v965, %v964
        %vm967 = vcmp.lt.s32.totalorder %v919, 0
        %v968 = vsub.s32 0, %v919
        %v969 = vsel %vm967, %v968, %v919
        %v970 = vshrl.u32 %v969, 4
        %v971 = vand.u32 %v969, 15
        %v972 = vsub.s32 0, %v971
        %v973 = vsel %vm967, %v972, %v971
        %vm974 = vcmp.lt.s32.totalorder %v920, 0
        %v975 = vsub.s32 0, %v920
        %v976 = vsel %vm974, %v975, %v920
        %v977 = vshrl.u32 %v976, 4
        %v978 = vand.u32 %v976, 15
        %v979 = vsub.s32 0, %v978
        %v980 = vsel %vm974, %v979, %v978
        %vm981 = vcmp.lt.s32.totalorder %v921, 0
        %v982 = vsub.s32 0, %v921
        %v983 = vsel %vm981, %v982, %v921
        %v984 = vshrl.u32 %v983, 4
        %v985 = vand.u32 %v983, 15
        %v986 = vsub.s32 0, %v985
        %v987 = vsel %vm981, %v986, %v985
        %vm988 = vcmp.lt.s32.totalorder %v922, 0
        %v989 = vsub.s32 0, %v922
        %v990 = vsel %vm988, %v989, %v922
        %v991 = vshrl.u32 %v990, 4
        %v992 = vand.u32 %v990, 15
        %v993 = vsub.s32 0, %v992
        %v994 = vsel %vm988, %v993, %v992
        %vm995 = vcmp.lt.s32.totalorder %v923, 0
        %v996 = vsub.s32 0, %v923
        %v997 = vsel %vm995, %v996, %v923
        %v998 = vshrl.u32 %v997, 4
        %v999 = vand.u32 %v997, 15
        %v1000 = vsub.s32 0, %v999
        %v1001 = vsel %vm995, %v1000, %v999
        %vm1002 = vcmp.lt.s32.totalorder %v924, 0
        %v1003 = vsub.s32 0, %v924
        %v1004 = vsel %vm1002, %v1003, %v924
        %v1005 = vshrl.u32 %v1004, 4
        %v1006 = vand.u32 %v1004, 15
        %v1007 = vsub.s32 0, %v1006
        %v1008 = vsel %vm1002, %v1007, %v1006
        %vm1009 = vcmp.lt.s32.totalorder %v925, 0
        %v1010 = vsub.s32 0, %v925
        %v1011 = vsel %vm1009, %v1010, %v925
        %v1012 = vshrl.u32 %v1011, 4
        %v1013 = vand.u32 %v1011, 15
        %v1014 = vsub.s32 0, %v1013
        %v1015 = vsel %vm1009, %v1014, %v1013
        %vm1016 = vcmp.lt.s32.totalorder %v926, 0
        %v1017 = vsub.s32 0, %v926
        %v1018 = vsel %vm1016, %v1017, %v926
        %v1019 = vshrl.u32 %v1018, 4
        %v1020 = vand.u32 %v1018, 15
        %v1021 = vsub.s32 0, %v1020
        %v1022 = vsel %vm1016, %v1021, %v1020
        %vm1023 = vcmp.lt.s32.totalorder %v927, 0
        %v1024 = vsub.s32 0, %v927
        %v1025 = vsel %vm1023, %v1024, %v927
        %v1026 = vshrl.u32 %v1025, 4
        %v1027 = vand.u32 %v1025, 15
        %v1028 = vsub.s32 0, %v1027
        %v1029 = vsel %vm1023, %v1028, %v1027
        %vm1030 = vcmp.lt.s32.totalorder %v928, 0
        %v1031 = vsub.s32 0, %v928
        %v1032 = vsel %vm1030, %v1031, %v928
        %v1033 = vshrl.u32 %v1032, 4
        %v1034 = vand.u32 %v1032, 15
        %v1035 = vsub.s32 0, %v1034
        %v1036 = vsel %vm1030, %v1035, %v1034
        %vm1037 = vcmp.lt.s32.totalorder %v929, 0
        %v1038 = vsub.s32 0, %v929
        %v1039 = vsel %vm1037, %v1038, %v929
        %v1040 = vshrl.u32 %v1039, 4
        %v1041 = vand.u32 %v1039, 15
        %v1042 = vsub.s32 0, %v1041
        %v1043 = vsel %vm1037, %v1042, %v1041
        %vm1044 = vcmp.lt.s32.totalorder %v930, 0
        %v1045 = vsub.s32 0, %v930
        %v1046 = vsel %vm1044, %v1045, %v930
        %v1047 = vshrl.u32 %v1046, 4
        %v1048 = vand.u32 %v1046, 15
        %v1049 = vsub.s32 0, %v1048
        %v1050 = vsel %vm1044, %v1049, %v1048
        %vm1051 = vcmp.lt.s32.totalorder %v931, 0
        %v1052 = vsub.s32 0, %v931
        %v1053 = vsel %vm1051, %v1052, %v931
        %v1054 = vshrl.u32 %v1053, 4
        %v1055 = vand.u32 %v1053, 15
        %v1056 = vsub.s32 0, %v1055
        %v1057 = vsel %vm1051, %v1056, %v1055
        %vm1058 = vcmp.lt.s32.totalorder %v932, 0
        %v1059 = vsub.s32 0, %v932
        %v1060 = vsel %vm1058, %v1059, %v932
        %v1061 = vshrl.u32 %v1060, 4
        %v1062 = vand.u32 %v1060, 15
        %v1063 = vsub.s32 0, %v1062
        %v1064 = vsel %vm1058, %v1063, %v1062
        %vm1065 = vcmp.lt.s32.totalorder %v933, 0
        %v1066 = vsub.s32 0, %v933
        %v1067 = vsel %vm1065, %v1066, %v933
        %v1068 = vshrl.u32 %v1067, 4
        %v1069 = vand.u32 %v1067, 15
        %v1070 = vsub.s32 0, %v1069
        %v1071 = vsel %vm1065, %v1070, %v1069
        %vm1072 = vcmp.lt.s32.totalorder %v934, 0
        %v1073 = vsub.s32 0, %v934
        %v1074 = vsel %vm1072, %v1073, %v934
        %v1075 = vshrl.u32 %v1074, 4
        %v1076 = vand.u32 %v1074, 15
        %v1077 = vsub.s32 0, %v1076
        %v1078 = vsel %vm1072, %v1077, %v1076
        %vm1079 = vcmp.lt.s32.totalorder %v935, 0
        %v1080 = vsub.s32 0, %v935
        %v1081 = vsel %vm1079, %v1080, %v935
        %v1082 = vshrl.u32 %v1081, 4
        %v1083 = vand.u32 %v1081, 15
        %v1084 = vsub.s32 0, %v1083
        %v1085 = vsel %vm1079, %v1084, %v1083
        %vm1086 = vcmp.lt.s32.totalorder %v936, 0
        %v1087 = vsub.s32 0, %v936
        %v1088 = vsel %vm1086, %v1087, %v936
        %v1089 = vshrl.u32 %v1088, 4
        %v1090 = vand.u32 %v1088, 15
        %v1091 = vsub.s32 0, %v1090
        %v1092 = vsel %vm1086, %v1091, %v1090
        %vm1093 = vcmp.lt.s32.totalorder %v937, 0
        %v1094 = vsub.s32 0, %v937
        %v1095 = vsel %vm1093, %v1094, %v937
        %v1096 = vshrl.u32 %v1095, 4
        %v1097 = vand.u32 %v1095, 15
        %v1098 = vsub.s32 0, %v1097
        %v1099 = vsel %vm1093, %v1098, %v1097
        %vm1100 = vcmp.lt.s32.totalorder %v938, 0
        %v1101 = vsub.s32 0, %v938
        %v1102 = vsel %vm1100, %v1101, %v938
        %v1103 = vshrl.u32 %v1102, 4
        %v1104 = vand.u32 %v1102, 15
        %v1105 = vsub.s32 0, %v1104
        %v1106 = vsel %vm1100, %v1105, %v1104
        %vm1107 = vcmp.lt.s32.totalorder %v939, 0
        %v1108 = vsub.s32 0, %v939
        %v1109 = vsel %vm1107, %v1108, %v939
        %v1110 = vshrl.u32 %v1109, 4
        %v1111 = vand.u32 %v1109, 15
        %v1112 = vsub.s32 0, %v1111
        %v1113 = vsel %vm1107, %v1112, %v1111
        %vm1114 = vcmp.lt.s32.totalorder %v940, 0
        %v1115 = vsub.s32 0, %v940
        %v1116 = vsel %vm1114, %v1115, %v940
        %v1117 = vshrl.u32 %v1116, 4
        %v1118 = vand.u32 %v1116, 15
        %v1119 = vsub.s32 0, %v1118
        %v1120 = vsel %vm1114, %v1119, %v1118
        %vm1121 = vcmp.lt.s32.totalorder %v941, 0
        %v1122 = vsub.s32 0, %v941
        %v1123 = vsel %vm1121, %v1122, %v941
        %v1124 = vshrl.u32 %v1123, 4
        %v1125 = vand.u32 %v1123, 15
        %v1126 = vsub.s32 0, %v1125
        %v1127 = vsel %vm1121, %v1126, %v1125
        %vm1128 = vcmp.lt.s32.totalorder %v942, 0
        %v1129 = vsub.s32 0, %v942
        %v1130 = vsel %vm1128, %v1129, %v942
        %v1131 = vshrl.u32 %v1130, 4
        %v1132 = vand.u32 %v1130, 15
        %v1133 = vsub.s32 0, %v1132
        %v1134 = vsel %vm1128, %v1133, %v1132
        %vm1135 = vcmp.lt.s32.totalorder %v943, 0
        %v1136 = vsub.s32 0, %v943
        %v1137 = vsel %vm1135, %v1136, %v943
        %v1138 = vshrl.u32 %v1137, 4
        %v1139 = vand.u32 %v1137, 15
        %v1140 = vsub.s32 0, %v1139
        %v1141 = vsel %vm1135, %v1140, %v1139
        %vm1142 = vcmp.lt.s32.totalorder %v944, 0
        %v1143 = vsub.s32 0, %v944
        %v1144 = vsel %vm1142, %v1143, %v944
        %v1145 = vshrl.u32 %v1144, 4
        %v1146 = vand.u32 %v1144, 15
        %v1147 = vsub.s32 0, %v1146
        %v1148 = vsel %vm1142, %v1147, %v1146
        %vm1149 = vcmp.lt.s32.totalorder %v945, 0
        %v1150 = vsub.s32 0, %v945
        %v1151 = vsel %vm1149, %v1150, %v945
        %v1152 = vshrl.u32 %v1151, 4
        %v1153 = vand.u32 %v1151, 15
        %v1154 = vsub.s32 0, %v1153
        %v1155 = vsel %vm1149, %v1154, %v1153
        %vm1156 = vcmp.lt.s32.totalorder %v946, 0
        %v1157 = vsub.s32 0, %v946
        %v1158 = vsel %vm1156, %v1157, %v946
        %v1159 = vshrl.u32 %v1158, 4
        %v1160 = vand.u32 %v1158, 15
        %v1161 = vsub.s32 0, %v1160
        %v1162 = vsel %vm1156, %v1161, %v1160
        %vm1163 = vcmp.lt.s32.totalorder %v947, 0
        %v1164 = vsub.s32 0, %v947
        %v1165 = vsel %vm1163, %v1164, %v947
        %v1166 = vshrl.u32 %v1165, 4
        %v1167 = vand.u32 %v1165, 15
        %v1168 = vsub.s32 0, %v1167
        %v1169 = vsel %vm1163, %v1168, %v1167
        %vm1170 = vcmp.lt.s32.totalorder %v948, 0
        %v1171 = vsub.s32 0, %v948
        %v1172 = vsel %vm1170, %v1171, %v948
        %v1173 = vshrl.u32 %v1172, 4
        %v1174 = vand.u32 %v1172, 15
        %v1175 = vsub.s32 0, %v1174
        %v1176 = vsel %vm1170, %v1175, %v1174
        %vm1177 = vcmp.lt.s32.totalorder %v949, 0
        %v1178 = vsub.s32 0, %v949
        %v1179 = vsel %vm1177, %v1178, %v949
        %v1180 = vshrl.u32 %v1179, 4
        %v1181 = vand.u32 %v1179, 15
        %v1182 = vsub.s32 0, %v1181
        %v1183 = vsel %vm1177, %v1182, %v1181
        %vm1184 = vcmp.lt.s32.totalorder %v950, 0
        %v1185 = vsub.s32 0, %v950
        %v1186 = vsel %vm1184, %v1185, %v950
        %v1187 = vshrl.u32 %v1186, 4
        %v1188 = vand.u32 %v1186, 15
        %v1189 = vsub.s32 0, %v1188
        %v1190 = vsel %vm1184, %v1189, %v1188
        %vm1191 = vcmp.lt.s32.totalorder %v951, 0
        %v1192 = vsub.s32 0, %v951
        %v1193 = vsel %vm1191, %v1192, %v951
        %v1194 = vshrl.u32 %v1193, 4
        %v1195 = vand.u32 %v1193, 15
        %v1196 = vsub.s32 0, %v1195
        %v1197 = vsel %vm1191, %v1196, %v1195
        %vm1198 = vcmp.lt.s32.totalorder %v952, 0
        %v1199 = vsub.s32 0, %v952
        %v1200 = vsel %vm1198, %v1199, %v952
        %v1201 = vshrl.u32 %v1200, 4
        %v1202 = vand.u32 %v1200, 15
        %v1203 = vsub.s32 0, %v1202
        %v1204 = vsel %vm1198, %v1203, %v1202
        %vm1205 = vcmp.ne.s32.totalorder %v959, 0
        %vm1206 = vcmp.ne.s32.totalorder %v966, 0
        %vm1207 = vcmp.ne.s32.totalorder %v973, 0
        %vm1208 = vcmp.ne.s32.totalorder %v980, 0
        %vm1209 = vcmp.ne.s32.totalorder %v987, 0
        %vm1210 = vcmp.ne.s32.totalorder %v994, 0
        %vm1211 = vcmp.ne.s32.totalorder %v1001, 0
        %vm1212 = vcmp.ne.s32.totalorder %v1008, 0
        %vm1213 = vcmp.ne.s32.totalorder %v1015, 0
        %vm1214 = vcmp.ne.s32.totalorder %v1022, 0
        %vm1215 = vcmp.ne.s32.totalorder %v1029, 0
        %vm1216 = vcmp.ne.s32.totalorder %v1036, 0
        %vm1217 = vcmp.ne.s32.totalorder %v1043, 0
        %vm1218 = vcmp.ne.s32.totalorder %v1050, 0
        %vm1219 = vcmp.ne.s32.totalorder %v1057, 0
        %vm1220 = vcmp.ne.s32.totalorder %v1064, 0
        %vm1221 = vcmp.ne.s32.totalorder %v1071, 0
        %vm1222 = vcmp.ne.s32.totalorder %v1078, 0
        %vm1223 = vcmp.ne.s32.totalorder %v1085, 0
        %vm1224 = vcmp.ne.s32.totalorder %v1092, 0
        %vm1225 = vcmp.ne.s32.totalorder %v1099, 0
        %vm1226 = vcmp.ne.s32.totalorder %v1106, 0
        %vm1227 = vcmp.ne.s32.totalorder %v1113, 0
        %vm1228 = vcmp.ne.s32.totalorder %v1120, 0
        %vm1229 = vcmp.ne.s32.totalorder %v1127, 0
        %vm1230 = vcmp.ne.s32.totalorder %v1134, 0
        %vm1231 = vcmp.ne.s32.totalorder %v1141, 0
        %vm1232 = vcmp.ne.s32.totalorder %v1148, 0
        %vm1233 = vcmp.ne.s32.totalorder %v1155, 0
        %vm1234 = vcmp.ne.s32.totalorder %v1162, 0
        %vm1235 = vcmp.ne.s32.totalorder %v1169, 0
        %vm1236 = vcmp.ne.s32.totalorder %v1176, 0
        %vm1237 = vcmp.ne.s32.totalorder %v1183, 0
        %vm1238 = vcmp.ne.s32.totalorder %v1190, 0
        %vm1239 = vcmp.ne.s32.totalorder %v1197, 0
        %vm1240 = vcmp.ne.s32.totalorder %v1204, 0
        %vm1241 = vcmp.lt.s32.totalorder %v959, 0
        %vm1242 = vcmp.lt.s32.totalorder %v966, 0
        %vm1243 = vcmp.lt.s32.totalorder %v973, 0
        %vm1244 = vcmp.lt.s32.totalorder %v980, 0
        %vm1245 = vcmp.lt.s32.totalorder %v987, 0
        %vm1246 = vcmp.lt.s32.totalorder %v994, 0
        %vm1247 = vcmp.lt.s32.totalorder %v1001, 0
        %vm1248 = vcmp.lt.s32.totalorder %v1008, 0
        %vm1249 = vcmp.lt.s32.totalorder %v1015, 0
        %vm1250 = vcmp.lt.s32.totalorder %v1022, 0
        %vm1251 = vcmp.lt.s32.totalorder %v1029, 0
        %vm1252 = vcmp.lt.s32.totalorder %v1036, 0
        %vm1253 = vcmp.lt.s32.totalorder %v1043, 0
        %vm1254 = vcmp.lt.s32.totalorder %v1050, 0
        %vm1255 = vcmp.lt.s32.totalorder %v1057, 0
        %vm1256 = vcmp.lt.s32.totalorder %v1064, 0
        %vm1257 = vcmp.lt.s32.totalorder %v1071, 0
        %vm1258 = vcmp.lt.s32.totalorder %v1078, 0
        %vm1259 = vcmp.lt.s32.totalorder %v1085, 0
        %vm1260 = vcmp.lt.s32.totalorder %v1092, 0
        %vm1261 = vcmp.lt.s32.totalorder %v1099, 0
        %vm1262 = vcmp.lt.s32.totalorder %v1106, 0
        %vm1263 = vcmp.lt.s32.totalorder %v1113, 0
        %vm1264 = vcmp.lt.s32.totalorder %v1120, 0
        %vm1265 = vcmp.lt.s32.totalorder %v1127, 0
        %vm1266 = vcmp.lt.s32.totalorder %v1134, 0
        %vm1267 = vcmp.lt.s32.totalorder %v1141, 0
        %vm1268 = vcmp.lt.s32.totalorder %v1148, 0
        %vm1269 = vcmp.lt.s32.totalorder %v1155, 0
        %vm1270 = vcmp.lt.s32.totalorder %v1162, 0
        %vm1271 = vcmp.lt.s32.totalorder %v1169, 0
        %vm1272 = vcmp.lt.s32.totalorder %v1176, 0
        %vm1273 = vcmp.lt.s32.totalorder %v1183, 0
        %vm1274 = vcmp.lt.s32.totalorder %v1190, 0
        %vm1275 = vcmp.lt.s32.totalorder %v1197, 0
        %vm1276 = vcmp.lt.s32.totalorder %v1204, 0
        %vm1277 = vmand %vm1241, %vm1205
        %vm1278 = vmand %vm1242, %vm1206
        %vm1279 = vmand %vm1243, %vm1207
        %vm1280 = vmand %vm1244, %vm1208
        %vm1281 = vmand %vm1245, %vm1209
        %vm1282 = vmand %vm1246, %vm1210
        %vm1283 = vmand %vm1247, %vm1211
        %vm1284 = vmand %vm1248, %vm1212
        %vm1285 = vmand %vm1249, %vm1213
        %vm1286 = vmand %vm1250, %vm1214
        %vm1287 = vmand %vm1251, %vm1215
        %vm1288 = vmand %vm1252, %vm1216
        %vm1289 = vmand %vm1253, %vm1217
        %vm1290 = vmand %vm1254, %vm1218
        %vm1291 = vmand %vm1255, %vm1219
        %vm1292 = vmand %vm1256, %vm1220
        %vm1293 = vmand %vm1257, %vm1221
        %vm1294 = vmand %vm1258, %vm1222
        %vm1295 = vmand %vm1259, %vm1223
        %vm1296 = vmand %vm1260, %vm1224
        %vm1297 = vmand %vm1261, %vm1225
        %vm1298 = vmand %vm1262, %vm1226
        %vm1299 = vmand %vm1263, %vm1227
        %vm1300 = vmand %vm1264, %vm1228
        %vm1301 = vmand %vm1265, %vm1229
        %vm1302 = vmand %vm1266, %vm1230
        %vm1303 = vmand %vm1267, %vm1231
        %vm1304 = vmand %vm1268, %vm1232
        %vm1305 = vmand %vm1269, %vm1233
        %vm1306 = vmand %vm1270, %vm1234
        %vm1307 = vmand %vm1271, %vm1235
        %vm1308 = vmand %vm1272, %vm1236
        %vm1309 = vmand %vm1273, %vm1237
        %vm1310 = vmand %vm1274, %vm1238
        %vm1311 = vmand %vm1275, %vm1239
        %vm1312 = vmand %vm1276, %vm1240
        %v1313 = vadd.s32 %v959, 16
        %v1314 = vadd.s32 %v966, 16
        %v1315 = vadd.s32 %v973, 16
        %v1316 = vadd.s32 %v980, 16
        %v1317 = vadd.s32 %v987, 16
        %v1318 = vadd.s32 %v994, 16
        %v1319 = vadd.s32 %v1001, 16
        %v1320 = vadd.s32 %v1008, 16
        %v1321 = vadd.s32 %v1015, 16
        %v1322 = vadd.s32 %v1022, 16
        %v1323 = vadd.s32 %v1029, 16
        %v1324 = vadd.s32 %v1036, 16
        %v1325 = vadd.s32 %v1043, 16
        %v1326 = vadd.s32 %v1050, 16
        %v1327 = vadd.s32 %v1057, 16
        %v1328 = vadd.s32 %v1064, 16
        %v1329 = vadd.s32 %v1071, 16
        %v1330 = vadd.s32 %v1078, 16
        %v1331 = vadd.s32 %v1085, 16
        %v1332 = vadd.s32 %v1092, 16
        %v1333 = vadd.s32 %v1099, 16
        %v1334 = vadd.s32 %v1106, 16
        %v1335 = vadd.s32 %v1113, 16
        %v1336 = vadd.s32 %v1120, 16
        %v1337 = vadd.s32 %v1127, 16
        %v1338 = vadd.s32 %v1134, 16
        %v1339 = vadd.s32 %v1141, 16
        %v1340 = vadd.s32 %v1148, 16
        %v1341 = vadd.s32 %v1155, 16
        %v1342 = vadd.s32 %v1162, 16
        %v1343 = vadd.s32 %v1169, 16
        %v1344 = vadd.s32 %v1176, 16
        %v1345 = vadd.s32 %v1183, 16
        %v1346 = vadd.s32 %v1190, 16
        %v1347 = vadd.s32 %v1197, 16
        %v1348 = vadd.s32 %v1204, 16
        %v1349 = vsel %vm1277, %v1313, %v959
        %v1350 = vsel %vm1278, %v1314, %v966
        %v1351 = vsel %vm1279, %v1315, %v973
        %v1352 = vsel %vm1280, %v1316, %v980
        %v1353 = vsel %vm1281, %v1317, %v987
        %v1354 = vsel %vm1282, %v1318, %v994
        %v1355 = vsel %vm1283, %v1319, %v1001
        %v1356 = vsel %vm1284, %v1320, %v1008
        %v1357 = vsel %vm1285, %v1321, %v1015
        %v1358 = vsel %vm1286, %v1322, %v1022
        %v1359 = vsel %vm1287, %v1323, %v1029
        %v1360 = vsel %vm1288, %v1324, %v1036
        %v1361 = vsel %vm1289, %v1325, %v1043
        %v1362 = vsel %vm1290, %v1326, %v1050
        %v1363 = vsel %vm1291, %v1327, %v1057
        %v1364 = vsel %vm1292, %v1328, %v1064
        %v1365 = vsel %vm1293, %v1329, %v1071
        %v1366 = vsel %vm1294, %v1330, %v1078
        %v1367 = vsel %vm1295, %v1331, %v1085
        %v1368 = vsel %vm1296, %v1332, %v1092
        %v1369 = vsel %vm1297, %v1333, %v1099
        %v1370 = vsel %vm1298, %v1334, %v1106
        %v1371 = vsel %vm1299, %v1335, %v1113
        %v1372 = vsel %vm1300, %v1336, %v1120
        %v1373 = vsel %vm1301, %v1337, %v1127
        %v1374 = vsel %vm1302, %v1338, %v1134
        %v1375 = vsel %vm1303, %v1339, %v1141
        %v1376 = vsel %vm1304, %v1340, %v1148
        %v1377 = vsel %vm1305, %v1341, %v1155
        %v1378 = vsel %vm1306, %v1342, %v1162
        %v1379 = vsel %vm1307, %v1343, %v1169
        %v1380 = vsel %vm1308, %v1344, %v1176
        %v1381 = vsel %vm1309, %v1345, %v1183
        %v1382 = vsel %vm1310, %v1346, %v1190
        %v1383 = vsel %vm1311, %v1347, %v1197
        %v1384 = vsel %vm1312, %v1348, %v1204
        %vm1385 = vcmp.gt.s32.totalorder %v1349, 0
        %vm1386 = vcmp.gt.s32.totalorder %v1350, 0
        %vm1387 = vcmp.gt.s32.totalorder %v1351, 0
        %vm1388 = vcmp.gt.s32.totalorder %v1352, 0
        %vm1389 = vcmp.gt.s32.totalorder %v1353, 0
        %vm1390 = vcmp.gt.s32.totalorder %v1354, 0
        %vm1391 = vcmp.gt.s32.totalorder %v1355, 0
        %vm1392 = vcmp.gt.s32.totalorder %v1356, 0
        %vm1393 = vcmp.gt.s32.totalorder %v1357, 0
        %vm1394 = vcmp.gt.s32.totalorder %v1358, 0
        %vm1395 = vcmp.gt.s32.totalorder %v1359, 0
        %vm1396 = vcmp.gt.s32.totalorder %v1360, 0
        %vm1397 = vcmp.gt.s32.totalorder %v1361, 0
        %vm1398 = vcmp.gt.s32.totalorder %v1362, 0
        %vm1399 = vcmp.gt.s32.totalorder %v1363, 0
        %vm1400 = vcmp.gt.s32.totalorder %v1364, 0
        %vm1401 = vcmp.gt.s32.totalorder %v1365, 0
        %vm1402 = vcmp.gt.s32.totalorder %v1366, 0
        %vm1403 = vcmp.gt.s32.totalorder %v1367, 0
        %vm1404 = vcmp.gt.s32.totalorder %v1368, 0
        %vm1405 = vcmp.gt.s32.totalorder %v1369, 0
        %vm1406 = vcmp.gt.s32.totalorder %v1370, 0
        %vm1407 = vcmp.gt.s32.totalorder %v1371, 0
        %vm1408 = vcmp.gt.s32.totalorder %v1372, 0
        %vm1409 = vcmp.gt.s32.totalorder %v1373, 0
        %vm1410 = vcmp.gt.s32.totalorder %v1374, 0
        %vm1411 = vcmp.gt.s32.totalorder %v1375, 0
        %vm1412 = vcmp.gt.s32.totalorder %v1376, 0
        %vm1413 = vcmp.gt.s32.totalorder %v1377, 0
        %vm1414 = vcmp.gt.s32.totalorder %v1378, 0
        %vm1415 = vcmp.gt.s32.totalorder %v1379, 0
        %vm1416 = vcmp.gt.s32.totalorder %v1380, 0
        %vm1417 = vcmp.gt.s32.totalorder %v1381, 0
        %vm1418 = vcmp.gt.s32.totalorder %v1382, 0
        %vm1419 = vcmp.gt.s32.totalorder %v1383, 0
        %vm1420 = vcmp.gt.s32.totalorder %v1384, 0
        %v1421 = vsel %vm1385, 1, 0
        %v1422 = vsel %vm1386, 1, 0
        %v1423 = vsel %vm1387, 1, 0
        %v1424 = vsel %vm1388, 1, 0
        %v1425 = vsel %vm1389, 1, 0
        %v1426 = vsel %vm1390, 1, 0
        %v1427 = vsel %vm1391, 1, 0
        %v1428 = vsel %vm1392, 1, 0
        %v1429 = vsel %vm1393, 1, 0
        %v1430 = vsel %vm1394, 1, 0
        %v1431 = vsel %vm1395, 1, 0
        %v1432 = vsel %vm1396, 1, 0
        %v1433 = vsel %vm1397, 1, 0
        %v1434 = vsel %vm1398, 1, 0
        %v1435 = vsel %vm1399, 1, 0
        %v1436 = vsel %vm1400, 1, 0
        %v1437 = vsel %vm1401, 1, 0
        %v1438 = vsel %vm1402, 1, 0
        %v1439 = vsel %vm1403, 1, 0
        %v1440 = vsel %vm1404, 1, 0
        %v1441 = vsel %vm1405, 1, 0
        %v1442 = vsel %vm1406, 1, 0
        %v1443 = vsel %vm1407, 1, 0
        %v1444 = vsel %vm1408, 1, 0
        %v1445 = vsel %vm1409, 1, 0
        %v1446 = vsel %vm1410, 1, 0
        %v1447 = vsel %vm1411, 1, 0
        %v1448 = vsel %vm1412, 1, 0
        %v1449 = vsel %vm1413, 1, 0
        %v1450 = vsel %vm1414, 1, 0
        %v1451 = vsel %vm1415, 1, 0
        %v1452 = vsel %vm1416, 1, 0
        %v1453 = vsel %vm1417, 1, 0
        %v1454 = vsel %vm1418, 1, 0
        %v1455 = vsel %vm1419, 1, 0
        %v1456 = vsel %vm1420, 1, 0
        %vm1457 = vcmp.eq.s32.totalorder %v1421, 1
        %vm1458 = vcmp.eq.s32.totalorder %v1422, 1
        %vm1459 = vcmp.eq.s32.totalorder %v1423, 1
        %vm1460 = vcmp.eq.s32.totalorder %v1424, 1
        %vm1461 = vcmp.eq.s32.totalorder %v1425, 1
        %vm1462 = vcmp.eq.s32.totalorder %v1426, 1
        %vm1463 = vcmp.eq.s32.totalorder %v1427, 1
        %vm1464 = vcmp.eq.s32.totalorder %v1428, 1
        %vm1465 = vcmp.eq.s32.totalorder %v1429, 1
        %vm1466 = vcmp.eq.s32.totalorder %v1430, 1
        %vm1467 = vcmp.eq.s32.totalorder %v1431, 1
        %vm1468 = vcmp.eq.s32.totalorder %v1432, 1
        %vm1469 = vcmp.eq.s32.totalorder %v1433, 1
        %vm1470 = vcmp.eq.s32.totalorder %v1434, 1
        %vm1471 = vcmp.eq.s32.totalorder %v1435, 1
        %vm1472 = vcmp.eq.s32.totalorder %v1436, 1
        %vm1473 = vcmp.eq.s32.totalorder %v1437, 1
        %vm1474 = vcmp.eq.s32.totalorder %v1438, 1
        %vm1475 = vcmp.eq.s32.totalorder %v1439, 1
        %vm1476 = vcmp.eq.s32.totalorder %v1440, 1
        %vm1477 = vcmp.eq.s32.totalorder %v1441, 1
        %vm1478 = vcmp.eq.s32.totalorder %v1442, 1
        %vm1479 = vcmp.eq.s32.totalorder %v1443, 1
        %vm1480 = vcmp.eq.s32.totalorder %v1444, 1
        %vm1481 = vcmp.eq.s32.totalorder %v1445, 1
        %vm1482 = vcmp.eq.s32.totalorder %v1446, 1
        %vm1483 = vcmp.eq.s32.totalorder %v1447, 1
        %vm1484 = vcmp.eq.s32.totalorder %v1448, 1
        %vm1485 = vcmp.eq.s32.totalorder %v1449, 1
        %vm1486 = vcmp.eq.s32.totalorder %v1450, 1
        %vm1487 = vcmp.eq.s32.totalorder %v1451, 1
        %vm1488 = vcmp.eq.s32.totalorder %v1452, 1
        %vm1489 = vcmp.eq.s32.totalorder %v1453, 1
        %vm1490 = vcmp.eq.s32.totalorder %v1454, 1
        %vm1491 = vcmp.eq.s32.totalorder %v1455, 1
        %vm1492 = vcmp.eq.s32.totalorder %v1456, 1
        %vm1493 = vmpackc.low %vm1457, %vm1457
        %vm1494 = vmpackc.low %vm1458, %vm1458
        %vm1495 = vmpackc.low %vm1459, %vm1459
        %vm1496 = vmpackc.low %vm1460, %vm1460
        %vm1497 = vmpackc.low %vm1461, %vm1461
        %vm1498 = vmpackc.low %vm1462, %vm1462
        %vm1499 = vmpackc.low %vm1463, %vm1463
        %vm1500 = vmpackc.low %vm1464, %vm1464
        %vm1501 = vmpackc.low %vm1465, %vm1465
        %vm1502 = vmpackc.low %vm1466, %vm1466
        %vm1503 = vmpackc.low %vm1467, %vm1467
        %vm1504 = vmpackc.low %vm1468, %vm1468
        %vm1505 = vmpackc.low %vm1469, %vm1469
        %vm1506 = vmpackc.low %vm1470, %vm1470
        %vm1507 = vmpackc.low %vm1471, %vm1471
        %vm1508 = vmpackc.low %vm1472, %vm1472
        %vm1509 = vmpackc.low %vm1473, %vm1473
        %vm1510 = vmpackc.low %vm1474, %vm1474
        %vm1511 = vmpackc.low %vm1475, %vm1475
        %vm1512 = vmpackc.low %vm1476, %vm1476
        %vm1513 = vmpackc.low %vm1477, %vm1477
        %vm1514 = vmpackc.low %vm1478, %vm1478
        %vm1515 = vmpackc.low %vm1479, %vm1479
        %vm1516 = vmpackc.low %vm1480, %vm1480
        %vm1517 = vmpackc.low %vm1481, %vm1481
        %vm1518 = vmpackc.low %vm1482, %vm1482
        %vm1519 = vmpackc.low %vm1483, %vm1483
        %vm1520 = vmpackc.low %vm1484, %vm1484
        %vm1521 = vmpackc.low %vm1485, %vm1485
        %vm1522 = vmpackc.low %vm1486, %vm1486
        %vm1523 = vmpackc.low %vm1487, %vm1487
        %vm1524 = vmpackc.low %vm1488, %vm1488
        %vm1525 = vmpackc.low %vm1489, %vm1489
        %vm1526 = vmpackc.low %vm1490, %vm1490
        %vm1527 = vmpackc.low %vm1491, %vm1491
        %vm1528 = vmpackc.low %vm1492, %vm1492
        %v1529 = vsel %vm1493, 65537, 0
        %v1530 = vsel %vm1494, 65537, 0
        %v1531 = vsel %vm1495, 65537, 0
        %v1532 = vsel %vm1496, 65537, 0
        %v1533 = vsel %vm1497, 65537, 0
        %v1534 = vsel %vm1498, 65537, 0
        %v1535 = vsel %vm1499, 65537, 0
        %v1536 = vsel %vm1500, 65537, 0
        %v1537 = vsel %vm1501, 65537, 0
        %v1538 = vsel %vm1502, 65537, 0
        %v1539 = vsel %vm1503, 65537, 0
        %v1540 = vsel %vm1504, 65537, 0
        %v1541 = vsel %vm1505, 65537, 0
        %v1542 = vsel %vm1506, 65537, 0
        %v1543 = vsel %vm1507, 65537, 0
        %v1544 = vsel %vm1508, 65537, 0
        %v1545 = vsel %vm1509, 65537, 0
        %v1546 = vsel %vm1510, 65537, 0
        %v1547 = vsel %vm1511, 65537, 0
        %v1548 = vsel %vm1512, 65537, 0
        %v1549 = vsel %vm1513, 65537, 0
        %v1550 = vsel %vm1514, 65537, 0
        %v1551 = vsel %vm1515, 65537, 0
        %v1552 = vsel %vm1516, 65537, 0
        %v1553 = vsel %vm1517, 65537, 0
        %v1554 = vsel %vm1518, 65537, 0
        %v1555 = vsel %vm1519, 65537, 0
        %v1556 = vsel %vm1520, 65537, 0
        %v1557 = vsel %vm1521, 65537, 0
        %v1558 = vsel %vm1522, 65537, 0
        %v1559 = vsel %vm1523, 65537, 0
        %v1560 = vsel %vm1524, 65537, 0
        %v1561 = vsel %vm1525, 65537, 0
        %v1562 = vsel %vm1526, 65537, 0
        %v1563 = vsel %vm1527, 65537, 0
        %v1564 = vsel %vm1528, 65537, 0
        %v1565 = vunpack.c.l.b16 %v1529
        %v1566 = vunpack.c.l.b16 %v1530
        %v1567 = vunpack.c.l.b16 %v1531
        %v1568 = vunpack.c.l.b16 %v1532
        %v1569 = vunpack.c.l.b16 %v1533
        %v1570 = vunpack.c.l.b16 %v1534
        %v1571 = vunpack.c.l.b16 %v1535
        %v1572 = vunpack.c.l.b16 %v1536
        %v1573 = vunpack.c.l.b16 %v1537
        %v1574 = vunpack.c.l.b16 %v1538
        %v1575 = vunpack.c.l.b16 %v1539
        %v1576 = vunpack.c.l.b16 %v1540
        %v1577 = vunpack.c.l.b16 %v1541
        %v1578 = vunpack.c.l.b16 %v1542
        %v1579 = vunpack.c.l.b16 %v1543
        %v1580 = vunpack.c.l.b16 %v1544
        %v1581 = vunpack.c.l.b16 %v1545
        %v1582 = vunpack.c.l.b16 %v1546
        %v1583 = vunpack.c.l.b16 %v1547
        %v1584 = vunpack.c.l.b16 %v1548
        %v1585 = vunpack.c.l.b16 %v1549
        %v1586 = vunpack.c.l.b16 %v1550
        %v1587 = vunpack.c.l.b16 %v1551
        %v1588 = vunpack.c.l.b16 %v1552
        %v1589 = vunpack.c.l.b16 %v1553
        %v1590 = vunpack.c.l.b16 %v1554
        %v1591 = vunpack.c.l.b16 %v1555
        %v1592 = vunpack.c.l.b16 %v1556
        %v1593 = vunpack.c.l.b16 %v1557
        %v1594 = vunpack.c.l.b16 %v1558
        %v1595 = vunpack.c.l.b16 %v1559
        %v1596 = vunpack.c.l.b16 %v1560
        %v1597 = vunpack.c.l.b16 %v1561
        %v1598 = vunpack.c.l.b16 %v1562
        %v1599 = vunpack.c.l.b16 %v1563
        %v1600 = vunpack.c.l.b16 %v1564
        %v1601 = vpack.c.b16 %v1566, %v1565
        %v1602 = vpack.c.b16 %v1568, %v1567
        %v1603 = vpack.c.b16 %v1570, %v1569
        %v1604 = vpack.c.b16 %v1572, %v1571
        %v1605 = vpack.c.b16 %v1574, %v1573
        %v1606 = vpack.c.b16 %v1576, %v1575
        %v1607 = vpack.c.b16 %v1578, %v1577
        %v1608 = vpack.c.b16 %v1580, %v1579
        %v1609 = vpack.c.b16 %v1582, %v1581
        %v1610 = vpack.c.b16 %v1584, %v1583
        %v1611 = vpack.c.b16 %v1586, %v1585
        %v1612 = vpack.c.b16 %v1588, %v1587
        %v1613 = vpack.c.b16 %v1590, %v1589
        %v1614 = vpack.c.b16 %v1592, %v1591
        %v1615 = vpack.c.b16 %v1594, %v1593
        %v1616 = vpack.c.b16 %v1596, %v1595
        %v1617 = vpack.c.b16 %v1598, %v1597
        %v1618 = vpack.c.b16 %v1600, %v1599
        %vm1619 = vcmp.ne.s16.totalorder %v1601, 0
        %vm1620 = vcmp.ne.s16.totalorder %v1602, 0
        %vm1621 = vcmp.ne.s16.totalorder %v1603, 0
        %vm1622 = vcmp.ne.s16.totalorder %v1604, 0
        %vm1623 = vcmp.ne.s16.totalorder %v1605, 0
        %vm1624 = vcmp.ne.s16.totalorder %v1606, 0
        %vm1625 = vcmp.ne.s16.totalorder %v1607, 0
        %vm1626 = vcmp.ne.s16.totalorder %v1608, 0
        %vm1627 = vcmp.ne.s16.totalorder %v1609, 0
        %vm1628 = vcmp.ne.s16.totalorder %v1610, 0
        %vm1629 = vcmp.ne.s16.totalorder %v1611, 0
        %vm1630 = vcmp.ne.s16.totalorder %v1612, 0
        %vm1631 = vcmp.ne.s16.totalorder %v1613, 0
        %vm1632 = vcmp.ne.s16.totalorder %v1614, 0
        %vm1633 = vcmp.ne.s16.totalorder %v1615, 0
        %vm1634 = vcmp.ne.s16.totalorder %v1616, 0
        %vm1635 = vcmp.ne.s16.totalorder %v1617, 0
        %vm1636 = vcmp.ne.s16.totalorder %v1618, 0
        %v1637 = vsel %vm1619, %v842, 0
        %v1638 = vsel %vm1620, %v700, 0
        %v1639 = vsel %vm1621, %v708, 0
        %v1640 = vsel %vm1622, %v716, 0
        %v1641 = vsel %vm1623, %v724, 0
        %v1642 = vsel %vm1624, %v732, 0
        %v1643 = vsel %vm1625, %v740, 0
        %v1644 = vsel %vm1626, %v748, 0
        %v1645 = vsel %vm1627, %v756, 0
        %v1646 = vsel %vm1628, %v764, 0
        %v1647 = vsel %vm1629, %v772, 0
        %v1648 = vsel %vm1630, %v780, 0
        %v1649 = vsel %vm1631, %v788, 0
        %v1650 = vsel %vm1632, %v796, 0
        %v1651 = vsel %vm1633, %v804, 0
        %v1652 = vsel %vm1634, %v812, 0
        %v1653 = vsel %vm1635, %v820, 0
        %v1654 = vsel %vm1636, %v821, 0
        %vm1655 = vcmp.lt.s32.totalorder %v1349, 15
        %vm1656 = vcmp.lt.s32.totalorder %v1350, 15
        %vm1657 = vcmp.lt.s32.totalorder %v1351, 15
        %vm1658 = vcmp.lt.s32.totalorder %v1352, 15
        %vm1659 = vcmp.lt.s32.totalorder %v1353, 15
        %vm1660 = vcmp.lt.s32.totalorder %v1354, 15
        %vm1661 = vcmp.lt.s32.totalorder %v1355, 15
        %vm1662 = vcmp.lt.s32.totalorder %v1356, 15
        %vm1663 = vcmp.lt.s32.totalorder %v1357, 15
        %vm1664 = vcmp.lt.s32.totalorder %v1358, 15
        %vm1665 = vcmp.lt.s32.totalorder %v1359, 15
        %vm1666 = vcmp.lt.s32.totalorder %v1360, 15
        %vm1667 = vcmp.lt.s32.totalorder %v1361, 15
        %vm1668 = vcmp.lt.s32.totalorder %v1362, 15
        %vm1669 = vcmp.lt.s32.totalorder %v1363, 15
        %vm1670 = vcmp.lt.s32.totalorder %v1364, 15
        %vm1671 = vcmp.lt.s32.totalorder %v1365, 15
        %vm1672 = vcmp.lt.s32.totalorder %v1366, 15
        %vm1673 = vcmp.lt.s32.totalorder %v1367, 15
        %vm1674 = vcmp.lt.s32.totalorder %v1368, 15
        %vm1675 = vcmp.lt.s32.totalorder %v1369, 15
        %vm1676 = vcmp.lt.s32.totalorder %v1370, 15
        %vm1677 = vcmp.lt.s32.totalorder %v1371, 15
        %vm1678 = vcmp.lt.s32.totalorder %v1372, 15
        %vm1679 = vcmp.lt.s32.totalorder %v1373, 15
        %vm1680 = vcmp.lt.s32.totalorder %v1374, 15
        %vm1681 = vcmp.lt.s32.totalorder %v1375, 15
        %vm1682 = vcmp.lt.s32.totalorder %v1376, 15
        %vm1683 = vcmp.lt.s32.totalorder %v1377, 15
        %vm1684 = vcmp.lt.s32.totalorder %v1378, 15
        %vm1685 = vcmp.lt.s32.totalorder %v1379, 15
        %vm1686 = vcmp.lt.s32.totalorder %v1380, 15
        %vm1687 = vcmp.lt.s32.totalorder %v1381, 15
        %vm1688 = vcmp.lt.s32.totalorder %v1382, 15
        %vm1689 = vcmp.lt.s32.totalorder %v1383, 15
        %vm1690 = vcmp.lt.s32.totalorder %v1384, 15
        %v1691 = vsel %vm1655, 1, 0
        %v1692 = vsel %vm1656, 1, 0
        %v1693 = vsel %vm1657, 1, 0
        %v1694 = vsel %vm1658, 1, 0
        %v1695 = vsel %vm1659, 1, 0
        %v1696 = vsel %vm1660, 1, 0
        %v1697 = vsel %vm1661, 1, 0
        %v1698 = vsel %vm1662, 1, 0
        %v1699 = vsel %vm1663, 1, 0
        %v1700 = vsel %vm1664, 1, 0
        %v1701 = vsel %vm1665, 1, 0
        %v1702 = vsel %vm1666, 1, 0
        %v1703 = vsel %vm1667, 1, 0
        %v1704 = vsel %vm1668, 1, 0
        %v1705 = vsel %vm1669, 1, 0
        %v1706 = vsel %vm1670, 1, 0
        %v1707 = vsel %vm1671, 1, 0
        %v1708 = vsel %vm1672, 1, 0
        %v1709 = vsel %vm1673, 1, 0
        %v1710 = vsel %vm1674, 1, 0
        %v1711 = vsel %vm1675, 1, 0
        %v1712 = vsel %vm1676, 1, 0
        %v1713 = vsel %vm1677, 1, 0
        %v1714 = vsel %vm1678, 1, 0
        %v1715 = vsel %vm1679, 1, 0
        %v1716 = vsel %vm1680, 1, 0
        %v1717 = vsel %vm1681, 1, 0
        %v1718 = vsel %vm1682, 1, 0
        %v1719 = vsel %vm1683, 1, 0
        %v1720 = vsel %vm1684, 1, 0
        %v1721 = vsel %vm1685, 1, 0
        %v1722 = vsel %vm1686, 1, 0
        %v1723 = vsel %vm1687, 1, 0
        %v1724 = vsel %vm1688, 1, 0
        %v1725 = vsel %vm1689, 1, 0
        %v1726 = vsel %vm1690, 1, 0
        %vm1727 = vcmp.eq.s32.totalorder %v1691, 1
        %vm1728 = vcmp.eq.s32.totalorder %v1692, 1
        %vm1729 = vcmp.eq.s32.totalorder %v1693, 1
        %vm1730 = vcmp.eq.s32.totalorder %v1694, 1
        %vm1731 = vcmp.eq.s32.totalorder %v1695, 1
        %vm1732 = vcmp.eq.s32.totalorder %v1696, 1
        %vm1733 = vcmp.eq.s32.totalorder %v1697, 1
        %vm1734 = vcmp.eq.s32.totalorder %v1698, 1
        %vm1735 = vcmp.eq.s32.totalorder %v1699, 1
        %vm1736 = vcmp.eq.s32.totalorder %v1700, 1
        %vm1737 = vcmp.eq.s32.totalorder %v1701, 1
        %vm1738 = vcmp.eq.s32.totalorder %v1702, 1
        %vm1739 = vcmp.eq.s32.totalorder %v1703, 1
        %vm1740 = vcmp.eq.s32.totalorder %v1704, 1
        %vm1741 = vcmp.eq.s32.totalorder %v1705, 1
        %vm1742 = vcmp.eq.s32.totalorder %v1706, 1
        %vm1743 = vcmp.eq.s32.totalorder %v1707, 1
        %vm1744 = vcmp.eq.s32.totalorder %v1708, 1
        %vm1745 = vcmp.eq.s32.totalorder %v1709, 1
        %vm1746 = vcmp.eq.s32.totalorder %v1710, 1
        %vm1747 = vcmp.eq.s32.totalorder %v1711, 1
        %vm1748 = vcmp.eq.s32.totalorder %v1712, 1
        %vm1749 = vcmp.eq.s32.totalorder %v1713, 1
        %vm1750 = vcmp.eq.s32.totalorder %v1714, 1
        %vm1751 = vcmp.eq.s32.totalorder %v1715, 1
        %vm1752 = vcmp.eq.s32.totalorder %v1716, 1
        %vm1753 = vcmp.eq.s32.totalorder %v1717, 1
        %vm1754 = vcmp.eq.s32.totalorder %v1718, 1
        %vm1755 = vcmp.eq.s32.totalorder %v1719, 1
        %vm1756 = vcmp.eq.s32.totalorder %v1720, 1
        %vm1757 = vcmp.eq.s32.totalorder %v1721, 1
        %vm1758 = vcmp.eq.s32.totalorder %v1722, 1
        %vm1759 = vcmp.eq.s32.totalorder %v1723, 1
        %vm1760 = vcmp.eq.s32.totalorder %v1724, 1
        %vm1761 = vcmp.eq.s32.totalorder %v1725, 1
        %vm1762 = vcmp.eq.s32.totalorder %v1726, 1
        %vm1763 = vmpackc.low %vm1727, %vm1727
        %vm1764 = vmpackc.low %vm1728, %vm1728
        %vm1765 = vmpackc.low %vm1729, %vm1729
        %vm1766 = vmpackc.low %vm1730, %vm1730
        %vm1767 = vmpackc.low %vm1731, %vm1731
        %vm1768 = vmpackc.low %vm1732, %vm1732
        %vm1769 = vmpackc.low %vm1733, %vm1733
        %vm1770 = vmpackc.low %vm1734, %vm1734
        %vm1771 = vmpackc.low %vm1735, %vm1735
        %vm1772 = vmpackc.low %vm1736, %vm1736
        %vm1773 = vmpackc.low %vm1737, %vm1737
        %vm1774 = vmpackc.low %vm1738, %vm1738
        %vm1775 = vmpackc.low %vm1739, %vm1739
        %vm1776 = vmpackc.low %vm1740, %vm1740
        %vm1777 = vmpackc.low %vm1741, %vm1741
        %vm1778 = vmpackc.low %vm1742, %vm1742
        %vm1779 = vmpackc.low %vm1743, %vm1743
        %vm1780 = vmpackc.low %vm1744, %vm1744
        %vm1781 = vmpackc.low %vm1745, %vm1745
        %vm1782 = vmpackc.low %vm1746, %vm1746
        %vm1783 = vmpackc.low %vm1747, %vm1747
        %vm1784 = vmpackc.low %vm1748, %vm1748
        %vm1785 = vmpackc.low %vm1749, %vm1749
        %vm1786 = vmpackc.low %vm1750, %vm1750
        %vm1787 = vmpackc.low %vm1751, %vm1751
        %vm1788 = vmpackc.low %vm1752, %vm1752
        %vm1789 = vmpackc.low %vm1753, %vm1753
        %vm1790 = vmpackc.low %vm1754, %vm1754
        %vm1791 = vmpackc.low %vm1755, %vm1755
        %vm1792 = vmpackc.low %vm1756, %vm1756
        %vm1793 = vmpackc.low %vm1757, %vm1757
        %vm1794 = vmpackc.low %vm1758, %vm1758
        %vm1795 = vmpackc.low %vm1759, %vm1759
        %vm1796 = vmpackc.low %vm1760, %vm1760
        %vm1797 = vmpackc.low %vm1761, %vm1761
        %vm1798 = vmpackc.low %vm1762, %vm1762
        %v1799 = vsel %vm1763, 65537, 0
        %v1800 = vsel %vm1764, 65537, 0
        %v1801 = vsel %vm1765, 65537, 0
        %v1802 = vsel %vm1766, 65537, 0
        %v1803 = vsel %vm1767, 65537, 0
        %v1804 = vsel %vm1768, 65537, 0
        %v1805 = vsel %vm1769, 65537, 0
        %v1806 = vsel %vm1770, 65537, 0
        %v1807 = vsel %vm1771, 65537, 0
        %v1808 = vsel %vm1772, 65537, 0
        %v1809 = vsel %vm1773, 65537, 0
        %v1810 = vsel %vm1774, 65537, 0
        %v1811 = vsel %vm1775, 65537, 0
        %v1812 = vsel %vm1776, 65537, 0
        %v1813 = vsel %vm1777, 65537, 0
        %v1814 = vsel %vm1778, 65537, 0
        %v1815 = vsel %vm1779, 65537, 0
        %v1816 = vsel %vm1780, 65537, 0
        %v1817 = vsel %vm1781, 65537, 0
        %v1818 = vsel %vm1782, 65537, 0
        %v1819 = vsel %vm1783, 65537, 0
        %v1820 = vsel %vm1784, 65537, 0
        %v1821 = vsel %vm1785, 65537, 0
        %v1822 = vsel %vm1786, 65537, 0
        %v1823 = vsel %vm1787, 65537, 0
        %v1824 = vsel %vm1788, 65537, 0
        %v1825 = vsel %vm1789, 65537, 0
        %v1826 = vsel %vm1790, 65537, 0
        %v1827 = vsel %vm1791, 65537, 0
        %v1828 = vsel %vm1792, 65537, 0
        %v1829 = vsel %vm1793, 65537, 0
        %v1830 = vsel %vm1794, 65537, 0
        %v1831 = vsel %vm1795, 65537, 0
        %v1832 = vsel %vm1796, 65537, 0
        %v1833 = vsel %vm1797, 65537, 0
        %v1834 = vsel %vm1798, 65537, 0
        %v1835 = vunpack.c.l.b16 %v1799
        %v1836 = vunpack.c.l.b16 %v1800
        %v1837 = vunpack.c.l.b16 %v1801
        %v1838 = vunpack.c.l.b16 %v1802
        %v1839 = vunpack.c.l.b16 %v1803
        %v1840 = vunpack.c.l.b16 %v1804
        %v1841 = vunpack.c.l.b16 %v1805
        %v1842 = vunpack.c.l.b16 %v1806
        %v1843 = vunpack.c.l.b16 %v1807
        %v1844 = vunpack.c.l.b16 %v1808
        %v1845 = vunpack.c.l.b16 %v1809
        %v1846 = vunpack.c.l.b16 %v1810
        %v1847 = vunpack.c.l.b16 %v1811
        %v1848 = vunpack.c.l.b16 %v1812
        %v1849 = vunpack.c.l.b16 %v1813
        %v1850 = vunpack.c.l.b16 %v1814
        %v1851 = vunpack.c.l.b16 %v1815
        %v1852 = vunpack.c.l.b16 %v1816
        %v1853 = vunpack.c.l.b16 %v1817
        %v1854 = vunpack.c.l.b16 %v1818
        %v1855 = vunpack.c.l.b16 %v1819
        %v1856 = vunpack.c.l.b16 %v1820
        %v1857 = vunpack.c.l.b16 %v1821
        %v1858 = vunpack.c.l.b16 %v1822
        %v1859 = vunpack.c.l.b16 %v1823
        %v1860 = vunpack.c.l.b16 %v1824
        %v1861 = vunpack.c.l.b16 %v1825
        %v1862 = vunpack.c.l.b16 %v1826
        %v1863 = vunpack.c.l.b16 %v1827
        %v1864 = vunpack.c.l.b16 %v1828
        %v1865 = vunpack.c.l.b16 %v1829
        %v1866 = vunpack.c.l.b16 %v1830
        %v1867 = vunpack.c.l.b16 %v1831
        %v1868 = vunpack.c.l.b16 %v1832
        %v1869 = vunpack.c.l.b16 %v1833
        %v1870 = vunpack.c.l.b16 %v1834
        %v1871 = vpack.c.b16 %v1836, %v1835
        %v1872 = vpack.c.b16 %v1838, %v1837
        %v1873 = vpack.c.b16 %v1840, %v1839
        %v1874 = vpack.c.b16 %v1842, %v1841
        %v1875 = vpack.c.b16 %v1844, %v1843
        %v1876 = vpack.c.b16 %v1846, %v1845
        %v1877 = vpack.c.b16 %v1848, %v1847
        %v1878 = vpack.c.b16 %v1850, %v1849
        %v1879 = vpack.c.b16 %v1852, %v1851
        %v1880 = vpack.c.b16 %v1854, %v1853
        %v1881 = vpack.c.b16 %v1856, %v1855
        %v1882 = vpack.c.b16 %v1858, %v1857
        %v1883 = vpack.c.b16 %v1860, %v1859
        %v1884 = vpack.c.b16 %v1862, %v1861
        %v1885 = vpack.c.b16 %v1864, %v1863
        %v1886 = vpack.c.b16 %v1866, %v1865
        %v1887 = vpack.c.b16 %v1868, %v1867
        %v1888 = vpack.c.b16 %v1870, %v1869
        %vm1889 = vcmp.ne.s16.totalorder %v1871, 0
        %vm1890 = vcmp.ne.s16.totalorder %v1872, 0
        %vm1891 = vcmp.ne.s16.totalorder %v1873, 0
        %vm1892 = vcmp.ne.s16.totalorder %v1874, 0
        %vm1893 = vcmp.ne.s16.totalorder %v1875, 0
        %vm1894 = vcmp.ne.s16.totalorder %v1876, 0
        %vm1895 = vcmp.ne.s16.totalorder %v1877, 0
        %vm1896 = vcmp.ne.s16.totalorder %v1878, 0
        %vm1897 = vcmp.ne.s16.totalorder %v1879, 0
        %vm1898 = vcmp.ne.s16.totalorder %v1880, 0
        %vm1899 = vcmp.ne.s16.totalorder %v1881, 0
        %vm1900 = vcmp.ne.s16.totalorder %v1882, 0
        %vm1901 = vcmp.ne.s16.totalorder %v1883, 0
        %vm1902 = vcmp.ne.s16.totalorder %v1884, 0
        %vm1903 = vcmp.ne.s16.totalorder %v1885, 0
        %vm1904 = vcmp.ne.s16.totalorder %v1886, 0
        %vm1905 = vcmp.ne.s16.totalorder %v1887, 0
        %vm1906 = vcmp.ne.s16.totalorder %v1888, 0
        %v1907 = vsel %vm1889, %v847, 0
        %v1908 = vsel %vm1890, %v850, 0
        %v1909 = vsel %vm1891, %v853, 0
        %v1910 = vsel %vm1892, %v856, 0
        %v1911 = vsel %vm1893, %v859, 0
        %v1912 = vsel %vm1894, %v862, 0
        %v1913 = vsel %vm1895, %v865, 0
        %v1914 = vsel %vm1896, %v868, 0
        %v1915 = vsel %vm1897, %v871, 0
        %v1916 = vsel %vm1898, %v874, 0
        %v1917 = vsel %vm1899, %v877, 0
        %v1918 = vsel %vm1900, %v880, 0
        %v1919 = vsel %vm1901, %v883, 0
        %v1920 = vsel %vm1902, %v886, 0
        %v1921 = vsel %vm1903, %v889, 0
        %v1922 = vsel %vm1904, %v892, 0
        %v1923 = vsel %vm1905, %v894, 0
        %v1924 = vsel %vm1906, %v915, 0
        %1942 = vrot.lane.b32.xlu0 0, 8
        %v1943 = vpop.permute.xlu0 %1942
        %1944 = vrot.lane.b32.xlu0 %v669, 8
        %v1945 = vpop.permute.xlu0 %1944
        %1946 = vrot.lane.b32.xlu0 %v670, 8
        %v1947 = vpop.permute.xlu0 %1946
        %1948 = vrot.lane.b32.xlu0 %v671, 8
        %v1949 = vpop.permute.xlu0 %1948
        %1950 = vrot.lane.b32.xlu0 %v672, 8
        %v1951 = vpop.permute.xlu0 %1950
        %1952 = vrot.lane.b32.xlu0 %v673, 8
        %v1953 = vpop.permute.xlu0 %1952
        %1954 = vrot.lane.b32.xlu0 %v674, 8
        %v1955 = vpop.permute.xlu0 %1954
        %1956 = vrot.lane.b32.xlu0 %v675, 8
        %v1957 = vpop.permute.xlu0 %1956
        %1958 = vrot.lane.b32.xlu0 %v676, 8
        %v1959 = vpop.permute.xlu0 %1958
        %1960 = vrot.lane.b32.xlu0 %v677, 8
        %v1961 = vpop.permute.xlu0 %1960
        %1962 = vrot.lane.b32.xlu0 %v678, 8
        %v1963 = vpop.permute.xlu0 %1962
        %1964 = vrot.lane.b32.xlu0 %v679, 8
        %v1965 = vpop.permute.xlu0 %1964
        %1966 = vrot.lane.b32.xlu0 %v680, 8
        %v1967 = vpop.permute.xlu0 %1966
        %1968 = vrot.lane.b32.xlu0 %v681, 8
        %v1969 = vpop.permute.xlu0 %1968
        %1970 = vrot.lane.b32.xlu0 %v682, 8
        %v1971 = vpop.permute.xlu0 %1970
        %1972 = vrot.lane.b32.xlu0 %v683, 8
        %v1973 = vpop.permute.xlu0 %1972
        %1974 = vrot.lane.b32.xlu0 %v684, 8
        %v1975 = vpop.permute.xlu0 %1974
        %1994 = vrot.lane.b32.xlu0 %v1907, 16
        %v1995 = vpop.permute.xlu0 %1994
        %1996 = vrot.lane.b32.xlu0 %v1908, 16
        %v1997 = vpop.permute.xlu0 %1996
        %1998 = vrot.lane.b32.xlu0 %v1909, 16
        %v1999 = vpop.permute.xlu0 %1998
        %2000 = vrot.lane.b32.xlu0 %v1910, 16
        %v2001 = vpop.permute.xlu0 %2000
        %2002 = vrot.lane.b32.xlu0 %v1911, 16
        %v2003 = vpop.permute.xlu0 %2002
        %2004 = vrot.lane.b32.xlu0 %v1912, 16
        %v2005 = vpop.permute.xlu0 %2004
        %2006 = vrot.lane.b32.xlu0 %v1913, 16
        %v2007 = vpop.permute.xlu0 %2006
        %2008 = vrot.lane.b32.xlu0 %v1914, 16
        %v2009 = vpop.permute.xlu0 %2008
        %2010 = vrot.lane.b32.xlu0 %v1915, 16
        %v2011 = vpop.permute.xlu0 %2010
        %2012 = vrot.lane.b32.xlu0 %v1916, 16
        %v2013 = vpop.permute.xlu0 %2012
        %2014 = vrot.lane.b32.xlu0 %v1917, 16
        %v2015 = vpop.permute.xlu0 %2014
        %2016 = vrot.lane.b32.xlu0 %v1918, 16
        %v2017 = vpop.permute.xlu0 %2016
        %2018 = vrot.lane.b32.xlu0 %v1919, 16
        %v2019 = vpop.permute.xlu0 %2018
        %2020 = vrot.lane.b32.xlu0 %v1920, 16
        %v2021 = vpop.permute.xlu0 %2020
        %2022 = vrot.lane.b32.xlu0 %v1921, 16
        %v2023 = vpop.permute.xlu0 %2022
        %2024 = vrot.lane.b32.xlu0 %v1922, 16
        %v2025 = vpop.permute.xlu0 %2024
        %2026 = vrot.lane.b32.xlu0 %v1923, 16
        %v2027 = vpop.permute.xlu0 %2026
        %2028 = vrot.lane.b32.xlu0 %v1924, 16
        %v2029 = vpop.permute.xlu0 %2028
        %vm2030 = vcmask 64512
        %v2033 = vsel %vm2030, %v1637, %v1943
        %v2036 = vsel %vm2030, %v1638, %v1945
        %v2039 = vsel %vm2030, %v1639, %v1947
        %v2042 = vsel %vm2030, %v1640, %v1949
        %v2045 = vsel %vm2030, %v1641, %v1951
        %v2048 = vsel %vm2030, %v1642, %v1953
        %v2051 = vsel %vm2030, %v1643, %v1955
        %v2054 = vsel %vm2030, %v1644, %v1957
        %v2057 = vsel %vm2030, %v1645, %v1959
        %v2060 = vsel %vm2030, %v1646, %v1961
        %v2063 = vsel %vm2030, %v1647, %v1963
        %v2066 = vsel %vm2030, %v1648, %v1965
        %v2069 = vsel %vm2030, %v1649, %v1967
        %v2072 = vsel %vm2030, %v1650, %v1969
        %v2075 = vsel %vm2030, %v1651, %v1971
        %v2078 = vsel %vm2030, %v1652, %v1973
        %v2081 = vsel %vm2030, %v1653, %v1975
        %v2083 = vsel %vm2030, %v1654, %v1943
        %v2085 = vsel %vm427, %v2033, %v1995
        %v2087 = vsel %vm427, %v2036, %v1997
        %v2089 = vsel %vm427, %v2039, %v1999
        %v2091 = vsel %vm427, %v2042, %v2001
        %v2093 = vsel %vm427, %v2045, %v2003
        %v2095 = vsel %vm427, %v2048, %v2005
        %v2097 = vsel %vm427, %v2051, %v2007
        %v2099 = vsel %vm427, %v2054, %v2009
        %v2101 = vsel %vm427, %v2057, %v2011
        %v2103 = vsel %vm427, %v2060, %v2013
        %v2105 = vsel %vm427, %v2063, %v2015
        %v2107 = vsel %vm427, %v2066, %v2017
        %v2109 = vsel %vm427, %v2069, %v2019
        %v2111 = vsel %vm427, %v2072, %v2021
        %v2113 = vsel %vm427, %v2075, %v2023
        %v2115 = vsel %vm427, %v2078, %v2025
        %v2117 = vsel %vm427, %v2081, %v2027
        %v2119 = vsel %vm427, %v2083, %v2029
        %v2120 = vld [vmem:[#allocation9] sm:$0xf]
        %v2121 = vld [vmem:[#allocation9 + $0x4] sm:$0xf]
        %v2122 = vld [vmem:[#allocation9 + $0x8] sm:$0xf]
        %v2123 = vld [vmem:[#allocation9 + $0xc] sm:$0xf]
        %v2124 = vld [vmem:[#allocation9 + $0x10] sm:$0xf]
        %v2125 = vld [vmem:[#allocation9 + $0x14] sm:$0xf]
        %v2129 = vunpack.c.l.b16 %v2123
        %v2130 = vunpack.c.l.b16 %v2124
        %v2131 = vunpack.c.l.b16 %v2125
        %v2132 = vpack.c.b16 %v2130, %v2129
        %v2133 = vpack.c.b16 %v2131, %v2131
        %vm2135 = vcmask 195584
        %v2136 = vsel %vm2135, %v2087, 0
        %v2138 = vsel %vm2135, %v2089, 0
        %v2140 = vsel %vm2135, %v2091, 0
        %v2142 = vsel %vm2135, %v2093, 0
        %v2144 = vsel %vm2135, %v2095, 0
        %v2146 = vsel %vm2135, %v2097, 0
        %v2148 = vsel %vm2135, %v2099, 0
        %v2150 = vsel %vm2135, %v2101, 0
        %v2152 = vsel %vm2135, %v2103, 0
        %v2154 = vsel %vm2135, %v2105, 0
        %v2156 = vsel %vm2135, %v2107, 0
        %v2158 = vsel %vm2135, %v2109, 0
        %v2160 = vsel %vm2135, %v2111, 0
        %v2162 = vsel %vm2135, %v2113, 0
        %v2164 = vsel %vm2135, %v2115, 0
        %v2166 = vsel %vm2135, %v2117, 0
        %vm2168 = vcmask 1043456
        %v2170 = vsel %vm2168, %v2133, 0
        %2172 = vmatprep.subr.bf16.mxu0 0
        %2173 = vmatpush1.bf16.msra.mxu0 %v2132
        %2174 = vmatprep.subr.bf16.mxu0 0
        %2175 = vmatpush1.bf16.msra.mxu0 %v2170
        %2176 = vmatprep.subr.bf16.mxu0 0
        %2177 = vmatpush1.bf16.msra.mxu0 0
        %2178 = vmatprep.subr.bf16.mxu0 0
        %2179 = vmatpush1.bf16.msra.mxu0 0
        %2180 = vmatprep.subr.bf16.mxu0 0
        %2181 = vmatpush1.bf16.msra.mxu0 0
        %2182 = vmatprep.subr.bf16.mxu0 0
        %2183 = vmatpush1.bf16.msra.mxu0 0
        %2184 = vmatprep.subr.bf16.mxu0 0
        %2185 = vmatpush1.bf16.msra.mxu0 0
        %2186 = vmatprep.subr.bf16.mxu0 0
        %2187 = vmatpush1.bf16.msra.mxu0 0
        %2188 = vmatprep.subr.bf16.mxu0 0
        %2189 = vmatpush1.bf16.msra.mxu0 0
        %2190 = vmatprep.subr.bf16.mxu0 0
        %2191 = vmatpush1.bf16.msra.mxu0 0
        %2192 = vmatprep.subr.bf16.mxu0 0
        %2193 = vmatpush1.bf16.msra.mxu0 0
        %2194 = vmatprep.subr.bf16.mxu0 0
        %2195 = vmatpush1.bf16.msra.mxu0 0
        %2196 = vmatprep.subr.bf16.mxu0 0
        %2197 = vmatpush1.bf16.msra.mxu0 0
        %2198 = vmatprep.subr.bf16.mxu0 0
        %2199 = vmatpush1.bf16.msra.mxu0 0
        %2200 = vmatprep.subr.bf16.mxu0 0
        %2201 = vmatpush1.bf16.msra.mxu0 0
        %2202 = vmatprep.subr.bf16.mxu0 0
        %2203 = vmatpush1.bf16.msra.mxu0 0
        %2204 = vmatprep.mubr.bf16.mxu0 0
        %2205 = vmatmul.mubr.bf16.gmra.mrb[0].mxu0 %v2136
        %v2206 = vpop.f32.mrb[0].mxu0
        %v2207 = vadd.f32 0.0, %v2206
        %v2208 = vpop.f32.mrb[0].mxu0
        %v2209 = vpop.f32.mrb[0].mxu0
        %v2210 = vadd.f32 0.0, %v2209
        %v2211 = vpop.f32.mrb[0].mxu0
        %2212 = vmatprep.mubr.bf16.mxu0 0
        %2213 = vmatmul.mubr.bf16.gmra.mrb[0].mxu0 %v2138
        %v2214 = vpop.f32.mrb[0].mxu0
        %v2215 = vadd.f32 0.0, %v2214
        %v2216 = vpop.f32.mrb[0].mxu0
        %v2217 = vpop.f32.mrb[0].mxu0
        %v2218 = vadd.f32 0.0, %v2217
        %v2219 = vpop.f32.mrb[0].mxu0
        %2220 = vmatprep.mubr.bf16.mxu0 0
        %2221 = vmatmul.mubr.bf16.gmra.mrb[0].mxu0 %v2140
        %v2222 = vpop.f32.mrb[0].mxu0
        %v2223 = vadd.f32 0.0, %v2222
        %v2224 = vpop.f32.mrb[0].mxu0
        %v2225 = vpop.f32.mrb[0].mxu0
        %v2226 = vadd.f32 0.0, %v2225
        %v2227 = vpop.f32.mrb[0].mxu0
        %2228 = vmatprep.mubr.bf16.mxu0 0
        %2229 = vmatmul.mubr.bf16.gmra.mrb[0].mxu0 %v2142
        %v2230 = vpop.f32.mrb[0].mxu0
        %v2231 = vadd.f32 0.0, %v2230
        %v2232 = vpop.f32.mrb[0].mxu0
        %v2233 = vpop.f32.mrb[0].mxu0
        %v2234 = vadd.f32 0.0, %v2233
        %v2235 = vpop.f32.mrb[0].mxu0
        %2236 = vmatprep.mubr.bf16.mxu0 0
        %2237 = vmatmul.mubr.bf16.gmra.mrb[0].mxu0 %v2144
        %v2238 = vpop.f32.mrb[0].mxu0
        %v2239 = vadd.f32 0.0, %v2238
        %v2240 = vpop.f32.mrb[0].mxu0
        %v2241 = vpop.f32.mrb[0].mxu0
        %v2242 = vadd.f32 0.0, %v2241
        %v2243 = vpop.f32.mrb[0].mxu0
        %2244 = vmatprep.mubr.bf16.mxu0 0
        %2245 = vmatmul.mubr.bf16.gmra.mrb[0].mxu0 %v2146
        %v2246 = vpop.f32.mrb[0].mxu0
        %v2247 = vadd.f32 0.0, %v2246
        %v2248 = vpop.f32.mrb[0].mxu0
        %v2249 = vpop.f32.mrb[0].mxu0
        %v2250 = vadd.f32 0.0, %v2249
        %v2251 = vpop.f32.mrb[0].mxu0
        %2252 = vmatprep.mubr.bf16.mxu0 0
        %2253 = vmatmul.mubr.bf16.gmra.mrb[0].mxu0 %v2148
        %v2254 = vpop.f32.mrb[0].mxu0
        %v2255 = vadd.f32 0.0, %v2254
        %v2256 = vpop.f32.mrb[0].mxu0
        %v2257 = vpop.f32.mrb[0].mxu0
        %v2258 = vadd.f32 0.0, %v2257
        %v2259 = vpop.f32.mrb[0].mxu0
        %2260 = vmatprep.mubr.bf16.mxu0 0
        %2261 = vmatmul.mubr.bf16.gmra.mrb[0].mxu0 %v2150
        %v2262 = vpop.f32.mrb[0].mxu0
        %v2263 = vadd.f32 0.0, %v2262
        %v2264 = vpop.f32.mrb[0].mxu0
        %v2265 = vpop.f32.mrb[0].mxu0
        %v2266 = vadd.f32 0.0, %v2265
        %v2267 = vpop.f32.mrb[0].mxu0
        %2268 = vmatprep.mubr.bf16.mxu0 0
        %2269 = vmatmul.mubr.bf16.gmra.mrb[0].mxu0 %v2152
        %v2270 = vpop.f32.mrb[0].mxu0
        %v2271 = vadd.f32 0.0, %v2270
        %v2272 = vpop.f32.mrb[0].mxu0
        %v2273 = vpop.f32.mrb[0].mxu0
        %v2274 = vadd.f32 0.0, %v2273
        %v2275 = vpop.f32.mrb[0].mxu0
        %2276 = vmatprep.mubr.bf16.mxu0 0
        %2277 = vmatmul.mubr.bf16.gmra.mrb[0].mxu0 %v2154
        %v2278 = vpop.f32.mrb[0].mxu0
        %v2279 = vadd.f32 0.0, %v2278
        %v2280 = vpop.f32.mrb[0].mxu0
        %v2281 = vpop.f32.mrb[0].mxu0
        %v2282 = vadd.f32 0.0, %v2281
        %v2283 = vpop.f32.mrb[0].mxu0
        %2284 = vmatprep.mubr.bf16.mxu0 0
        %2285 = vmatmul.mubr.bf16.gmra.mrb[0].mxu0 %v2156
        %v2286 = vpop.f32.mrb[0].mxu0
        %v2287 = vadd.f32 0.0, %v2286
        %v2288 = vpop.f32.mrb[0].mxu0
        %v2289 = vpop.f32.mrb[0].mxu0
        %v2290 = vadd.f32 0.0, %v2289
        %v2291 = vpop.f32.mrb[0].mxu0
        %2292 = vmatprep.mubr.bf16.mxu0 0
        %2293 = vmatmul.mubr.bf16.gmra.mrb[0].mxu0 %v2158
        %v2294 = vpop.f32.mrb[0].mxu0
        %v2295 = vadd.f32 0.0, %v2294
        %v2296 = vpop.f32.mrb[0].mxu0
        %v2297 = vpop.f32.mrb[0].mxu0
        %v2298 = vadd.f32 0.0, %v2297
        %v2299 = vpop.f32.mrb[0].mxu0
        %2300 = vmatprep.mubr.bf16.mxu0 0
        %2301 = vmatmul.mubr.bf16.gmra.mrb[0].mxu0 %v2160
        %v2302 = vpop.f32.mrb[0].mxu0
        %v2303 = vadd.f32 0.0, %v2302
        %v2304 = vpop.f32.mrb[0].mxu0
        %v2305 = vpop.f32.mrb[0].mxu0
        %v2306 = vadd.f32 0.0, %v2305
        %v2307 = vpop.f32.mrb[0].mxu0
        %2308 = vmatprep.mubr.bf16.mxu0 0
        %2309 = vmatmul.mubr.bf16.gmra.mrb[0].mxu0 %v2162
        %v2310 = vpop.f32.mrb[0].mxu0
        %v2311 = vadd.f32 0.0, %v2310
        %v2312 = vpop.f32.mrb[0].mxu0
        %v2313 = vpop.f32.mrb[0].mxu0
        %v2314 = vadd.f32 0.0, %v2313
        %v2315 = vpop.f32.mrb[0].mxu0
        %2316 = vmatprep.mubr.bf16.mxu0 0
        %2317 = vmatmul.mubr.bf16.gmra.mrb[0].mxu0 %v2164
        %v2318 = vpop.f32.mrb[0].mxu0
        %v2319 = vadd.f32 0.0, %v2318
        %v2320 = vpop.f32.mrb[0].mxu0
        %v2321 = vpop.f32.mrb[0].mxu0
        %v2322 = vadd.f32 0.0, %v2321
        %v2323 = vpop.f32.mrb[0].mxu0
        %2324 = vmatprep.mubr.bf16.mxu0 0
        %2325 = vmatmul.mubr.bf16.gmra.mrb[0].mxu0 %v2166
        %v2326 = vpop.f32.mrb[0].mxu0
        %v2327 = vadd.f32 0.0, %v2326
        %v2328 = vpop.f32.mrb[0].mxu0
        %v2329 = vpop.f32.mrb[0].mxu0
        %v2330 = vadd.f32 0.0, %v2329
        %v2331 = vpop.f32.mrb[0].mxu0
        %2332 = vdwg.mxu0
        %v2336 = vunpack.c.l.b16 %v2120
        %v2337 = vunpack.c.l.b16 %v2121
        %v2338 = vunpack.c.l.b16 %v2122
        %v2339 = vpack.c.b16 %v2337, %v2336
        %v2340 = vpack.c.b16 %v2338, %v2338
        %v2342 = vsel %vm2135, %v2085, 0
        %v2345 = vsel %vm2168, %v2340, 0
        %2347 = vmatprep.subr.bf16.mxu0 0
        %2348 = vmatpush1.bf16.msra.mxu0 %v2339
        %2349 = vmatprep.subr.bf16.mxu0 0
        %2350 = vmatpush1.bf16.msra.mxu0 %v2345
        %2351 = vmatprep.subr.bf16.mxu0 0
        %2352 = vmatpush1.bf16.msra.mxu0 0
        %2353 = vmatprep.subr.bf16.mxu0 0
        %2354 = vmatpush1.bf16.msra.mxu0 0
        %2355 = vmatprep.subr.bf16.mxu0 0
        %2356 = vmatpush1.bf16.msra.mxu0 0
        %2357 = vmatprep.subr.bf16.mxu0 0
        %2358 = vmatpush1.bf16.msra.mxu0 0
        %2359 = vmatprep.subr.bf16.mxu0 0
        %2360 = vmatpush1.bf16.msra.mxu0 0
        %2361 = vmatprep.subr.bf16.mxu0 0
        %2362 = vmatpush1.bf16.msra.mxu0 0
        %2363 = vmatprep.subr.bf16.mxu0 0
        %2364 = vmatpush1.bf16.msra.mxu0 0
        %2365 = vmatprep.subr.bf16.mxu0 0
        %2366 = vmatpush1.bf16.msra.mxu0 0
        %2367 = vmatprep.subr.bf16.mxu0 0
        %2368 = vmatpush1.bf16.msra.mxu0 0
        %2369 = vmatprep.subr.bf16.mxu0 0
        %2370 = vmatpush1.bf16.msra.mxu0 0
        %2371 = vmatprep.subr.bf16.mxu0 0
        %2372 = vmatpush1.bf16.msra.mxu0 0
        %2373 = vmatprep.subr.bf16.mxu0 0
        %2374 = vmatpush1.bf16.msra.mxu0 0
        %2375 = vmatprep.subr.bf16.mxu0 0
        %2376 = vmatpush1.bf16.msra.mxu0 0
        %2377 = vmatprep.subr.bf16.mxu0 0
        %2378 = vmatpush1.bf16.msra.mxu0 0
        %2379 = vmatprep.mubr.bf16.mxu0 0
        %2380 = vmatmul.mubr.bf16.gmra.mrb[0].mxu0 %v2342
        %v2381 = vpop.f32.mrb[0].mxu0
        %v2382 = vadd.f32 %v2207, %v2381
        %v2383 = vpop.f32.mrb[0].mxu0
        %v2384 = vpop.f32.mrb[0].mxu0
        %v2385 = vadd.f32 %v2210, %v2384
        %v2386 = vpop.f32.mrb[0].mxu0
        %2387 = vmatprep.mubr.bf16.mxu0 0
        %2388 = vmatmul.mubr.bf16.gmra.mrb[0].mxu0 %v2136
        %v2389 = vpop.f32.mrb[0].mxu0
        %v2390 = vadd.f32 %v2215, %v2389
        %v2391 = vpop.f32.mrb[0].mxu0
        %v2392 = vpop.f32.mrb[0].mxu0
        %v2393 = vadd.f32 %v2218, %v2392
        %v2394 = vpop.f32.mrb[0].mxu0
        %2395 = vmatprep.mubr.bf16.mxu0 0
        %2396 = vmatmul.mubr.bf16.gmra.mrb[0].mxu0 %v2138
        %v2397 = vpop.f32.mrb[0].mxu0
        %v2398 = vadd.f32 %v2223, %v2397
        %v2399 = vpop.f32.mrb[0].mxu0
        %v2400 = vpop.f32.mrb[0].mxu0
        %v2401 = vadd.f32 %v2226, %v2400
        %v2402 = vpop.f32.mrb[0].mxu0
        %2403 = vmatprep.mubr.bf16.mxu0 0
        %2404 = vmatmul.mubr.bf16.gmra.mrb[0].mxu0 %v2140
        %v2405 = vpop.f32.mrb[0].mxu0
        %v2406 = vadd.f32 %v2231, %v2405
        %v2407 = vpop.f32.mrb[0].mxu0
        %v2408 = vpop.f32.mrb[0].mxu0
        %v2409 = vadd.f32 %v2234, %v2408
        %v2410 = vpop.f32.mrb[0].mxu0
        %2411 = vmatprep.mubr.bf16.mxu0 0
        %2412 = vmatmul.mubr.bf16.gmra.mrb[0].mxu0 %v2142
        %v2413 = vpop.f32.mrb[0].mxu0
        %v2414 = vadd.f32 %v2239, %v2413
        %v2415 = vpop.f32.mrb[0].mxu0
        %v2416 = vpop.f32.mrb[0].mxu0
        %v2417 = vadd.f32 %v2242, %v2416
        %v2418 = vpop.f32.mrb[0].mxu0
        %2419 = vmatprep.mubr.bf16.mxu0 0
        %2420 = vmatmul.mubr.bf16.gmra.mrb[0].mxu0 %v2144
        %v2421 = vpop.f32.mrb[0].mxu0
        %v2422 = vadd.f32 %v2247, %v2421
        %v2423 = vpop.f32.mrb[0].mxu0
        %v2424 = vpop.f32.mrb[0].mxu0
        %v2425 = vadd.f32 %v2250, %v2424
        %v2426 = vpop.f32.mrb[0].mxu0
        %2427 = vmatprep.mubr.bf16.mxu0 0
        %2428 = vmatmul.mubr.bf16.gmra.mrb[0].mxu0 %v2146
        %v2429 = vpop.f32.mrb[0].mxu0
        %v2430 = vadd.f32 %v2255, %v2429
        %v2431 = vpop.f32.mrb[0].mxu0
        %v2432 = vpop.f32.mrb[0].mxu0
        %v2433 = vadd.f32 %v2258, %v2432
        %v2434 = vpop.f32.mrb[0].mxu0
        %2435 = vmatprep.mubr.bf16.mxu0 0
        %2436 = vmatmul.mubr.bf16.gmra.mrb[0].mxu0 %v2148
        %v2437 = vpop.f32.mrb[0].mxu0
        %v2438 = vadd.f32 %v2263, %v2437
        %v2439 = vpop.f32.mrb[0].mxu0
        %v2440 = vpop.f32.mrb[0].mxu0
        %v2441 = vadd.f32 %v2266, %v2440
        %v2442 = vpop.f32.mrb[0].mxu0
        %2443 = vmatprep.mubr.bf16.mxu0 0
        %2444 = vmatmul.mubr.bf16.gmra.mrb[0].mxu0 %v2150
        %v2445 = vpop.f32.mrb[0].mxu0
        %v2446 = vadd.f32 %v2271, %v2445
        %v2447 = vpop.f32.mrb[0].mxu0
        %v2448 = vpop.f32.mrb[0].mxu0
        %v2449 = vadd.f32 %v2274, %v2448
        %v2450 = vpop.f32.mrb[0].mxu0
        %2451 = vmatprep.mubr.bf16.mxu0 0
        %2452 = vmatmul.mubr.bf16.gmra.mrb[0].mxu0 %v2152
        %v2453 = vpop.f32.mrb[0].mxu0
        %v2454 = vadd.f32 %v2279, %v2453
        %v2455 = vpop.f32.mrb[0].mxu0
        %v2456 = vpop.f32.mrb[0].mxu0
        %v2457 = vadd.f32 %v2282, %v2456
        %v2458 = vpop.f32.mrb[0].mxu0
        %2459 = vmatprep.mubr.bf16.mxu0 0
        %2460 = vmatmul.mubr.bf16.gmra.mrb[0].mxu0 %v2154
        %v2461 = vpop.f32.mrb[0].mxu0
        %v2462 = vadd.f32 %v2287, %v2461
        %v2463 = vpop.f32.mrb[0].mxu0
        %v2464 = vpop.f32.mrb[0].mxu0
        %v2465 = vadd.f32 %v2290, %v2464
        %v2466 = vpop.f32.mrb[0].mxu0
        %2467 = vmatprep.mubr.bf16.mxu0 0
        %2468 = vmatmul.mubr.bf16.gmra.mrb[0].mxu0 %v2156
        %v2469 = vpop.f32.mrb[0].mxu0
        %v2470 = vadd.f32 %v2295, %v2469
        %v2471 = vpop.f32.mrb[0].mxu0
        %v2472 = vpop.f32.mrb[0].mxu0
        %v2473 = vadd.f32 %v2298, %v2472
        %v2474 = vpop.f32.mrb[0].mxu0
        %2475 = vmatprep.mubr.bf16.mxu0 0
        %2476 = vmatmul.mubr.bf16.gmra.mrb[0].mxu0 %v2158
        %v2477 = vpop.f32.mrb[0].mxu0
        %v2478 = vadd.f32 %v2303, %v2477
        %v2479 = vpop.f32.mrb[0].mxu0
        %v2480 = vpop.f32.mrb[0].mxu0
        %v2481 = vadd.f32 %v2306, %v2480
        %v2482 = vpop.f32.mrb[0].mxu0
        %2483 = vmatprep.mubr.bf16.mxu0 0
        %2484 = vmatmul.mubr.bf16.gmra.mrb[0].mxu0 %v2160
        %v2485 = vpop.f32.mrb[0].mxu0
        %v2486 = vadd.f32 %v2311, %v2485
        %v2487 = vpop.f32.mrb[0].mxu0
        %v2488 = vpop.f32.mrb[0].mxu0
        %v2489 = vadd.f32 %v2314, %v2488
        %v2490 = vpop.f32.mrb[0].mxu0
        %2491 = vmatprep.mubr.bf16.mxu0 0
        %2492 = vmatmul.mubr.bf16.gmra.mrb[0].mxu0 %v2162
        %v2493 = vpop.f32.mrb[0].mxu0
        %v2494 = vadd.f32 %v2319, %v2493
        %v2495 = vpop.f32.mrb[0].mxu0
        %v2496 = vpop.f32.mrb[0].mxu0
        %v2497 = vadd.f32 %v2322, %v2496
        %v2498 = vpop.f32.mrb[0].mxu0
        %2499 = vmatprep.mubr.bf16.mxu0 0
        %2500 = vmatmul.mubr.bf16.gmra.mrb[0].mxu0 %v2164
        %v2501 = vpop.f32.mrb[0].mxu0
        %v2502 = vadd.f32 %v2327, %v2501
        %v2503 = vpop.f32.mrb[0].mxu0
        %v2504 = vpop.f32.mrb[0].mxu0
        %v2505 = vadd.f32 %v2330, %v2504
        %v2506 = vpop.f32.mrb[0].mxu0
        %2507 = vdwg.mxu0
        %v2508 = vld [vmem:[#allocation9 + $0x18] sm:$0xf]
        %v2509 = vld [vmem:[#allocation9 + $0x1c] sm:$0xf]
        %v2510 = vld [vmem:[#allocation9 + $0x20] sm:$0xf]
        %v2514 = vunpack.c.l.b16 %v2508
        %v2515 = vunpack.c.l.b16 %v2509
        %v2516 = vunpack.c.l.b16 %v2510
        %v2517 = vpack.c.b16 %v2515, %v2514
        %v2518 = vpack.c.b16 %v2516, %v2516
        %v2520 = vsel %vm2135, %v2119, 0
        %v2523 = vsel %vm2168, %v2518, 0
        %2525 = vmatprep.subr.bf16.mxu0 0
        %2526 = vmatpush1.bf16.msra.mxu0 %v2517
        %2527 = vmatprep.subr.bf16.mxu0 0
        %2528 = vmatpush1.bf16.msra.mxu0 %v2523
        %2529 = vmatprep.subr.bf16.mxu0 0
        %2530 = vmatpush1.bf16.msra.mxu0 0
        %2531 = vmatprep.subr.bf16.mxu0 0
        %2532 = vmatpush1.bf16.msra.mxu0 0
        %2533 = vmatprep.subr.bf16.mxu0 0
        %2534 = vmatpush1.bf16.msra.mxu0 0
        %2535 = vmatprep.subr.bf16.mxu0 0
        %2536 = vmatpush1.bf16.msra.mxu0 0
        %2537 = vmatprep.subr.bf16.mxu0 0
        %2538 = vmatpush1.bf16.msra.mxu0 0
        %2539 = vmatprep.subr.bf16.mxu0 0
        %2540 = vmatpush1.bf16.msra.mxu0 0
        %2541 = vmatprep.subr.bf16.mxu0 0
        %2542 = vmatpush1.bf16.msra.mxu0 0
        %2543 = vmatprep.subr.bf16.mxu0 0
        %2544 = vmatpush1.bf16.msra.mxu0 0
        %2545 = vmatprep.subr.bf16.mxu0 0
        %2546 = vmatpush1.bf16.msra.mxu0 0
        %2547 = vmatprep.subr.bf16.mxu0 0
        %2548 = vmatpush1.bf16.msra.mxu0 0
        %2549 = vmatprep.subr.bf16.mxu0 0
        %2550 = vmatpush1.bf16.msra.mxu0 0
        %2551 = vmatprep.subr.bf16.mxu0 0
        %2552 = vmatpush1.bf16.msra.mxu0 0
        %2553 = vmatprep.subr.bf16.mxu0 0
        %2554 = vmatpush1.bf16.msra.mxu0 0
        %2555 = vmatprep.subr.bf16.mxu0 0
        %2556 = vmatpush1.bf16.msra.mxu0 0
        %2557 = vmatprep.mubr.bf16.mxu0 0
        %2558 = vmatmul.mubr.bf16.gmra.mrb[0].mxu0 %v2138
        %v2559 = vpop.f32.mrb[0].mxu0
        %v2560 = vadd.f32 0.0, %v2559
        %v2561 = vpop.f32.mrb[0].mxu0
        %v2562 = vpop.f32.mrb[0].mxu0
        %v2563 = vadd.f32 0.0, %v2562
        %v2564 = vpop.f32.mrb[0].mxu0
        %2565 = vmatprep.mubr.bf16.mxu0 0
        %2566 = vmatmul.mubr.bf16.gmra.mrb[0].mxu0 %v2140
        %v2567 = vpop.f32.mrb[0].mxu0
        %v2568 = vadd.f32 0.0, %v2567
        %v2569 = vpop.f32.mrb[0].mxu0
        %v2570 = vpop.f32.mrb[0].mxu0
        %v2571 = vadd.f32 0.0, %v2570
        %v2572 = vpop.f32.mrb[0].mxu0
        %2573 = vmatprep.mubr.bf16.mxu0 0
        %2574 = vmatmul.mubr.bf16.gmra.mrb[0].mxu0 %v2142
        %v2575 = vpop.f32.mrb[0].mxu0
        %v2576 = vadd.f32 0.0, %v2575
        %v2577 = vpop.f32.mrb[0].mxu0
        %v2578 = vpop.f32.mrb[0].mxu0
        %v2579 = vadd.f32 0.0, %v2578
        %v2580 = vpop.f32.mrb[0].mxu0
        %2581 = vmatprep.mubr.bf16.mxu0 0
        %2582 = vmatmul.mubr.bf16.gmra.mrb[0].mxu0 %v2144
        %v2583 = vpop.f32.mrb[0].mxu0
        %v2584 = vadd.f32 0.0, %v2583
        %v2585 = vpop.f32.mrb[0].mxu0
        %v2586 = vpop.f32.mrb[0].mxu0
        %v2587 = vadd.f32 0.0, %v2586
        %v2588 = vpop.f32.mrb[0].mxu0
        %2589 = vmatprep.mubr.bf16.mxu0 0
        %2590 = vmatmul.mubr.bf16.gmra.mrb[0].mxu0 %v2146
        %v2591 = vpop.f32.mrb[0].mxu0
        %v2592 = vadd.f32 0.0, %v2591
        %v2593 = vpop.f32.mrb[0].mxu0
        %v2594 = vpop.f32.mrb[0].mxu0
        %v2595 = vadd.f32 0.0, %v2594
        %v2596 = vpop.f32.mrb[0].mxu0
        %2597 = vmatprep.mubr.bf16.mxu0 0
        %2598 = vmatmul.mubr.bf16.gmra.mrb[0].mxu0 %v2148
        %v2599 = vpop.f32.mrb[0].mxu0
        %v2600 = vadd.f32 0.0, %v2599
        %v2601 = vpop.f32.mrb[0].mxu0
        %v2602 = vpop.f32.mrb[0].mxu0
        %v2603 = vadd.f32 0.0, %v2602
        %v2604 = vpop.f32.mrb[0].mxu0
        %2605 = vmatprep.mubr.bf16.mxu0 0
        %2606 = vmatmul.mubr.bf16.gmra.mrb[0].mxu0 %v2150
        %v2607 = vpop.f32.mrb[0].mxu0
        %v2608 = vadd.f32 0.0, %v2607
        %v2609 = vpop.f32.mrb[0].mxu0
        %v2610 = vpop.f32.mrb[0].mxu0
        %v2611 = vadd.f32 0.0, %v2610
        %v2612 = vpop.f32.mrb[0].mxu0
        %2613 = vmatprep.mubr.bf16.mxu0 0
        %2614 = vmatmul.mubr.bf16.gmra.mrb[0].mxu0 %v2152
        %v2615 = vpop.f32.mrb[0].mxu0
        %v2616 = vadd.f32 0.0, %v2615
        %v2617 = vpop.f32.mrb[0].mxu0
        %v2618 = vpop.f32.mrb[0].mxu0
        %v2619 = vadd.f32 0.0, %v2618
        %v2620 = vpop.f32.mrb[0].mxu0
        %2621 = vmatprep.mubr.bf16.mxu0 0
        %2622 = vmatmul.mubr.bf16.gmra.mrb[0].mxu0 %v2154
        %v2623 = vpop.f32.mrb[0].mxu0
        %v2624 = vadd.f32 0.0, %v2623
        %v2625 = vpop.f32.mrb[0].mxu0
        %v2626 = vpop.f32.mrb[0].mxu0
        %v2627 = vadd.f32 0.0, %v2626
        %v2628 = vpop.f32.mrb[0].mxu0
        %2629 = vmatprep.mubr.bf16.mxu0 0
        %2630 = vmatmul.mubr.bf16.gmra.mrb[0].mxu0 %v2156
        %v2631 = vpop.f32.mrb[0].mxu0
        %v2632 = vadd.f32 0.0, %v2631
        %v2633 = vpop.f32.mrb[0].mxu0
        %v2634 = vpop.f32.mrb[0].mxu0
        %v2635 = vadd.f32 0.0, %v2634
        %v2636 = vpop.f32.mrb[0].mxu0
        %2637 = vmatprep.mubr.bf16.mxu0 0
        %2638 = vmatmul.mubr.bf16.gmra.mrb[0].mxu0 %v2158
        %v2639 = vpop.f32.mrb[0].mxu0
        %v2640 = vadd.f32 0.0, %v2639
        %v2641 = vpop.f32.mrb[0].mxu0
        %v2642 = vpop.f32.mrb[0].mxu0
        %v2643 = vadd.f32 0.0, %v2642
        %v2644 = vpop.f32.mrb[0].mxu0
        %2645 = vmatprep.mubr.bf16.mxu0 0
        %2646 = vmatmul.mubr.bf16.gmra.mrb[0].mxu0 %v2160
        %v2647 = vpop.f32.mrb[0].mxu0
        %v2648 = vadd.f32 0.0, %v2647
        %v2649 = vpop.f32.mrb[0].mxu0
        %v2650 = vpop.f32.mrb[0].mxu0
        %v2651 = vadd.f32 0.0, %v2650
        %v2652 = vpop.f32.mrb[0].mxu0
        %2653 = vmatprep.mubr.bf16.mxu0 0
        %2654 = vmatmul.mubr.bf16.gmra.mrb[0].mxu0 %v2162
        %v2655 = vpop.f32.mrb[0].mxu0
        %v2656 = vadd.f32 0.0, %v2655
        %v2657 = vpop.f32.mrb[0].mxu0
        %v2658 = vpop.f32.mrb[0].mxu0
        %v2659 = vadd.f32 0.0, %v2658
        %v2660 = vpop.f32.mrb[0].mxu0
        %2661 = vmatprep.mubr.bf16.mxu0 0
        %2662 = vmatmul.mubr.bf16.gmra.mrb[0].mxu0 %v2164
        %v2663 = vpop.f32.mrb[0].mxu0
        %v2664 = vadd.f32 0.0, %v2663
        %v2665 = vpop.f32.mrb[0].mxu0
        %v2666 = vpop.f32.mrb[0].mxu0
        %v2667 = vadd.f32 0.0, %v2666
        %v2668 = vpop.f32.mrb[0].mxu0
        %2669 = vmatprep.mubr.bf16.mxu0 0
        %2670 = vmatmul.mubr.bf16.gmra.mrb[0].mxu0 %v2166
        %v2671 = vpop.f32.mrb[0].mxu0
        %v2672 = vadd.f32 0.0, %v2671
        %v2673 = vpop.f32.mrb[0].mxu0
        %v2674 = vpop.f32.mrb[0].mxu0
        %v2675 = vadd.f32 0.0, %v2674
        %v2676 = vpop.f32.mrb[0].mxu0
        %2677 = vmatprep.mubr.bf16.mxu0 0
        %2678 = vmatmul.mubr.bf16.gmra.mrb[0].mxu0 %v2520
        %v2679 = vpop.f32.mrb[0].mxu0
        %v2680 = vadd.f32 0.0, %v2679
        %v2681 = vpop.f32.mrb[0].mxu0
        %v2682 = vpop.f32.mrb[0].mxu0
        %v2683 = vadd.f32 0.0, %v2682
        %v2684 = vpop.f32.mrb[0].mxu0
        %2685 = vdwg.mxu0
        %v2686 = vadd.f32 %v2382, %v2560
        %v2687 = vadd.f32 %v2385, %v2563
        %v2688 = vadd.f32 %v2390, %v2568
        %v2689 = vadd.f32 %v2393, %v2571
        %v2690 = vadd.f32 %v2398, %v2576
        %v2691 = vadd.f32 %v2401, %v2579
        %v2692 = vadd.f32 %v2406, %v2584
        %v2693 = vadd.f32 %v2409, %v2587
        %v2694 = vadd.f32 %v2414, %v2592
        %v2695 = vadd.f32 %v2417, %v2595
        %v2696 = vadd.f32 %v2422, %v2600
        %v2697 = vadd.f32 %v2425, %v2603
        %v2698 = vadd.f32 %v2430, %v2608
        %v2699 = vadd.f32 %v2433, %v2611
        %v2700 = vadd.f32 %v2438, %v2616
        %v2701 = vadd.f32 %v2441, %v2619
        %v2702 = vadd.f32 %v2446, %v2624
        %v2703 = vadd.f32 %v2449, %v2627
        %v2704 = vadd.f32 %v2454, %v2632
        %v2705 = vadd.f32 %v2457, %v2635
        %v2706 = vadd.f32 %v2462, %v2640
        %v2707 = vadd.f32 %v2465, %v2643
        %v2708 = vadd.f32 %v2470, %v2648
        %v2709 = vadd.f32 %v2473, %v2651
        %v2710 = vadd.f32 %v2478, %v2656
        %v2711 = vadd.f32 %v2481, %v2659
        %v2712 = vadd.f32 %v2486, %v2664
        %v2713 = vadd.f32 %v2489, %v2667
        %v2714 = vadd.f32 %v2494, %v2672
        %v2715 = vadd.f32 %v2497, %v2675
        %v2716 = vadd.f32 %v2502, %v2680
        %v2717 = vadd.f32 %v2505, %v2683
        %v2718 = vld [vmem:[#allocation11] sm:$0x1]
        %v2720 = vlaneseq
        %v2721 = vshrl.u32 %v2720, 7
        %v2722 = vsub.s32 0, %v2721
        %v2723 = vrot.slane %v2718, %v2722
        %v2725 = vadd.f32 %v2686, %v2723
        %v2726 = vadd.f32 %v2687, %v2723
        %v2727 = vadd.f32 %v2688, %v2723
        %v2728 = vadd.f32 %v2689, %v2723
        %v2729 = vadd.f32 %v2690, %v2723
        %v2730 = vadd.f32 %v2691, %v2723
        %v2731 = vadd.f32 %v2692, %v2723
        %v2732 = vadd.f32 %v2693, %v2723
        %v2733 = vadd.f32 %v2694, %v2723
        %v2734 = vadd.f32 %v2695, %v2723
        %v2735 = vadd.f32 %v2696, %v2723
        %v2736 = vadd.f32 %v2697, %v2723
        %v2737 = vadd.f32 %v2698, %v2723
        %v2738 = vadd.f32 %v2699, %v2723
        %v2739 = vadd.f32 %v2700, %v2723
        %v2740 = vadd.f32 %v2701, %v2723
        %v2741 = vadd.f32 %v2702, %v2723
        %v2742 = vadd.f32 %v2703, %v2723
        %v2743 = vadd.f32 %v2704, %v2723
        %v2744 = vadd.f32 %v2705, %v2723
        %v2745 = vadd.f32 %v2706, %v2723
        %v2746 = vadd.f32 %v2707, %v2723
        %v2747 = vadd.f32 %v2708, %v2723
        %v2748 = vadd.f32 %v2709, %v2723
        %v2749 = vadd.f32 %v2710, %v2723
        %v2750 = vadd.f32 %v2711, %v2723
        %v2751 = vadd.f32 %v2712, %v2723
        %v2752 = vadd.f32 %v2713, %v2723
        %v2753 = vadd.f32 %v2714, %v2723
        %v2754 = vadd.f32 %v2715, %v2723
        %v2755 = vadd.f32 %v2716, %v2723
        %v2756 = vadd.f32 %v2717, %v2723
        %v2757 = vmax.f32 %v2725, 0.0
        %v2758 = vmax.f32 %v2726, 0.0
        %v2759 = vmax.f32 %v2727, 0.0
        %v2760 = vmax.f32 %v2728, 0.0
        %v2761 = vmax.f32 %v2729, 0.0
        %v2762 = vmax.f32 %v2730, 0.0
        %v2763 = vmax.f32 %v2731, 0.0
        %v2764 = vmax.f32 %v2732, 0.0
        %v2765 = vmax.f32 %v2733, 0.0
        %v2766 = vmax.f32 %v2734, 0.0
        %v2767 = vmax.f32 %v2735, 0.0
        %v2768 = vmax.f32 %v2736, 0.0
        %v2769 = vmax.f32 %v2737, 0.0
        %v2770 = vmax.f32 %v2738, 0.0
        %v2771 = vmax.f32 %v2739, 0.0
        %v2772 = vmax.f32 %v2740, 0.0
        %v2773 = vmax.f32 %v2741, 0.0
        %v2774 = vmax.f32 %v2742, 0.0
        %v2775 = vmax.f32 %v2743, 0.0
        %v2776 = vmax.f32 %v2744, 0.0
        %v2777 = vmax.f32 %v2745, 0.0
        %v2778 = vmax.f32 %v2746, 0.0
        %v2779 = vmax.f32 %v2747, 0.0
        %v2780 = vmax.f32 %v2748, 0.0
        %v2781 = vmax.f32 %v2749, 0.0
        %v2782 = vmax.f32 %v2750, 0.0
        %v2783 = vmax.f32 %v2751, 0.0
        %v2784 = vmax.f32 %v2752, 0.0
        %v2785 = vmax.f32 %v2753, 0.0
        %v2786 = vmax.f32 %v2754, 0.0
        %v2787 = vmax.f32 %v2755, 0.0
        %v2788 = vmax.f32 %v2756, 0.0
        %2789 = vst.msk [vmem:[#allocation2] sm:$0xff] %vm2030, %v2757
        %2790 = vst.msk [vmem:[#allocation2 + $0x8] sm:$0xff] %vm2030, %v2758
        %2791 = vst.msk [vmem:[#allocation2 + $0x10] sm:$0xff] %vm2030, %v2759
        %2792 = vst.msk [vmem:[#allocation2 + $0x18] sm:$0xff] %vm2030, %v2760
        %2793 = vst.msk [vmem:[#allocation2 + $0x20] sm:$0xff] %vm2030, %v2761
        %2794 = vst.msk [vmem:[#allocation2 + $0x28] sm:$0xff] %vm2030, %v2762
        %2795 = vst.msk [vmem:[#allocation2 + $0x30] sm:$0xff] %vm2030, %v2763
        %2796 = vst.msk [vmem:[#allocation2 + $0x38] sm:$0xff] %vm2030, %v2764
        %2797 = vst.msk [vmem:[#allocation2 + $0x40] sm:$0xff] %vm2030, %v2765
        %2798 = vst.msk [vmem:[#allocation2 + $0x48] sm:$0xff] %vm2030, %v2766
        %2799 = vst.msk [vmem:[#allocation2 + $0x50] sm:$0xff] %vm2030, %v2767
        %2800 = vst.msk [vmem:[#allocation2 + $0x58] sm:$0xff] %vm2030, %v2768
        %2801 = vst.msk [vmem:[#allocation2 + $0x60] sm:$0xff] %vm2030, %v2769
        %2802 = vst.msk [vmem:[#allocation2 + $0x68] sm:$0xff] %vm2030, %v2770
        %2803 = vst.msk [vmem:[#allocation2 + $0x70] sm:$0xff] %vm2030, %v2771
        %2804 = vst.msk [vmem:[#allocation2 + $0x78] sm:$0xff] %vm2030, %v2772
        %2805 = vst.msk [vmem:[#allocation2 + $0x80] sm:$0xff] %vm2030, %v2773
        %2806 = vst.msk [vmem:[#allocation2 + $0x88] sm:$0xff] %vm2030, %v2774
        %2807 = vst.msk [vmem:[#allocation2 + $0x90] sm:$0xff] %vm2030, %v2775
        %2808 = vst.msk [vmem:[#allocation2 + $0x98] sm:$0xff] %vm2030, %v2776
        %2809 = vst.msk [vmem:[#allocation2 + $0xa0] sm:$0xff] %vm2030, %v2777
        %2810 = vst.msk [vmem:[#allocation2 + $0xa8] sm:$0xff] %vm2030, %v2778
        %2811 = vst.msk [vmem:[#allocation2 + $0xb0] sm:$0xff] %vm2030, %v2779
        %2812 = vst.msk [vmem:[#allocation2 + $0xb8] sm:$0xff] %vm2030, %v2780
        %2813 = vst.msk [vmem:[#allocation2 + $0xc0] sm:$0xff] %vm2030, %v2781
        %2814 = vst.msk [vmem:[#allocation2 + $0xc8] sm:$0xff] %vm2030, %v2782
        %2815 = vst.msk [vmem:[#allocation2 + $0xd0] sm:$0xff] %vm2030, %v2783
        %2816 = vst.msk [vmem:[#allocation2 + $0xd8] sm:$0xff] %vm2030, %v2784
        %2817 = vst.msk [vmem:[#allocation2 + $0xe0] sm:$0xff] %vm2030, %v2785
        %2818 = vst.msk [vmem:[#allocation2 + $0xe8] sm:$0xff] %vm2030, %v2786
        %2819 = vst.msk [vmem:[#allocation2 + $0xf0] sm:$0xff] %vm2030, %v2787
        %2820 = vst.msk [vmem:[#allocation2 + $0xf8] sm:$0xff] %vm2030, %v2788
        %v2821 = vld [vmem:[#allocation2] ss:$2 sm:$0xff]
        %s2822 = scalar_lea.vmem [#allocation2], 16
        %v2823 = vld [vmem:[%s2822] ss:$2 sm:$0xff]
        %s2824 = scalar_lea.vmem [#allocation2], 32
        %v2825 = vld [vmem:[%s2824] ss:$2 sm:$0xff]
        %s2826 = scalar_lea.vmem [#allocation2], 48
        %v2827 = vld [vmem:[%s2826] ss:$2 sm:$0xff]
        %s2828 = scalar_lea.vmem [#allocation2], 64
        %v2829 = vld [vmem:[%s2828] ss:$2 sm:$0xff]
        %s2830 = scalar_lea.vmem [#allocation2], 80
        %v2831 = vld [vmem:[%s2830] ss:$2 sm:$0xff]
        %s2832 = scalar_lea.vmem [#allocation2], 96
        %v2833 = vld [vmem:[%s2832] ss:$2 sm:$0xff]
        %s2834 = scalar_lea.vmem [#allocation2], 112
        %v2835 = vld [vmem:[%s2834] ss:$2 sm:$0xff]
        %s2836 = scalar_lea.vmem [#allocation2], 128
        %v2837 = vld [vmem:[%s2836] ss:$2 sm:$0xff]
        %s2838 = scalar_lea.vmem [#allocation2], 144
        %v2839 = vld [vmem:[%s2838] ss:$2 sm:$0xff]
        %s2840 = scalar_lea.vmem [#allocation2], 160
        %v2841 = vld [vmem:[%s2840] ss:$2 sm:$0xff]
        %s2842 = scalar_lea.vmem [#allocation2], 176
        %v2843 = vld [vmem:[%s2842] ss:$2 sm:$0xff]
        %s2844 = scalar_lea.vmem [#allocation2], 192
        %v2845 = vld [vmem:[%s2844] ss:$2 sm:$0xff]
        %s2846 = scalar_lea.vmem [#allocation2], 208
        %v2847 = vld [vmem:[%s2846] ss:$2 sm:$0xff]
        %s2848 = scalar_lea.vmem [#allocation2], 224
        %v2849 = vld [vmem:[%s2848] ss:$2 sm:$0xff]
        %s2850 = scalar_lea.vmem [#allocation2], 240
        %v2851 = vld [vmem:[%s2850] ss:$2 sm:$0xff]
        %s2852 = scalar_lea.vmem [#allocation2], 1
        %v2853 = vld [vmem:[%s2852] ss:$2 sm:$0xff]
        %s2854 = scalar_lea.vmem [#allocation2], 17
        %v2855 = vld [vmem:[%s2854] ss:$2 sm:$0xff]
        %s2856 = scalar_lea.vmem [#allocation2], 33
        %v2857 = vld [vmem:[%s2856] ss:$2 sm:$0xff]
        %s2858 = scalar_lea.vmem [#allocation2], 49
        %v2859 = vld [vmem:[%s2858] ss:$2 sm:$0xff]
        %s2860 = scalar_lea.vmem [#allocation2], 65
        %v2861 = vld [vmem:[%s2860] ss:$2 sm:$0xff]
        %s2862 = scalar_lea.vmem [#allocation2], 81
        %v2863 = vld [vmem:[%s2862] ss:$2 sm:$0xff]
        %s2864 = scalar_lea.vmem [#allocation2], 97
        %v2865 = vld [vmem:[%s2864] ss:$2 sm:$0xff]
        %s2866 = scalar_lea.vmem [#allocation2], 113
        %v2867 = vld [vmem:[%s2866] ss:$2 sm:$0xff]
        %s2868 = scalar_lea.vmem [#allocation2], 129
        %v2869 = vld [vmem:[%s2868] ss:$2 sm:$0xff]
        %s2870 = scalar_lea.vmem [#allocation2], 145
        %v2871 = vld [vmem:[%s2870] ss:$2 sm:$0xff]
        %s2872 = scalar_lea.vmem [#allocation2], 161
        %v2873 = vld [vmem:[%s2872] ss:$2 sm:$0xff]
        %s2874 = scalar_lea.vmem [#allocation2], 177
        %v2875 = vld [vmem:[%s2874] ss:$2 sm:$0xff]
        %s2876 = scalar_lea.vmem [#allocation2], 193
        %v2877 = vld [vmem:[%s2876] ss:$2 sm:$0xff]
        %s2878 = scalar_lea.vmem [#allocation2], 209
        %v2879 = vld [vmem:[%s2878] ss:$2 sm:$0xff]
        %s2880 = scalar_lea.vmem [#allocation2], 225
        %v2881 = vld [vmem:[%s2880] ss:$2 sm:$0xff]
        %s2882 = scalar_lea.vmem [#allocation2], 241
        %v2883 = vld [vmem:[%s2882] ss:$2 sm:$0xff]
        %v2884 = vadd.f32 %v2821, %v2853
        %v2885 = vadd.f32 %v2823, %v2855
        %v2886 = vadd.f32 %v2825, %v2857
        %v2887 = vadd.f32 %v2827, %v2859
        %v2888 = vadd.f32 %v2829, %v2861
        %v2889 = vadd.f32 %v2831, %v2863
        %v2890 = vadd.f32 %v2833, %v2865
        %v2891 = vadd.f32 %v2835, %v2867
        %v2892 = vadd.f32 %v2837, %v2869
        %v2893 = vadd.f32 %v2839, %v2871
        %v2894 = vadd.f32 %v2841, %v2873
        %v2895 = vadd.f32 %v2843, %v2875
        %v2896 = vadd.f32 %v2845, %v2877
        %v2897 = vadd.f32 %v2847, %v2879
        %v2898 = vadd.f32 %v2849, %v2881
        %v2899 = vadd.f32 %v2851, %v2883
        %v2900 = vadd.f32 %v2884, %v2885
        %v2901 = vadd.f32 %v2886, %v2887
        %v2902 = vadd.f32 %v2888, %v2889
        %v2903 = vadd.f32 %v2890, %v2891
        %v2904 = vadd.f32 %v2892, %v2893
        %v2905 = vadd.f32 %v2894, %v2895
        %v2906 = vadd.f32 %v2896, %v2897
        %v2907 = vadd.f32 %v2898, %v2899
        %v2908 = vmul.f32 %v2900, 0.25
        %v2909 = vmul.f32 %v2901, 0.25
        %v2910 = vmul.f32 %v2902, 0.25
        %v2911 = vmul.f32 %v2903, 0.25
        %v2912 = vmul.f32 %v2904, 0.25
        %v2913 = vmul.f32 %v2905, 0.25
        %v2914 = vmul.f32 %v2906, 0.25
        %v2915 = vmul.f32 %v2907, 0.25
        %v2916 = vpack.c.bf16 %v2909, %v2908
        %v2917 = vpack.c.bf16 %v2911, %v2910
        %v2918 = vpack.c.bf16 %v2913, %v2912
        %v2919 = vpack.c.bf16 %v2915, %v2914
        %v2924 = vunpack.c.l.b16 %v2916
        %v2925 = vunpack.c.h.b16 %v2916
        %v2926 = vunpack.c.l.b16 %v2917
        %v2927 = vunpack.c.h.b16 %v2917
        %v2928 = vunpack.c.l.b16 %v2918
        %v2929 = vunpack.c.h.b16 %v2918
        %v2930 = vunpack.c.l.b16 %v2919
        %v2931 = vunpack.c.h.b16 %v2919
        %v2932 = vpack.c.b16 %v2924, %v2924
        %v2933 = vpack.c.b16 %v2925, %v2925
        %v2934 = vpack.c.b16 %v2926, %v2926
        %v2935 = vpack.c.b16 %v2927, %v2927
        %v2936 = vpack.c.b16 %v2928, %v2928
        %v2937 = vpack.c.b16 %v2929, %v2929
        %v2938 = vpack.c.b16 %v2930, %v2930
        %v2939 = vpack.c.b16 %v2931, %v2931
        %vm2948 = vcmask 60416
        %2949 = vst.msk [vmem:[%s296] sm:$0xf] %vm2948, %v2932
        %2950 = vst.msk [vmem:[%s296 + $0x4] sm:$0xf] %vm2948, %v2933
        %2951 = vst.msk [vmem:[%s296 + $0x8] sm:$0xf] %vm2948, %v2934
        %2952 = vst.msk [vmem:[%s296 + $0xc] sm:$0xf] %vm2948, %v2935
        %2953 = vst.msk [vmem:[%s296 + $0x10] sm:$0xf] %vm2948, %v2936
        %2954 = vst.msk [vmem:[%s296 + $0x14] sm:$0xf] %vm2948, %v2937
        %2955 = vst.msk [vmem:[%s296 + $0x18] sm:$0xf] %vm2948, %v2938
        %2956 = vst.msk [vmem:[%s296 + $0x1c] sm:$0xf] %vm2948, %v2939
        %s2957 = sand.u32 %s142, 1
        %s2958 = scalar_lea.sflag [#allocation5], %s2957
        %s2959 = sand.u32 %s142, 1
        %s2960 = smul.addr %s2959, 32
        %s2961 = scalar_lea.vmem [#allocation12], %s2960
        // Predicated region
        $region61: #{bottleneck_forward.3} parent=39 // pred_check
          %p2962 = pneg %p152
        $region62: #{bottleneck_forward.3} parent=39 // pred_check_branch
          %2964 = sbr.rel (%p2962) target = $region64
        $region63: #{bottleneck_forward.3} parent=39 // pred_region
          %s2966 = ssub.s32 512, 512
          %2967 = vsyncadd %s2958, %s2966
          %s2968 = smul.addr %s24, 8
          %s2969 = smul.addr %s2968, 64
          %s2970 = scalar_lea.hbm %s5, %s2969
          %s2971 = sshll.u32 %s2961, 4
          %s2972 = int_to_ptr.vmem [resolvable:$true] %s2971
          %2977 = dma.vmem_to_hbm [thread:$0]  %s2972, 512, %s2970, %s2958, 64, 64, 4
        $region64: #{bottleneck_forward.3} parent=39 // pred_fallthru
          _
      $region40: #{bottleneck_forward.3} parent=5 // pred_fallthru
        _
      %p2978 = scmp.le.s32.totalorder 2, %s19
      // Predicated region
      $region65: #{bottleneck_forward.3} parent=5 // pred_check
        %p2979 = pneg %p2978
      $region66: #{bottleneck_forward.3} parent=5 // pred_check_branch
        %2981 = sbr.rel (%p2979) target = $region68
      $region67: #{bottleneck_forward.3} parent=5 // pred_region
        %s2982 = ssub.s32 %s19, 2
        // Predicated region
        $region69: #{bottleneck_forward.3} parent=67 // pred_check
          %p2983 = pneg %p158
        $region70: #{bottleneck_forward.3} parent=67 // pred_check_branch
          %2985 = sbr.rel (%p2983) target = $region72
        $region71: #{bottleneck_forward.3} parent=67 // pred_region
          %s2986 = sand.u32 %s143, 1
          %s2987 = scalar_lea.sflag [#allocation5], %s2986
          %s2988 = sand.u32 %s143, 1
          %s2989 = smul.addr %s2988, 32
          %s2990 = scalar_lea.vmem [#allocation12], %s2989
          %2991 = dma.done %s2987, 512
        $region72: #{bottleneck_forward.3} parent=67 // pred_fallthru
          _
      $region68: #{bottleneck_forward.3} parent=5 // pred_fallthru
        _
    $region6: #{bottleneck_forward.3} parent=1 // loop_footer
      %s23 = sadd.s32 1, %s19
    $region7: #{bottleneck_forward.3} parent=1 // loop_footer_branch
      %18 = sbr.rel target = $region3
    $region8: #{bottleneck_forward.3} parent=1 // loop_exit
      _
    %2992 = vsyncpa [#allocation4], 1
    %s2993 = scalar_lea.sflag [#allocation4], 1
    %2994 = vsyncpa %s2993, 1
    %2995 = vsyncpa [#allocation7], 1
    %2996 = vsyncpa [#allocation10], 1
    %2997 = vsyncpa [#allocation5], 1
    %s2998 = scalar_lea.sflag [#allocation5], 1
    %2999 = vsyncpa %s2998, 1

</llo_original>
